<compile_context>
chip_gen: v5e
topology: v5e:2x2
jax: 0.10.0
libtpu: 0.0.40
codegen_flags: <defaults>
</compile_context>

<pallas_src>
import jax
import jax.numpy as jnp
from jax.experimental import pallas as pl
from jax.experimental.pallas import tpu as pltpu


# ---------------------------------------------------------------------------
# Fused Pallas kernel (all LSTM layers + final Linear)
# ---------------------------------------------------------------------------

def _make_fused_lstm_kernel(num_layers, B, T, Hp):
    """Build the fused kernel for static (num_layers, B, T, Hp).

    Ref layout (inputs..., output, scratch):
      refs[0]                       : x        (B, T, D_in)
      refs[1+3l], refs[2+3l], refs[3+3l] : wih_l (D_l, 4Hp), whh_l (Hp, 4Hp), bias_l (1, 4Hp)
      refs[1+3L], refs[2+3L]        : fc_w (Hp, O), fc_b (1, O)
      refs[3+3L]                    : out (B, O)
      refs[4+3L]                    : seq_scr (T*B, Hp) f32  -- hidden seq handed to next layer
    """

    def kernel(*refs):
        x_ref = refs[0]
        fc_w_ref = refs[1 + 3 * num_layers]
        fc_b_ref = refs[2 + 3 * num_layers]
        out_ref = refs[3 + 3 * num_layers]
        seq_scr = refs[4 + 3 * num_layers]

        h = None
        for layer in range(num_layers):
            wih = refs[1 + 3 * layer][...]      # (D_in_l, 4*Hp)
            whh = refs[2 + 3 * layer][...]      # (Hp,     4*Hp)
            bias = refs[3 + 3 * layer][...]     # (1,      4*Hp)

            # ---- hoisted input projection: ONE matmul covering all T timesteps ----
            if layer == 0:
                d_in = x_ref.shape[-1]
                x2d = x_ref[...].reshape(B * T, d_in)          # rows ordered b-major (b*T + t)
                xp = jnp.dot(x2d, wih, preferred_element_type=jnp.float32) + bias
                xp = xp.reshape(B, T, 4 * Hp)
            else:
                prev = seq_scr[...]                            # (T*B, Hp), rows time-major
                xp = jnp.dot(prev, wih, preferred_element_type=jnp.float32) + bias

            h = jnp.zeros((B, Hp), dtype=jnp.float32)
            c = jnp.zeros((B, Hp), dtype=jnp.float32)

            # ---- sequential recurrence: only h @ W_hh stays on the serial path ----
            for t in range(T):                                 # statically unrolled (small T)
                if layer == 0:
                    g_in = xp[:, t, :]                         # (B, 4*Hp)
                else:
                    g_in = xp[t * B:(t + 1) * B, :]            # (B, 4*Hp)

                gates = g_in + jnp.dot(h, whh, preferred_element_type=jnp.float32)

                # PyTorch gate order [i, f, g, o]; each gate is a full 128-lane block.
                i_g = jax.nn.sigmoid(gates[:, 0 * Hp:1 * Hp])
                f_g = jax.nn.sigmoid(gates[:, 1 * Hp:2 * Hp])
                g_g = jnp.tanh(gates[:, 2 * Hp:3 * Hp])
                o_g = jax.nn.sigmoid(gates[:, 3 * Hp:4 * Hp])

                c = f_g * c + i_g * g_g
                h = o_g * jnp.tanh(c)

                if layer < num_layers - 1:
                    seq_scr[t * B:(t + 1) * B, :] = h          # time-major for next layer

        # ---- final Linear on last timestep of last layer (out[:, -1, :] @ W_fc^T + b) ----
        out_ref[...] = (jnp.dot(h, fc_w_ref[...], preferred_element_type=jnp.float32)
                        + fc_b_ref[...]).astype(out_ref.dtype)

    return kernel


def _full_spec(a):
    """Whole-array VMEM block (grid=(), so index_map takes no grid indices)."""
    return pl.BlockSpec(a.shape, lambda *_: (0,) * a.ndim)


@jax.jit
def lstm_model_forward(x, params):
    """x: (batch, seq, input_dim) batch-first -> (batch, output_dim).

    Mirrors eval-mode LSTMModel.forward: zero-initialised (h0, c0), multi-layer LSTM,
    last timestep of last layer, final fc.
    """
    B, T, _ = x.shape
    layers = params["lstm"]
    num_layers = len(layers)
    Hp = layers[0]["whh"].shape[0]
    out_dim = params["fc_w"].shape[1]

    inputs = [x.astype(jnp.float32)]
    for layer in layers:
        inputs += [layer["wih"], layer["whh"], layer["bias"]]
    inputs += [params["fc_w"], params["fc_b"]]

    return pl.pallas_call(
        _make_fused_lstm_kernel(num_layers, B, T, Hp),
        out_shape=jax.ShapeDtypeStruct((B, out_dim), jnp.float32),
        in_specs=[_full_spec(a) for a in inputs],
        out_specs=pl.BlockSpec((B, out_dim), lambda *_: (0, 0)),
        scratch_shapes=[pltpu.VMEM((T * B, Hp), jnp.float32)],
    )(*inputs)


# ---------------------------------------------------------------------------
# Parameters: raw (PyTorch nn.LSTM / nn.Linear layout) + kernel layout conversion
# ---------------------------------------------------------------------------

def init_raw_params(key, input_dim, hidden_dim, layer_dim, output_dim):
    """Raw weights with nn.LSTM / nn.Linear shapes, uniform(-1/sqrt(H), 1/sqrt(H))."""
    raw = {"lstm": []}
    k = hidden_dim ** -0.5
    for layer in range(layer_dim):
        d_in = input_dim if layer == 0 else hidden_dim
        key, k1, k2, k3, k4 = jax.random.split(key, 5)
        raw["lstm"].append({
            "w_ih": jax.random.uniform(k1, (4 * hidden_dim, d_in), jnp.float32, -k, k),
            "w_hh": jax.random.uniform(k2, (4 * hidden_dim, hidden_dim), jnp.float32, -k, k),
            "b_ih": jax.random.uniform(k3, (4 * hidden_dim,), jnp.float32, -k, k),
            "b_hh": jax.random.uniform(k4, (4 * hidden_dim,), jnp.float32, -k, k),
        })
    key, k5, k6 = jax.random.split(key, 3)
    raw["fc_w"] = jax.random.uniform(k5, (output_dim, hidden_dim), jnp.float32, -k, k)
    raw["fc_b"] = jax.random.uniform(k6, (output_dim,), jnp.float32, -k, k)
    return raw


def _round_up(n, m):
    return ((n + m - 1) // m) * m


def prepare_params(raw, lane=128):
    """Convert PyTorch-layout weights into the transposed, lane-padded kernel layout.

    Each gate [i, f, g, o] occupies its own Hp-wide (lane-aligned) column block; padded
    rows/columns are zero, so padded hidden/cell lanes remain exactly zero throughout.
    """
    H = raw["lstm"][0]["w_hh"].shape[1]
    Hp = _round_up(H, lane)

    def pad_gates(w):                       # (4H, D) torch layout -> (D, 4*Hp)
        D = w.shape[1]
        out = jnp.zeros((D, 4 * Hp), jnp.float32)
        for g in range(4):
            out = out.at[:, g * Hp:g * Hp + H].set(w[g * H:(g + 1) * H, :].T)
        return out

    def pad_bias(b_ih, b_hh):               # -> (1, 4*Hp), combined b_ih + b_hh
        b = b_ih + b_hh
        out = jnp.zeros((4 * Hp,), jnp.float32)
        for g in range(4):
            out = out.at[g * Hp:g * Hp + H].set(b[g * H:(g + 1) * H])
        return out.reshape(1, 4 * Hp)

    def pad_rows(m):                        # (H, N) -> (Hp, N), zero rows for padded lanes
        return jnp.zeros((Hp, m.shape[1]), jnp.float32).at[:m.shape[0], :].set(m)

    params = {"lstm": []}
    for i, layer in enumerate(raw["lstm"]):
        wih = pad_gates(layer["w_ih"])
        if i > 0:
            wih = pad_rows(wih)             # layers >= 1 consume the padded hidden state
        params["lstm"].append({
            "wih": wih,
            "whh": pad_rows(pad_gates(layer["w_hh"])),
            "bias": pad_bias(layer["b_ih"], layer["b_hh"]),
        })
    params["fc_w"] = pad_rows(raw["fc_w"].T.astype(jnp.float32))   # (Hp, O)
    params["fc_b"] = raw["fc_b"].reshape(1, -1).astype(jnp.float32)
    return params


# ---------------------------------------------------------------------------
# Plain-JAX reference (eval-mode LSTMModel.forward) for parity checking
# ---------------------------------------------------------------------------

def reference_forward(x, raw):
    hp = jax.lax.Precision.HIGHEST
    seq = x
    for layer in raw["lstm"]:
        w_ih, w_hh = layer["w_ih"], layer["w_hh"]
        b = layer["b_ih"] + layer["b_hh"]
        B, T, _ = seq.shape
        H = w_hh.shape[1]
        h = jnp.zeros((B, H), jnp.float32)
        c = jnp.zeros((B, H), jnp.float32)
        outs = []
        for t in range(T):
            g = (jnp.dot(seq[:, t, :], w_ih.T, precision=hp)
                 + jnp.dot(h, w_hh.T, precision=hp) + b)
            i = jax.nn.sigmoid(g[:, 0:H])
            f = jax.nn.sigmoid(g[:, H:2 * H])
            gg = jnp.tanh(g[:, 2 * H:3 * H])
            o = jax.nn.sigmoid(g[:, 3 * H:4 * H])
            c = f * c + i * gg
            h = o * jnp.tanh(c)
            outs.append(h)
        seq = jnp.stack(outs, axis=1)
    return jnp.dot(seq[:, -1, :], raw["fc_w"].T, precision=hp) + raw["fc_b"]


# ---------------------------------------------------------------------------
# Main
# ---------------------------------------------------------------------------

if __name__ == "__main__":
    input_dim, hidden_dim, layer_dim, output_dim = 16, 32, 2, 4
    dropout_prob = 0.2          # nn.LSTM dropout is training-only; eval forward implemented
    batch, seq = 2, 8

    key = jax.random.PRNGKey(0)
    key, kx, kp = jax.random.split(key, 3)
    x = jax.random.normal(kx, (batch, seq, input_dim), dtype=jnp.float32)

    raw = init_raw_params(kp, input_dim, hidden_dim, layer_dim, output_dim)
    params = prepare_params(raw)

    out = jax.block_until_ready(lstm_model_forward(x, params))
    assert out.shape == (batch, output_dim), out.shape

    # Parity vs. plain-JAX eval-mode reference (loose bound tolerates MXU f32 pass-count
    # differences between the Pallas matmuls and the XLA HIGHEST-precision reference).
    ref = jax.block_until_ready(reference_forward(x, raw))
    max_err = float(jnp.max(jnp.abs(out - ref)))
    assert max_err < 2e-2, f"mismatch vs reference: {max_err}"

    print("KERNEL_OK")
</pallas_src>

<mosaic_0001>
module attributes {stable_mosaic.version = 11 : i64} {
  func.func @kernel(%arg0: memref<2x8x16xf32, #tpu.memory_space<vmem>>, %arg1: memref<16x512xf32, #tpu.memory_space<vmem>>, %arg2: memref<128x512xf32, #tpu.memory_space<vmem>>, %arg3: memref<1x512xf32, #tpu.memory_space<vmem>>, %arg4: memref<128x512xf32, #tpu.memory_space<vmem>>, %arg5: memref<128x512xf32, #tpu.memory_space<vmem>>, %arg6: memref<1x512xf32, #tpu.memory_space<vmem>>, %arg7: memref<128x4xf32, #tpu.memory_space<vmem>>, %arg8: memref<1x4xf32, #tpu.memory_space<vmem>>, %arg9: memref<2x4xf32, #tpu.memory_space<vmem>>, %arg10: memref<16x128xf32, #tpu.memory_space<vmem>>) attributes {dimension_semantics = [], scalar_prefetch = 0 : i64, scratch_operands = 1 : i64, tpu.core_type = #tpu.core_type<tc>} {
    %c0 = arith.constant 0 : index
    %c0_0 = arith.constant 0 : index
    %0 = vector.load %arg1[%c0, %c0_0] : memref<16x512xf32, #tpu.memory_space<vmem>>, vector<16x512xf32>
    %c0_1 = arith.constant 0 : index
    %c0_2 = arith.constant 0 : index
    %1 = vector.load %arg2[%c0_1, %c0_2] : memref<128x512xf32, #tpu.memory_space<vmem>>, vector<128x512xf32>
    %c0_3 = arith.constant 0 : index
    %c0_4 = arith.constant 0 : index
    %2 = vector.load %arg3[%c0_3, %c0_4] : memref<1x512xf32, #tpu.memory_space<vmem>>, vector<1x512xf32>
    %c0_5 = arith.constant 0 : index
    %c0_6 = arith.constant 0 : index
    %c0_7 = arith.constant 0 : index
    %3 = vector.load %arg0[%c0_5, %c0_6, %c0_7] : memref<2x8x16xf32, #tpu.memory_space<vmem>>, vector<2x8x16xf32>
    %4 = vector.shape_cast %3 : vector<2x8x16xf32> to vector<16x16xf32>
    %cst = arith.constant dense<0.000000e+00> : vector<16x512xf32>
    %5 = tpu.matmul %4, %0, %cst {dimension_numbers = #tpu.dot_dimension_numbers<[1], [0], [0], [1], [0, 0, 1, 1], [], []>} : vector<16x16xf32>, vector<16x512xf32>, vector<16x512xf32> -> vector<16x512xf32>
    %6 = vector.broadcast %2 : vector<1x512xf32> to vector<16x512xf32>
    %7 = arith.addf %5, %6 : vector<16x512xf32>
    %8 = vector.shape_cast %7 : vector<16x512xf32> to vector<2x8x512xf32>
    %cst_8 = arith.constant 0.000000e+00 : f32
    %9 = vector.broadcast %cst_8 : f32 to vector<2x128xf32>
    %cst_9 = arith.constant 0.000000e+00 : f32
    %10 = vector.broadcast %cst_9 : f32 to vector<2x128xf32>
    %11 = vector.extract_strided_slice %8 {offsets = [0, 0, 0], sizes = [2, 1, 512], strides = [1, 1, 1]} : vector<2x8x512xf32> to vector<2x1x512xf32>
    %12 = vector.shape_cast %11 : vector<2x1x512xf32> to vector<2x512xf32>
    %cst_10 = arith.constant dense<0.000000e+00> : vector<2x512xf32>
    %13 = tpu.matmul %9, %1, %cst_10 {dimension_numbers = #tpu.dot_dimension_numbers<[1], [0], [0], [1], [0, 0, 1, 1], [], []>} : vector<2x128xf32>, vector<128x512xf32>, vector<2x512xf32> -> vector<2x512xf32>
    %14 = arith.addf %12, %13 : vector<2x512xf32>
    %15 = vector.extract_strided_slice %14 {offsets = [0, 0], sizes = [2, 128], strides = [1, 1]} : vector<2x512xf32> to vector<2x128xf32>
    %16 = arith.negf %15 : vector<2x128xf32>
    %17 = math.exp %16 : vector<2x128xf32>
    %cst_11 = arith.constant 1.000000e+00 : f32
    %18 = vector.broadcast %cst_11 : f32 to vector<2x128xf32>
    %19 = arith.addf %18, %17 : vector<2x128xf32>
    %20 = arith.divf %18, %19 : vector<2x128xf32>
    %21 = vector.extract_strided_slice %14 {offsets = [0, 128], sizes = [2, 128], strides = [1, 1]} : vector<2x512xf32> to vector<2x128xf32>
    %22 = arith.negf %21 : vector<2x128xf32>
    %23 = math.exp %22 : vector<2x128xf32>
    %cst_12 = arith.constant 1.000000e+00 : f32
    %24 = vector.broadcast %cst_12 : f32 to vector<2x128xf32>
    %25 = arith.addf %24, %23 : vector<2x128xf32>
    %26 = arith.divf %24, %25 : vector<2x128xf32>
    %27 = vector.extract_strided_slice %14 {offsets = [0, 256], sizes = [2, 128], strides = [1, 1]} : vector<2x512xf32> to vector<2x128xf32>
    %28 = math.tanh %27 : vector<2x128xf32>
    %29 = vector.extract_strided_slice %14 {offsets = [0, 384], sizes = [2, 128], strides = [1, 1]} : vector<2x512xf32> to vector<2x128xf32>
    %30 = arith.negf %29 : vector<2x128xf32>
    %31 = math.exp %30 : vector<2x128xf32>
    %cst_13 = arith.constant 1.000000e+00 : f32
    %32 = vector.broadcast %cst_13 : f32 to vector<2x128xf32>
    %33 = arith.addf %32, %31 : vector<2x128xf32>
    %34 = arith.divf %32, %33 : vector<2x128xf32>
    %35 = arith.mulf %26, %10 : vector<2x128xf32>
    %36 = arith.mulf %20, %28 : vector<2x128xf32>
    %37 = arith.addf %35, %36 : vector<2x128xf32>
    %38 = math.tanh %37 : vector<2x128xf32>
    %39 = arith.mulf %34, %38 : vector<2x128xf32>
    %c0_14 = arith.constant 0 : index
    %c0_15 = arith.constant 0 : index
    %40 = vector.load %arg10[%c0_14, %c0_15] : memref<16x128xf32, #tpu.memory_space<vmem>>, vector<2x128xf32>
    tpu.vector_store %arg10[%c0_14, %c0_15], %39 {strides = array<i32>} : memref<16x128xf32, #tpu.memory_space<vmem>>, vector<2x128xf32>,
    %41 = vector.extract_strided_slice %8 {offsets = [0, 1, 0], sizes = [2, 1, 512], strides = [1, 1, 1]} : vector<2x8x512xf32> to vector<2x1x512xf32>
    %42 = vector.shape_cast %41 : vector<2x1x512xf32> to vector<2x512xf32>
    %cst_16 = arith.constant dense<0.000000e+00> : vector<2x512xf32>
    %43 = tpu.matmul %39, %1, %cst_16 {dimension_numbers = #tpu.dot_dimension_numbers<[1], [0], [0], [1], [0, 0, 1, 1], [], []>} : vector<2x128xf32>, vector<128x512xf32>, vector<2x512xf32> -> vector<2x512xf32>
    %44 = arith.addf %42, %43 : vector<2x512xf32>
    %45 = vector.extract_strided_slice %44 {offsets = [0, 0], sizes = [2, 128], strides = [1, 1]} : vector<2x512xf32> to vector<2x128xf32>
    %46 = arith.negf %45 : vector<2x128xf32>
    %47 = math.exp %46 : vector<2x128xf32>
    %cst_17 = arith.constant 1.000000e+00 : f32
    %48 = vector.broadcast %cst_17 : f32 to vector<2x128xf32>
    %49 = arith.addf %48, %47 : vector<2x128xf32>
    %50 = arith.divf %48, %49 : vector<2x128xf32>
    %51 = vector.extract_strided_slice %44 {offsets = [0, 128], sizes = [2, 128], strides = [1, 1]} : vector<2x512xf32> to vector<2x128xf32>
    %52 = arith.negf %51 : vector<2x128xf32>
    %53 = math.exp %52 : vector<2x128xf32>
    %cst_18 = arith.constant 1.000000e+00 : f32
    %54 = vector.broadcast %cst_18 : f32 to vector<2x128xf32>
    %55 = arith.addf %54, %53 : vector<2x128xf32>
    %56 = arith.divf %54, %55 : vector<2x128xf32>
    %57 = vector.extract_strided_slice %44 {offsets = [0, 256], sizes = [2, 128], strides = [1, 1]} : vector<2x512xf32> to vector<2x128xf32>
    %58 = math.tanh %57 : vector<2x128xf32>
    %59 = vector.extract_strided_slice %44 {offsets = [0, 384], sizes = [2, 128], strides = [1, 1]} : vector<2x512xf32> to vector<2x128xf32>
    %60 = arith.negf %59 : vector<2x128xf32>
    %61 = math.exp %60 : vector<2x128xf32>
    %cst_19 = arith.constant 1.000000e+00 : f32
    %62 = vector.broadcast %cst_19 : f32 to vector<2x128xf32>
    %63 = arith.addf %62, %61 : vector<2x128xf32>
    %64 = arith.divf %62, %63 : vector<2x128xf32>
    %65 = arith.mulf %56, %37 : vector<2x128xf32>
    %66 = arith.mulf %50, %58 : vector<2x128xf32>
    %67 = arith.addf %65, %66 : vector<2x128xf32>
    %68 = math.tanh %67 : vector<2x128xf32>
    %69 = arith.mulf %64, %68 : vector<2x128xf32>
    %c2 = arith.constant 2 : index
    %c0_20 = arith.constant 0 : index
    %70 = vector.load %arg10[%c2, %c0_20] : memref<16x128xf32, #tpu.memory_space<vmem>>, vector<2x128xf32>
    tpu.vector_store %arg10[%c2, %c0_20], %69 {strides = array<i32>} : memref<16x128xf32, #tpu.memory_space<vmem>>, vector<2x128xf32>,
    %71 = vector.extract_strided_slice %8 {offsets = [0, 2, 0], sizes = [2, 1, 512], strides = [1, 1, 1]} : vector<2x8x512xf32> to vector<2x1x512xf32>
    %72 = vector.shape_cast %71 : vector<2x1x512xf32> to vector<2x512xf32>
    %cst_21 = arith.constant dense<0.000000e+00> : vector<2x512xf32>
    %73 = tpu.matmul %69, %1, %cst_21 {dimension_numbers = #tpu.dot_dimension_numbers<[1], [0], [0], [1], [0, 0, 1, 1], [], []>} : vector<2x128xf32>, vector<128x512xf32>, vector<2x512xf32> -> vector<2x512xf32>
    %74 = arith.addf %72, %73 : vector<2x512xf32>
    %75 = vector.extract_strided_slice %74 {offsets = [0, 0], sizes = [2, 128], strides = [1, 1]} : vector<2x512xf32> to vector<2x128xf32>
    %76 = arith.negf %75 : vector<2x128xf32>
    %77 = math.exp %76 : vector<2x128xf32>
    %cst_22 = arith.constant 1.000000e+00 : f32
    %78 = vector.broadcast %cst_22 : f32 to vector<2x128xf32>
    %79 = arith.addf %78, %77 : vector<2x128xf32>
    %80 = arith.divf %78, %79 : vector<2x128xf32>
    %81 = vector.extract_strided_slice %74 {offsets = [0, 128], sizes = [2, 128], strides = [1, 1]} : vector<2x512xf32> to vector<2x128xf32>
    %82 = arith.negf %81 : vector<2x128xf32>
    %83 = math.exp %82 : vector<2x128xf32>
    %cst_23 = arith.constant 1.000000e+00 : f32
    %84 = vector.broadcast %cst_23 : f32 to vector<2x128xf32>
    %85 = arith.addf %84, %83 : vector<2x128xf32>
    %86 = arith.divf %84, %85 : vector<2x128xf32>
    %87 = vector.extract_strided_slice %74 {offsets = [0, 256], sizes = [2, 128], strides = [1, 1]} : vector<2x512xf32> to vector<2x128xf32>
    %88 = math.tanh %87 : vector<2x128xf32>
    %89 = vector.extract_strided_slice %74 {offsets = [0, 384], sizes = [2, 128], strides = [1, 1]} : vector<2x512xf32> to vector<2x128xf32>
    %90 = arith.negf %89 : vector<2x128xf32>
    %91 = math.exp %90 : vector<2x128xf32>
    %cst_24 = arith.constant 1.000000e+00 : f32
    %92 = vector.broadcast %cst_24 : f32 to vector<2x128xf32>
    %93 = arith.addf %92, %91 : vector<2x128xf32>
    %94 = arith.divf %92, %93 : vector<2x128xf32>
    %95 = arith.mulf %86, %67 : vector<2x128xf32>
    %96 = arith.mulf %80, %88 : vector<2x128xf32>
    %97 = arith.addf %95, %96 : vector<2x128xf32>
    %98 = math.tanh %97 : vector<2x128xf32>
    %99 = arith.mulf %94, %98 : vector<2x128xf32>
    %c4 = arith.constant 4 : index
    %c0_25 = arith.constant 0 : index
    %100 = vector.load %arg10[%c4, %c0_25] : memref<16x128xf32, #tpu.memory_space<vmem>>, vector<2x128xf32>
    tpu.vector_store %arg10[%c4, %c0_25], %99 {strides = array<i32>} : memref<16x128xf32, #tpu.memory_space<vmem>>, vector<2x128xf32>,
    %101 = vector.extract_strided_slice %8 {offsets = [0, 3, 0], sizes = [2, 1, 512], strides = [1, 1, 1]} : vector<2x8x512xf32> to vector<2x1x512xf32>
    %102 = vector.shape_cast %101 : vector<2x1x512xf32> to vector<2x512xf32>
    %cst_26 = arith.constant dense<0.000000e+00> : vector<2x512xf32>
    %103 = tpu.matmul %99, %1, %cst_26 {dimension_numbers = #tpu.dot_dimension_numbers<[1], [0], [0], [1], [0, 0, 1, 1], [], []>} : vector<2x128xf32>, vector<128x512xf32>, vector<2x512xf32> -> vector<2x512xf32>
    %104 = arith.addf %102, %103 : vector<2x512xf32>
    %105 = vector.extract_strided_slice %104 {offsets = [0, 0], sizes = [2, 128], strides = [1, 1]} : vector<2x512xf32> to vector<2x128xf32>
    %106 = arith.negf %105 : vector<2x128xf32>
    %107 = math.exp %106 : vector<2x128xf32>
    %cst_27 = arith.constant 1.000000e+00 : f32
    %108 = vector.broadcast %cst_27 : f32 to vector<2x128xf32>
    %109 = arith.addf %108, %107 : vector<2x128xf32>
    %110 = arith.divf %108, %109 : vector<2x128xf32>
    %111 = vector.extract_strided_slice %104 {offsets = [0, 128], sizes = [2, 128], strides = [1, 1]} : vector<2x512xf32> to vector<2x128xf32>
    %112 = arith.negf %111 : vector<2x128xf32>
    %113 = math.exp %112 : vector<2x128xf32>
    %cst_28 = arith.constant 1.000000e+00 : f32
    %114 = vector.broadcast %cst_28 : f32 to vector<2x128xf32>
    %115 = arith.addf %114, %113 : vector<2x128xf32>
    %116 = arith.divf %114, %115 : vector<2x128xf32>
    %117 = vector.extract_strided_slice %104 {offsets = [0, 256], sizes = [2, 128], strides = [1, 1]} : vector<2x512xf32> to vector<2x128xf32>
    %118 = math.tanh %117 : vector<2x128xf32>
    %119 = vector.extract_strided_slice %104 {offsets = [0, 384], sizes = [2, 128], strides = [1, 1]} : vector<2x512xf32> to vector<2x128xf32>
    %120 = arith.negf %119 : vector<2x128xf32>
    %121 = math.exp %120 : vector<2x128xf32>
    %cst_29 = arith.constant 1.000000e+00 : f32
    %122 = vector.broadcast %cst_29 : f32 to vector<2x128xf32>
    %123 = arith.addf %122, %121 : vector<2x128xf32>
    %124 = arith.divf %122, %123 : vector<2x128xf32>
    %125 = arith.mulf %116, %97 : vector<2x128xf32>
    %126 = arith.mulf %110, %118 : vector<2x128xf32>
    %127 = arith.addf %125, %126 : vector<2x128xf32>
    %128 = math.tanh %127 : vector<2x128xf32>
    %129 = arith.mulf %124, %128 : vector<2x128xf32>
    %c6 = arith.constant 6 : index
    %c0_30 = arith.constant 0 : index
    %130 = vector.load %arg10[%c6, %c0_30] : memref<16x128xf32, #tpu.memory_space<vmem>>, vector<2x128xf32>
    tpu.vector_store %arg10[%c6, %c0_30], %129 {strides = array<i32>} : memref<16x128xf32, #tpu.memory_space<vmem>>, vector<2x128xf32>,
    %131 = vector.extract_strided_slice %8 {offsets = [0, 4, 0], sizes = [2, 1, 512], strides = [1, 1, 1]} : vector<2x8x512xf32> to vector<2x1x512xf32>
    %132 = vector.shape_cast %131 : vector<2x1x512xf32> to vector<2x512xf32>
    %cst_31 = arith.constant dense<0.000000e+00> : vector<2x512xf32>
    %133 = tpu.matmul %129, %1, %cst_31 {dimension_numbers = #tpu.dot_dimension_numbers<[1], [0], [0], [1], [0, 0, 1, 1], [], []>} : vector<2x128xf32>, vector<128x512xf32>, vector<2x512xf32> -> vector<2x512xf32>
    %134 = arith.addf %132, %133 : vector<2x512xf32>
    %135 = vector.extract_strided_slice %134 {offsets = [0, 0], sizes = [2, 128], strides = [1, 1]} : vector<2x512xf32> to vector<2x128xf32>
    %136 = arith.negf %135 : vector<2x128xf32>
    %137 = math.exp %136 : vector<2x128xf32>
    %cst_32 = arith.constant 1.000000e+00 : f32
    %138 = vector.broadcast %cst_32 : f32 to vector<2x128xf32>
    %139 = arith.addf %138, %137 : vector<2x128xf32>
    %140 = arith.divf %138, %139 : vector<2x128xf32>
    %141 = vector.extract_strided_slice %134 {offsets = [0, 128], sizes = [2, 128], strides = [1, 1]} : vector<2x512xf32> to vector<2x128xf32>
    %142 = arith.negf %141 : vector<2x128xf32>
    %143 = math.exp %142 : vector<2x128xf32>
    %cst_33 = arith.constant 1.000000e+00 : f32
    %144 = vector.broadcast %cst_33 : f32 to vector<2x128xf32>
    %145 = arith.addf %144, %143 : vector<2x128xf32>
    %146 = arith.divf %144, %145 : vector<2x128xf32>
    %147 = vector.extract_strided_slice %134 {offsets = [0, 256], sizes = [2, 128], strides = [1, 1]} : vector<2x512xf32> to vector<2x128xf32>
    %148 = math.tanh %147 : vector<2x128xf32>
    %149 = vector.extract_strided_slice %134 {offsets = [0, 384], sizes = [2, 128], strides = [1, 1]} : vector<2x512xf32> to vector<2x128xf32>
    %150 = arith.negf %149 : vector<2x128xf32>
    %151 = math.exp %150 : vector<2x128xf32>
    %cst_34 = arith.constant 1.000000e+00 : f32
    %152 = vector.broadcast %cst_34 : f32 to vector<2x128xf32>
    %153 = arith.addf %152, %151 : vector<2x128xf32>
    %154 = arith.divf %152, %153 : vector<2x128xf32>
    %155 = arith.mulf %146, %127 : vector<2x128xf32>
    %156 = arith.mulf %140, %148 : vector<2x128xf32>
    %157 = arith.addf %155, %156 : vector<2x128xf32>
    %158 = math.tanh %157 : vector<2x128xf32>
    %159 = arith.mulf %154, %158 : vector<2x128xf32>
    %c8 = arith.constant 8 : index
    %c0_35 = arith.constant 0 : index
    %160 = vector.load %arg10[%c8, %c0_35] : memref<16x128xf32, #tpu.memory_space<vmem>>, vector<2x128xf32>
    tpu.vector_store %arg10[%c8, %c0_35], %159 {strides = array<i32>} : memref<16x128xf32, #tpu.memory_space<vmem>>, vector<2x128xf32>,
    %161 = vector.extract_strided_slice %8 {offsets = [0, 5, 0], sizes = [2, 1, 512], strides = [1, 1, 1]} : vector<2x8x512xf32> to vector<2x1x512xf32>
    %162 = vector.shape_cast %161 : vector<2x1x512xf32> to vector<2x512xf32>
    %cst_36 = arith.constant dense<0.000000e+00> : vector<2x512xf32>
    %163 = tpu.matmul %159, %1, %cst_36 {dimension_numbers = #tpu.dot_dimension_numbers<[1], [0], [0], [1], [0, 0, 1, 1], [], []>} : vector<2x128xf32>, vector<128x512xf32>, vector<2x512xf32> -> vector<2x512xf32>
    %164 = arith.addf %162, %163 : vector<2x512xf32>
    %165 = vector.extract_strided_slice %164 {offsets = [0, 0], sizes = [2, 128], strides = [1, 1]} : vector<2x512xf32> to vector<2x128xf32>
    %166 = arith.negf %165 : vector<2x128xf32>
    %167 = math.exp %166 : vector<2x128xf32>
    %cst_37 = arith.constant 1.000000e+00 : f32
    %168 = vector.broadcast %cst_37 : f32 to vector<2x128xf32>
    %169 = arith.addf %168, %167 : vector<2x128xf32>
    %170 = arith.divf %168, %169 : vector<2x128xf32>
    %171 = vector.extract_strided_slice %164 {offsets = [0, 128], sizes = [2, 128], strides = [1, 1]} : vector<2x512xf32> to vector<2x128xf32>
    %172 = arith.negf %171 : vector<2x128xf32>
    %173 = math.exp %172 : vector<2x128xf32>
    %cst_38 = arith.constant 1.000000e+00 : f32
    %174 = vector.broadcast %cst_38 : f32 to vector<2x128xf32>
    %175 = arith.addf %174, %173 : vector<2x128xf32>
    %176 = arith.divf %174, %175 : vector<2x128xf32>
    %177 = vector.extract_strided_slice %164 {offsets = [0, 256], sizes = [2, 128], strides = [1, 1]} : vector<2x512xf32> to vector<2x128xf32>
    %178 = math.tanh %177 : vector<2x128xf32>
    %179 = vector.extract_strided_slice %164 {offsets = [0, 384], sizes = [2, 128], strides = [1, 1]} : vector<2x512xf32> to vector<2x128xf32>
    %180 = arith.negf %179 : vector<2x128xf32>
    %181 = math.exp %180 : vector<2x128xf32>
    %cst_39 = arith.constant 1.000000e+00 : f32
    %182 = vector.broadcast %cst_39 : f32 to vector<2x128xf32>
    %183 = arith.addf %182, %181 : vector<2x128xf32>
    %184 = arith.divf %182, %183 : vector<2x128xf32>
    %185 = arith.mulf %176, %157 : vector<2x128xf32>
    %186 = arith.mulf %170, %178 : vector<2x128xf32>
    %187 = arith.addf %185, %186 : vector<2x128xf32>
    %188 = math.tanh %187 : vector<2x128xf32>
    %189 = arith.mulf %184, %188 : vector<2x128xf32>
    %c10 = arith.constant 10 : index
    %c0_40 = arith.constant 0 : index
    %190 = vector.load %arg10[%c10, %c0_40] : memref<16x128xf32, #tpu.memory_space<vmem>>, vector<2x128xf32>
    tpu.vector_store %arg10[%c10, %c0_40], %189 {strides = array<i32>} : memref<16x128xf32, #tpu.memory_space<vmem>>, vector<2x128xf32>,
    %191 = vector.extract_strided_slice %8 {offsets = [0, 6, 0], sizes = [2, 1, 512], strides = [1, 1, 1]} : vector<2x8x512xf32> to vector<2x1x512xf32>
    %192 = vector.shape_cast %191 : vector<2x1x512xf32> to vector<2x512xf32>
    %cst_41 = arith.constant dense<0.000000e+00> : vector<2x512xf32>
    %193 = tpu.matmul %189, %1, %cst_41 {dimension_numbers = #tpu.dot_dimension_numbers<[1], [0], [0], [1], [0, 0, 1, 1], [], []>} : vector<2x128xf32>, vector<128x512xf32>, vector<2x512xf32> -> vector<2x512xf32>
    %194 = arith.addf %192, %193 : vector<2x512xf32>
    %195 = vector.extract_strided_slice %194 {offsets = [0, 0], sizes = [2, 128], strides = [1, 1]} : vector<2x512xf32> to vector<2x128xf32>
    %196 = arith.negf %195 : vector<2x128xf32>
    %197 = math.exp %196 : vector<2x128xf32>
    %cst_42 = arith.constant 1.000000e+00 : f32
    %198 = vector.broadcast %cst_42 : f32 to vector<2x128xf32>
    %199 = arith.addf %198, %197 : vector<2x128xf32>
    %200 = arith.divf %198, %199 : vector<2x128xf32>
    %201 = vector.extract_strided_slice %194 {offsets = [0, 128], sizes = [2, 128], strides = [1, 1]} : vector<2x512xf32> to vector<2x128xf32>
    %202 = arith.negf %201 : vector<2x128xf32>
    %203 = math.exp %202 : vector<2x128xf32>
    %cst_43 = arith.constant 1.000000e+00 : f32
    %204 = vector.broadcast %cst_43 : f32 to vector<2x128xf32>
    %205 = arith.addf %204, %203 : vector<2x128xf32>
    %206 = arith.divf %204, %205 : vector<2x128xf32>
    %207 = vector.extract_strided_slice %194 {offsets = [0, 256], sizes = [2, 128], strides = [1, 1]} : vector<2x512xf32> to vector<2x128xf32>
    %208 = math.tanh %207 : vector<2x128xf32>
    %209 = vector.extract_strided_slice %194 {offsets = [0, 384], sizes = [2, 128], strides = [1, 1]} : vector<2x512xf32> to vector<2x128xf32>
    %210 = arith.negf %209 : vector<2x128xf32>
    %211 = math.exp %210 : vector<2x128xf32>
    %cst_44 = arith.constant 1.000000e+00 : f32
    %212 = vector.broadcast %cst_44 : f32 to vector<2x128xf32>
    %213 = arith.addf %212, %211 : vector<2x128xf32>
    %214 = arith.divf %212, %213 : vector<2x128xf32>
    %215 = arith.mulf %206, %187 : vector<2x128xf32>
    %216 = arith.mulf %200, %208 : vector<2x128xf32>
    %217 = arith.addf %215, %216 : vector<2x128xf32>
    %218 = math.tanh %217 : vector<2x128xf32>
    %219 = arith.mulf %214, %218 : vector<2x128xf32>
    %c12 = arith.constant 12 : index
    %c0_45 = arith.constant 0 : index
    %220 = vector.load %arg10[%c12, %c0_45] : memref<16x128xf32, #tpu.memory_space<vmem>>, vector<2x128xf32>
    tpu.vector_store %arg10[%c12, %c0_45], %219 {strides = array<i32>} : memref<16x128xf32, #tpu.memory_space<vmem>>, vector<2x128xf32>,
    %221 = vector.extract_strided_slice %8 {offsets = [0, 7, 0], sizes = [2, 1, 512], strides = [1, 1, 1]} : vector<2x8x512xf32> to vector<2x1x512xf32>
    %222 = vector.shape_cast %221 : vector<2x1x512xf32> to vector<2x512xf32>
    %cst_46 = arith.constant dense<0.000000e+00> : vector<2x512xf32>
    %223 = tpu.matmul %219, %1, %cst_46 {dimension_numbers = #tpu.dot_dimension_numbers<[1], [0], [0], [1], [0, 0, 1, 1], [], []>} : vector<2x128xf32>, vector<128x512xf32>, vector<2x512xf32> -> vector<2x512xf32>
    %224 = arith.addf %222, %223 : vector<2x512xf32>
    %225 = vector.extract_strided_slice %224 {offsets = [0, 0], sizes = [2, 128], strides = [1, 1]} : vector<2x512xf32> to vector<2x128xf32>
    %226 = arith.negf %225 : vector<2x128xf32>
    %227 = math.exp %226 : vector<2x128xf32>
    %cst_47 = arith.constant 1.000000e+00 : f32
    %228 = vector.broadcast %cst_47 : f32 to vector<2x128xf32>
    %229 = arith.addf %228, %227 : vector<2x128xf32>
    %230 = arith.divf %228, %229 : vector<2x128xf32>
    %231 = vector.extract_strided_slice %224 {offsets = [0, 128], sizes = [2, 128], strides = [1, 1]} : vector<2x512xf32> to vector<2x128xf32>
    %232 = arith.negf %231 : vector<2x128xf32>
    %233 = math.exp %232 : vector<2x128xf32>
    %cst_48 = arith.constant 1.000000e+00 : f32
    %234 = vector.broadcast %cst_48 : f32 to vector<2x128xf32>
    %235 = arith.addf %234, %233 : vector<2x128xf32>
    %236 = arith.divf %234, %235 : vector<2x128xf32>
    %237 = vector.extract_strided_slice %224 {offsets = [0, 256], sizes = [2, 128], strides = [1, 1]} : vector<2x512xf32> to vector<2x128xf32>
    %238 = math.tanh %237 : vector<2x128xf32>
    %239 = vector.extract_strided_slice %224 {offsets = [0, 384], sizes = [2, 128], strides = [1, 1]} : vector<2x512xf32> to vector<2x128xf32>
    %240 = arith.negf %239 : vector<2x128xf32>
    %241 = math.exp %240 : vector<2x128xf32>
    %cst_49 = arith.constant 1.000000e+00 : f32
    %242 = vector.broadcast %cst_49 : f32 to vector<2x128xf32>
    %243 = arith.addf %242, %241 : vector<2x128xf32>
    %244 = arith.divf %242, %243 : vector<2x128xf32>
    %245 = arith.mulf %236, %217 : vector<2x128xf32>
    %246 = arith.mulf %230, %238 : vector<2x128xf32>
    %247 = arith.addf %245, %246 : vector<2x128xf32>
    %248 = math.tanh %247 : vector<2x128xf32>
    %249 = arith.mulf %244, %248 : vector<2x128xf32>
    %c14 = arith.constant 14 : index
    %c0_50 = arith.constant 0 : index
    %250 = vector.load %arg10[%c14, %c0_50] : memref<16x128xf32, #tpu.memory_space<vmem>>, vector<2x128xf32>
    tpu.vector_store %arg10[%c14, %c0_50], %249 {strides = array<i32>} : memref<16x128xf32, #tpu.memory_space<vmem>>, vector<2x128xf32>,
    %c0_51 = arith.constant 0 : index
    %c0_52 = arith.constant 0 : index
    %251 = vector.load %arg4[%c0_51, %c0_52] : memref<128x512xf32, #tpu.memory_space<vmem>>, vector<128x512xf32>
    %c0_53 = arith.constant 0 : index
    %c0_54 = arith.constant 0 : index
    %252 = vector.load %arg5[%c0_53, %c0_54] : memref<128x512xf32, #tpu.memory_space<vmem>>, vector<128x512xf32>
    %c0_55 = arith.constant 0 : index
    %c0_56 = arith.constant 0 : index
    %253 = vector.load %arg6[%c0_55, %c0_56] : memref<1x512xf32, #tpu.memory_space<vmem>>, vector<1x512xf32>
    %c0_57 = arith.constant 0 : index
    %c0_58 = arith.constant 0 : index
    %254 = vector.load %arg10[%c0_57, %c0_58] : memref<16x128xf32, #tpu.memory_space<vmem>>, vector<16x128xf32>
    %cst_59 = arith.constant dense<0.000000e+00> : vector<16x512xf32>
    %255 = tpu.matmul %254, %251, %cst_59 {dimension_numbers = #tpu.dot_dimension_numbers<[1], [0], [0], [1], [0, 0, 1, 1], [], []>} : vector<16x128xf32>, vector<128x512xf32>, vector<16x512xf32> -> vector<16x512xf32>
    %256 = vector.broadcast %253 : vector<1x512xf32> to vector<16x512xf32>
    %257 = arith.addf %255, %256 : vector<16x512xf32>
    %cst_60 = arith.constant 0.000000e+00 : f32
    %258 = vector.broadcast %cst_60 : f32 to vector<2x128xf32>
    %cst_61 = arith.constant 0.000000e+00 : f32
    %259 = vector.broadcast %cst_61 : f32 to vector<2x128xf32>
    %260 = vector.extract_strided_slice %257 {offsets = [0, 0], sizes = [2, 512], strides = [1, 1]} : vector<16x512xf32> to vector<2x512xf32>
    %cst_62 = arith.constant dense<0.000000e+00> : vector<2x512xf32>
    %261 = tpu.matmul %258, %252, %cst_62 {dimension_numbers = #tpu.dot_dimension_numbers<[1], [0], [0], [1], [0, 0, 1, 1], [], []>} : vector<2x128xf32>, vector<128x512xf32>, vector<2x512xf32> -> vector<2x512xf32>
    %262 = arith.addf %260, %261 : vector<2x512xf32>
    %263 = vector.extract_strided_slice %262 {offsets = [0, 0], sizes = [2, 128], strides = [1, 1]} : vector<2x512xf32> to vector<2x128xf32>
    %264 = arith.negf %263 : vector<2x128xf32>
    %265 = math.exp %264 : vector<2x128xf32>
    %cst_63 = arith.constant 1.000000e+00 : f32
    %266 = vector.broadcast %cst_63 : f32 to vector<2x128xf32>
    %267 = arith.addf %266, %265 : vector<2x128xf32>
    %268 = arith.divf %266, %267 : vector<2x128xf32>
    %269 = vector.extract_strided_slice %262 {offsets = [0, 128], sizes = [2, 128], strides = [1, 1]} : vector<2x512xf32> to vector<2x128xf32>
    %270 = arith.negf %269 : vector<2x128xf32>
    %271 = math.exp %270 : vector<2x128xf32>
    %cst_64 = arith.constant 1.000000e+00 : f32
    %272 = vector.broadcast %cst_64 : f32 to vector<2x128xf32>
    %273 = arith.addf %272, %271 : vector<2x128xf32>
    %274 = arith.divf %272, %273 : vector<2x128xf32>
    %275 = vector.extract_strided_slice %262 {offsets = [0, 256], sizes = [2, 128], strides = [1, 1]} : vector<2x512xf32> to vector<2x128xf32>
    %276 = math.tanh %275 : vector<2x128xf32>
    %277 = vector.extract_strided_slice %262 {offsets = [0, 384], sizes = [2, 128], strides = [1, 1]} : vector<2x512xf32> to vector<2x128xf32>
    %278 = arith.negf %277 : vector<2x128xf32>
    %279 = math.exp %278 : vector<2x128xf32>
    %cst_65 = arith.constant 1.000000e+00 : f32
    %280 = vector.broadcast %cst_65 : f32 to vector<2x128xf32>
    %281 = arith.addf %280, %279 : vector<2x128xf32>
    %282 = arith.divf %280, %281 : vector<2x128xf32>
    %283 = arith.mulf %274, %259 : vector<2x128xf32>
    %284 = arith.mulf %268, %276 : vector<2x128xf32>
    %285 = arith.addf %283, %284 : vector<2x128xf32>
    %286 = math.tanh %285 : vector<2x128xf32>
    %287 = arith.mulf %282, %286 : vector<2x128xf32>
    %288 = vector.extract_strided_slice %257 {offsets = [2, 0], sizes = [2, 512], strides = [1, 1]} : vector<16x512xf32> to vector<2x512xf32>
    %cst_66 = arith.constant dense<0.000000e+00> : vector<2x512xf32>
    %289 = tpu.matmul %287, %252, %cst_66 {dimension_numbers = #tpu.dot_dimension_numbers<[1], [0], [0], [1], [0, 0, 1, 1], [], []>} : vector<2x128xf32>, vector<128x512xf32>, vector<2x512xf32> -> vector<2x512xf32>
    %290 = arith.addf %288, %289 : vector<2x512xf32>
    %291 = vector.extract_strided_slice %290 {offsets = [0, 0], sizes = [2, 128], strides = [1, 1]} : vector<2x512xf32> to vector<2x128xf32>
    %292 = arith.negf %291 : vector<2x128xf32>
    %293 = math.exp %292 : vector<2x128xf32>
    %cst_67 = arith.constant 1.000000e+00 : f32
    %294 = vector.broadcast %cst_67 : f32 to vector<2x128xf32>
    %295 = arith.addf %294, %293 : vector<2x128xf32>
    %296 = arith.divf %294, %295 : vector<2x128xf32>
    %297 = vector.extract_strided_slice %290 {offsets = [0, 128], sizes = [2, 128], strides = [1, 1]} : vector<2x512xf32> to vector<2x128xf32>
    %298 = arith.negf %297 : vector<2x128xf32>
    %299 = math.exp %298 : vector<2x128xf32>
    %cst_68 = arith.constant 1.000000e+00 : f32
    %300 = vector.broadcast %cst_68 : f32 to vector<2x128xf32>
    %301 = arith.addf %300, %299 : vector<2x128xf32>
    %302 = arith.divf %300, %301 : vector<2x128xf32>
    %303 = vector.extract_strided_slice %290 {offsets = [0, 256], sizes = [2, 128], strides = [1, 1]} : vector<2x512xf32> to vector<2x128xf32>
    %304 = math.tanh %303 : vector<2x128xf32>
    %305 = vector.extract_strided_slice %290 {offsets = [0, 384], sizes = [2, 128], strides = [1, 1]} : vector<2x512xf32> to vector<2x128xf32>
    %306 = arith.negf %305 : vector<2x128xf32>
    %307 = math.exp %306 : vector<2x128xf32>
    %cst_69 = arith.constant 1.000000e+00 : f32
    %308 = vector.broadcast %cst_69 : f32 to vector<2x128xf32>
    %309 = arith.addf %308, %307 : vector<2x128xf32>
    %310 = arith.divf %308, %309 : vector<2x128xf32>
    %311 = arith.mulf %302, %285 : vector<2x128xf32>
    %312 = arith.mulf %296, %304 : vector<2x128xf32>
    %313 = arith.addf %311, %312 : vector<2x128xf32>
    %314 = math.tanh %313 : vector<2x128xf32>
    %315 = arith.mulf %310, %314 : vector<2x128xf32>
    %316 = vector.extract_strided_slice %257 {offsets = [4, 0], sizes = [2, 512], strides = [1, 1]} : vector<16x512xf32> to vector<2x512xf32>
    %cst_70 = arith.constant dense<0.000000e+00> : vector<2x512xf32>
    %317 = tpu.matmul %315, %252, %cst_70 {dimension_numbers = #tpu.dot_dimension_numbers<[1], [0], [0], [1], [0, 0, 1, 1], [], []>} : vector<2x128xf32>, vector<128x512xf32>, vector<2x512xf32> -> vector<2x512xf32>
    %318 = arith.addf %316, %317 : vector<2x512xf32>
    %319 = vector.extract_strided_slice %318 {offsets = [0, 0], sizes = [2, 128], strides = [1, 1]} : vector<2x512xf32> to vector<2x128xf32>
    %320 = arith.negf %319 : vector<2x128xf32>
    %321 = math.exp %320 : vector<2x128xf32>
    %cst_71 = arith.constant 1.000000e+00 : f32
    %322 = vector.broadcast %cst_71 : f32 to vector<2x128xf32>
    %323 = arith.addf %322, %321 : vector<2x128xf32>
    %324 = arith.divf %322, %323 : vector<2x128xf32>
    %325 = vector.extract_strided_slice %318 {offsets = [0, 128], sizes = [2, 128], strides = [1, 1]} : vector<2x512xf32> to vector<2x128xf32>
    %326 = arith.negf %325 : vector<2x128xf32>
    %327 = math.exp %326 : vector<2x128xf32>
    %cst_72 = arith.constant 1.000000e+00 : f32
    %328 = vector.broadcast %cst_72 : f32 to vector<2x128xf32>
    %329 = arith.addf %328, %327 : vector<2x128xf32>
    %330 = arith.divf %328, %329 : vector<2x128xf32>
    %331 = vector.extract_strided_slice %318 {offsets = [0, 256], sizes = [2, 128], strides = [1, 1]} : vector<2x512xf32> to vector<2x128xf32>
    %332 = math.tanh %331 : vector<2x128xf32>
    %333 = vector.extract_strided_slice %318 {offsets = [0, 384], sizes = [2, 128], strides = [1, 1]} : vector<2x512xf32> to vector<2x128xf32>
    %334 = arith.negf %333 : vector<2x128xf32>
    %335 = math.exp %334 : vector<2x128xf32>
    %cst_73 = arith.constant 1.000000e+00 : f32
    %336 = vector.broadcast %cst_73 : f32 to vector<2x128xf32>
    %337 = arith.addf %336, %335 : vector<2x128xf32>
    %338 = arith.divf %336, %337 : vector<2x128xf32>
    %339 = arith.mulf %330, %313 : vector<2x128xf32>
    %340 = arith.mulf %324, %332 : vector<2x128xf32>
    %341 = arith.addf %339, %340 : vector<2x128xf32>
    %342 = math.tanh %341 : vector<2x128xf32>
    %343 = arith.mulf %338, %342 : vector<2x128xf32>
    %344 = vector.extract_strided_slice %257 {offsets = [6, 0], sizes = [2, 512], strides = [1, 1]} : vector<16x512xf32> to vector<2x512xf32>
    %cst_74 = arith.constant dense<0.000000e+00> : vector<2x512xf32>
    %345 = tpu.matmul %343, %252, %cst_74 {dimension_numbers = #tpu.dot_dimension_numbers<[1], [0], [0], [1], [0, 0, 1, 1], [], []>} : vector<2x128xf32>, vector<128x512xf32>, vector<2x512xf32> -> vector<2x512xf32>
    %346 = arith.addf %344, %345 : vector<2x512xf32>
    %347 = vector.extract_strided_slice %346 {offsets = [0, 0], sizes = [2, 128], strides = [1, 1]} : vector<2x512xf32> to vector<2x128xf32>
    %348 = arith.negf %347 : vector<2x128xf32>
    %349 = math.exp %348 : vector<2x128xf32>
    %cst_75 = arith.constant 1.000000e+00 : f32
    %350 = vector.broadcast %cst_75 : f32 to vector<2x128xf32>
    %351 = arith.addf %350, %349 : vector<2x128xf32>
    %352 = arith.divf %350, %351 : vector<2x128xf32>
    %353 = vector.extract_strided_slice %346 {offsets = [0, 128], sizes = [2, 128], strides = [1, 1]} : vector<2x512xf32> to vector<2x128xf32>
    %354 = arith.negf %353 : vector<2x128xf32>
    %355 = math.exp %354 : vector<2x128xf32>
    %cst_76 = arith.constant 1.000000e+00 : f32
    %356 = vector.broadcast %cst_76 : f32 to vector<2x128xf32>
    %357 = arith.addf %356, %355 : vector<2x128xf32>
    %358 = arith.divf %356, %357 : vector<2x128xf32>
    %359 = vector.extract_strided_slice %346 {offsets = [0, 256], sizes = [2, 128], strides = [1, 1]} : vector<2x512xf32> to vector<2x128xf32>
    %360 = math.tanh %359 : vector<2x128xf32>
    %361 = vector.extract_strided_slice %346 {offsets = [0, 384], sizes = [2, 128], strides = [1, 1]} : vector<2x512xf32> to vector<2x128xf32>
    %362 = arith.negf %361 : vector<2x128xf32>
    %363 = math.exp %362 : vector<2x128xf32>
    %cst_77 = arith.constant 1.000000e+00 : f32
    %364 = vector.broadcast %cst_77 : f32 to vector<2x128xf32>
    %365 = arith.addf %364, %363 : vector<2x128xf32>
    %366 = arith.divf %364, %365 : vector<2x128xf32>
    %367 = arith.mulf %358, %341 : vector<2x128xf32>
    %368 = arith.mulf %352, %360 : vector<2x128xf32>
    %369 = arith.addf %367, %368 : vector<2x128xf32>
    %370 = math.tanh %369 : vector<2x128xf32>
    %371 = arith.mulf %366, %370 : vector<2x128xf32>
    %372 = vector.extract_strided_slice %257 {offsets = [8, 0], sizes = [2, 512], strides = [1, 1]} : vector<16x512xf32> to vector<2x512xf32>
    %cst_78 = arith.constant dense<0.000000e+00> : vector<2x512xf32>
    %373 = tpu.matmul %371, %252, %cst_78 {dimension_numbers = #tpu.dot_dimension_numbers<[1], [0], [0], [1], [0, 0, 1, 1], [], []>} : vector<2x128xf32>, vector<128x512xf32>, vector<2x512xf32> -> vector<2x512xf32>
    %374 = arith.addf %372, %373 : vector<2x512xf32>
    %375 = vector.extract_strided_slice %374 {offsets = [0, 0], sizes = [2, 128], strides = [1, 1]} : vector<2x512xf32> to vector<2x128xf32>
    %376 = arith.negf %375 : vector<2x128xf32>
    %377 = math.exp %376 : vector<2x128xf32>
    %cst_79 = arith.constant 1.000000e+00 : f32
    %378 = vector.broadcast %cst_79 : f32 to vector<2x128xf32>
    %379 = arith.addf %378, %377 : vector<2x128xf32>
    %380 = arith.divf %378, %379 : vector<2x128xf32>
    %381 = vector.extract_strided_slice %374 {offsets = [0, 128], sizes = [2, 128], strides = [1, 1]} : vector<2x512xf32> to vector<2x128xf32>
    %382 = arith.negf %381 : vector<2x128xf32>
    %383 = math.exp %382 : vector<2x128xf32>
    %cst_80 = arith.constant 1.000000e+00 : f32
    %384 = vector.broadcast %cst_80 : f32 to vector<2x128xf32>
    %385 = arith.addf %384, %383 : vector<2x128xf32>
    %386 = arith.divf %384, %385 : vector<2x128xf32>
    %387 = vector.extract_strided_slice %374 {offsets = [0, 256], sizes = [2, 128], strides = [1, 1]} : vector<2x512xf32> to vector<2x128xf32>
    %388 = math.tanh %387 : vector<2x128xf32>
    %389 = vector.extract_strided_slice %374 {offsets = [0, 384], sizes = [2, 128], strides = [1, 1]} : vector<2x512xf32> to vector<2x128xf32>
    %390 = arith.negf %389 : vector<2x128xf32>
    %391 = math.exp %390 : vector<2x128xf32>
    %cst_81 = arith.constant 1.000000e+00 : f32
    %392 = vector.broadcast %cst_81 : f32 to vector<2x128xf32>
    %393 = arith.addf %392, %391 : vector<2x128xf32>
    %394 = arith.divf %392, %393 : vector<2x128xf32>
    %395 = arith.mulf %386, %369 : vector<2x128xf32>
    %396 = arith.mulf %380, %388 : vector<2x128xf32>
    %397 = arith.addf %395, %396 : vector<2x128xf32>
    %398 = math.tanh %397 : vector<2x128xf32>
    %399 = arith.mulf %394, %398 : vector<2x128xf32>
    %400 = vector.extract_strided_slice %257 {offsets = [10, 0], sizes = [2, 512], strides = [1, 1]} : vector<16x512xf32> to vector<2x512xf32>
    %cst_82 = arith.constant dense<0.000000e+00> : vector<2x512xf32>
    %401 = tpu.matmul %399, %252, %cst_82 {dimension_numbers = #tpu.dot_dimension_numbers<[1], [0], [0], [1], [0, 0, 1, 1], [], []>} : vector<2x128xf32>, vector<128x512xf32>, vector<2x512xf32> -> vector<2x512xf32>
    %402 = arith.addf %400, %401 : vector<2x512xf32>
    %403 = vector.extract_strided_slice %402 {offsets = [0, 0], sizes = [2, 128], strides = [1, 1]} : vector<2x512xf32> to vector<2x128xf32>
    %404 = arith.negf %403 : vector<2x128xf32>
    %405 = math.exp %404 : vector<2x128xf32>
    %cst_83 = arith.constant 1.000000e+00 : f32
    %406 = vector.broadcast %cst_83 : f32 to vector<2x128xf32>
    %407 = arith.addf %406, %405 : vector<2x128xf32>
    %408 = arith.divf %406, %407 : vector<2x128xf32>
    %409 = vector.extract_strided_slice %402 {offsets = [0, 128], sizes = [2, 128], strides = [1, 1]} : vector<2x512xf32> to vector<2x128xf32>
    %410 = arith.negf %409 : vector<2x128xf32>
    %411 = math.exp %410 : vector<2x128xf32>
    %cst_84 = arith.constant 1.000000e+00 : f32
    %412 = vector.broadcast %cst_84 : f32 to vector<2x128xf32>
    %413 = arith.addf %412, %411 : vector<2x128xf32>
    %414 = arith.divf %412, %413 : vector<2x128xf32>
    %415 = vector.extract_strided_slice %402 {offsets = [0, 256], sizes = [2, 128], strides = [1, 1]} : vector<2x512xf32> to vector<2x128xf32>
    %416 = math.tanh %415 : vector<2x128xf32>
    %417 = vector.extract_strided_slice %402 {offsets = [0, 384], sizes = [2, 128], strides = [1, 1]} : vector<2x512xf32> to vector<2x128xf32>
    %418 = arith.negf %417 : vector<2x128xf32>
    %419 = math.exp %418 : vector<2x128xf32>
    %cst_85 = arith.constant 1.000000e+00 : f32
    %420 = vector.broadcast %cst_85 : f32 to vector<2x128xf32>
    %421 = arith.addf %420, %419 : vector<2x128xf32>
    %422 = arith.divf %420, %421 : vector<2x128xf32>
    %423 = arith.mulf %414, %397 : vector<2x128xf32>
    %424 = arith.mulf %408, %416 : vector<2x128xf32>
    %425 = arith.addf %423, %424 : vector<2x128xf32>
    %426 = math.tanh %425 : vector<2x128xf32>
    %427 = arith.mulf %422, %426 : vector<2x128xf32>
    %428 = vector.extract_strided_slice %257 {offsets = [12, 0], sizes = [2, 512], strides = [1, 1]} : vector<16x512xf32> to vector<2x512xf32>
    %cst_86 = arith.constant dense<0.000000e+00> : vector<2x512xf32>
    %429 = tpu.matmul %427, %252, %cst_86 {dimension_numbers = #tpu.dot_dimension_numbers<[1], [0], [0], [1], [0, 0, 1, 1], [], []>} : vector<2x128xf32>, vector<128x512xf32>, vector<2x512xf32> -> vector<2x512xf32>
    %430 = arith.addf %428, %429 : vector<2x512xf32>
    %431 = vector.extract_strided_slice %430 {offsets = [0, 0], sizes = [2, 128], strides = [1, 1]} : vector<2x512xf32> to vector<2x128xf32>
    %432 = arith.negf %431 : vector<2x128xf32>
    %433 = math.exp %432 : vector<2x128xf32>
    %cst_87 = arith.constant 1.000000e+00 : f32
    %434 = vector.broadcast %cst_87 : f32 to vector<2x128xf32>
    %435 = arith.addf %434, %433 : vector<2x128xf32>
    %436 = arith.divf %434, %435 : vector<2x128xf32>
    %437 = vector.extract_strided_slice %430 {offsets = [0, 128], sizes = [2, 128], strides = [1, 1]} : vector<2x512xf32> to vector<2x128xf32>
    %438 = arith.negf %437 : vector<2x128xf32>
    %439 = math.exp %438 : vector<2x128xf32>
    %cst_88 = arith.constant 1.000000e+00 : f32
    %440 = vector.broadcast %cst_88 : f32 to vector<2x128xf32>
    %441 = arith.addf %440, %439 : vector<2x128xf32>
    %442 = arith.divf %440, %441 : vector<2x128xf32>
    %443 = vector.extract_strided_slice %430 {offsets = [0, 256], sizes = [2, 128], strides = [1, 1]} : vector<2x512xf32> to vector<2x128xf32>
    %444 = math.tanh %443 : vector<2x128xf32>
    %445 = vector.extract_strided_slice %430 {offsets = [0, 384], sizes = [2, 128], strides = [1, 1]} : vector<2x512xf32> to vector<2x128xf32>
    %446 = arith.negf %445 : vector<2x128xf32>
    %447 = math.exp %446 : vector<2x128xf32>
    %cst_89 = arith.constant 1.000000e+00 : f32
    %448 = vector.broadcast %cst_89 : f32 to vector<2x128xf32>
    %449 = arith.addf %448, %447 : vector<2x128xf32>
    %450 = arith.divf %448, %449 : vector<2x128xf32>
    %451 = arith.mulf %442, %425 : vector<2x128xf32>
    %452 = arith.mulf %436, %444 : vector<2x128xf32>
    %453 = arith.addf %451, %452 : vector<2x128xf32>
    %454 = math.tanh %453 : vector<2x128xf32>
    %455 = arith.mulf %450, %454 : vector<2x128xf32>
    %456 = vector.extract_strided_slice %257 {offsets = [14, 0], sizes = [2, 512], strides = [1, 1]} : vector<16x512xf32> to vector<2x512xf32>
    %cst_90 = arith.constant dense<0.000000e+00> : vector<2x512xf32>
    %457 = tpu.matmul %455, %252, %cst_90 {dimension_numbers = #tpu.dot_dimension_numbers<[1], [0], [0], [1], [0, 0, 1, 1], [], []>} : vector<2x128xf32>, vector<128x512xf32>, vector<2x512xf32> -> vector<2x512xf32>
    %458 = arith.addf %456, %457 : vector<2x512xf32>
    %459 = vector.extract_strided_slice %458 {offsets = [0, 0], sizes = [2, 128], strides = [1, 1]} : vector<2x512xf32> to vector<2x128xf32>
    %460 = arith.negf %459 : vector<2x128xf32>
    %461 = math.exp %460 : vector<2x128xf32>
    %cst_91 = arith.constant 1.000000e+00 : f32
    %462 = vector.broadcast %cst_91 : f32 to vector<2x128xf32>
    %463 = arith.addf %462, %461 : vector<2x128xf32>
    %464 = arith.divf %462, %463 : vector<2x128xf32>
    %465 = vector.extract_strided_slice %458 {offsets = [0, 128], sizes = [2, 128], strides = [1, 1]} : vector<2x512xf32> to vector<2x128xf32>
    %466 = arith.negf %465 : vector<2x128xf32>
    %467 = math.exp %466 : vector<2x128xf32>
    %cst_92 = arith.constant 1.000000e+00 : f32
    %468 = vector.broadcast %cst_92 : f32 to vector<2x128xf32>
    %469 = arith.addf %468, %467 : vector<2x128xf32>
    %470 = arith.divf %468, %469 : vector<2x128xf32>
    %471 = vector.extract_strided_slice %458 {offsets = [0, 256], sizes = [2, 128], strides = [1, 1]} : vector<2x512xf32> to vector<2x128xf32>
    %472 = math.tanh %471 : vector<2x128xf32>
    %473 = vector.extract_strided_slice %458 {offsets = [0, 384], sizes = [2, 128], strides = [1, 1]} : vector<2x512xf32> to vector<2x128xf32>
    %474 = arith.negf %473 : vector<2x128xf32>
    %475 = math.exp %474 : vector<2x128xf32>
    %cst_93 = arith.constant 1.000000e+00 : f32
    %476 = vector.broadcast %cst_93 : f32 to vector<2x128xf32>
    %477 = arith.addf %476, %475 : vector<2x128xf32>
    %478 = arith.divf %476, %477 : vector<2x128xf32>
    %479 = arith.mulf %470, %453 : vector<2x128xf32>
    %480 = arith.mulf %464, %472 : vector<2x128xf32>
    %481 = arith.addf %479, %480 : vector<2x128xf32>
    %482 = math.tanh %481 : vector<2x128xf32>
    %483 = arith.mulf %478, %482 : vector<2x128xf32>
    %c0_94 = arith.constant 0 : index
    %c0_95 = arith.constant 0 : index
    %484 = vector.load %arg7[%c0_94, %c0_95] : memref<128x4xf32, #tpu.memory_space<vmem>>, vector<128x4xf32>
    %cst_96 = arith.constant dense<0.000000e+00> : vector<2x4xf32>
    %485 = tpu.matmul %483, %484, %cst_96 {dimension_numbers = #tpu.dot_dimension_numbers<[1], [0], [0], [1], [0, 0, 1, 1], [], []>} : vector<2x128xf32>, vector<128x4xf32>, vector<2x4xf32> -> vector<2x4xf32>
    %c0_97 = arith.constant 0 : index
    %c0_98 = arith.constant 0 : index
    %486 = vector.load %arg8[%c0_97, %c0_98] : memref<1x4xf32, #tpu.memory_space<vmem>>, vector<1x4xf32>
    %487 = vector.broadcast %486 : vector<1x4xf32> to vector<2x4xf32>
    %488 = arith.addf %485, %487 : vector<2x4xf32>
    %c0_99 = arith.constant 0 : index
    %c0_100 = arith.constant 0 : index
    %489 = vector.load %arg9[%c0_99, %c0_100] : memref<2x4xf32, #tpu.memory_space<vmem>>, vector<2x4xf32>
    tpu.vector_store %arg9[%c0_99, %c0_100], %488 {strides = array<i32>} : memref<2x4xf32, #tpu.memory_space<vmem>>, vector<2x4xf32>,
    return
  }
}

</mosaic_0001>

<llo_original>
// kernel: lstm_model_forward.1
$region0: #{lstm_model_forward.1}
  #allocation0 [shape = 'u32[]', space=smem, size = 0x4, offset = 0x4, fixed_abs, tag = 'smem constant byte address 0x4 - core index']
  #allocation1 [shape = 'u32[72,128]{1,0:T(1,128)}', space=vmem, size = 0x9000, scoped, tag = 'internal scratch']
  #allocation2 [shape = 'f32[16,128]{1,0:T(8,128)}', space=vmem, size = 0x2000, scoped, tag = 'scratch operand']
  %s0 = inlined_call_operand.vmem [shape: f32[2,8,16], index: 0, kind: input, shape index: {}]
  %s1 = inlined_call_operand.vmem [shape: f32[16,512], index: 1, kind: input, shape index: {}]
  %s2 = inlined_call_operand.hbm [shape: f32[128,512], index: 2, kind: input, shape index: {}]
  %s3 = inlined_call_operand.vmem [shape: f32[1,512], index: 3, kind: input, shape index: {}]
  %s4 = inlined_call_operand.hbm [shape: f32[128,512], index: 4, kind: input, shape index: {}]
  %s5 = inlined_call_operand.hbm [shape: f32[128,512], index: 5, kind: input, shape index: {}]
  %s6 = inlined_call_operand.vmem [shape: f32[1,512], index: 6, kind: input, shape index: {}]
  %s7 = inlined_call_operand.vmem [shape: f32[128,4], index: 7, kind: input, shape index: {}]
  %s8 = inlined_call_operand.vmem [shape: f32[1,4], index: 8, kind: input, shape index: {}]
  %s9 = inlined_call_operand.hbm [shape: f32[2,4], index: 9, kind: output, shape index: {}]
  %s10 = sld [smem:[#allocation0]]
  $region58: #{lstm_model_forward.1} parent=0
    _
  %s12 = ssub.s32 1, %s10
  %s13 = scalar_select 0, %s12, %s10
  $region1: #{lstm_model_forward.1} parent=0
    #allocation3 [shape = 'u8[262144]{0}', space=vmem, size = 0x40000, scoped, tag = 'input window, operand 2, single buffered']
    #allocation4 [shape = 's32[1]{0}', space=sflag, size = 0x4, scoped, tag = 'scoped memory for lstm_model_forward.1']
    #allocation5 [shape = 's32[1]{0}', space=sflag, size = 0x4, scoped, tag = 'scoped memory for lstm_model_forward.1']
    #allocation6 [shape = 'u8[262144]{0}', space=vmem, size = 0x40000, scoped, tag = 'input window, operand 4, single buffered']
    #allocation7 [shape = 's32[1]{0}', space=sflag, size = 0x4, scoped, tag = 'scoped memory for lstm_model_forward.1']
    #allocation8 [shape = 'u8[262144]{0}', space=vmem, size = 0x40000, scoped, tag = 'input window, operand 5, single buffered']
    #allocation9 [shape = 'u8[1024]{0}', space=vmem, size = 0x400, scoped, tag = 'output window, operand 0, single buffered']
    %14 = vsyncpa [#allocation4], 0
    %15 = vsyncpa [#allocation7], 0
    %16 = vsyncpa [#allocation5], 0
    // Predicated region
    $region2: #{lstm_model_forward.1} parent=1 // pred_check
      _
    $region3: #{lstm_model_forward.1} parent=1 // pred_check_branch
      %18 = sbr.rel (0) target = $region5
    $region4: #{lstm_model_forward.1} parent=1 // pred_region
      _
    $region5: #{lstm_model_forward.1} parent=1 // pred_fallthru
      _
    // Predicated region
    $region6: #{lstm_model_forward.1} parent=1 // pred_check
      _
    $region7: #{lstm_model_forward.1} parent=1 // pred_check_branch
      %20 = sbr.rel (0) target = $region9
    $region8: #{lstm_model_forward.1} parent=1 // pred_region
      _
    $region9: #{lstm_model_forward.1} parent=1 // pred_fallthru
      _
    // Predicated region
    $region10: #{lstm_model_forward.1} parent=1 // pred_check
      _
    $region11: #{lstm_model_forward.1} parent=1 // pred_check_branch
      %22 = sbr.rel (0) target = $region13
    $region12: #{lstm_model_forward.1} parent=1 // pred_region
      %24 = vsyncadd [#allocation4], 0
      %s25 = sshll.u32 %s2, 4
      %s26 = int_to_ptr.hbm [resolvable:$true] %s25
      %s27 = sshll.u32 [#allocation3], 4
      %s28 = int_to_ptr.vmem [resolvable:$true] %s27
      %33 = dma.hbm_to_vmem [thread:$0]  %s26, 8192, %s28, [#allocation4], 512, 512, 32
    $region13: #{lstm_model_forward.1} parent=1 // pred_fallthru
      _
    // Predicated region
    $region14: #{lstm_model_forward.1} parent=1 // pred_check
      _
    $region15: #{lstm_model_forward.1} parent=1 // pred_check_branch
      %35 = sbr.rel (0) target = $region17
    $region16: #{lstm_model_forward.1} parent=1 // pred_region
      _
    $region17: #{lstm_model_forward.1} parent=1 // pred_fallthru
      _
    // Predicated region
    $region18: #{lstm_model_forward.1} parent=1 // pred_check
      _
    $region19: #{lstm_model_forward.1} parent=1 // pred_check_branch
      %37 = sbr.rel (0) target = $region21
    $region20: #{lstm_model_forward.1} parent=1 // pred_region
      %39 = vsyncadd [#allocation7], 0
      %s40 = sshll.u32 %s4, 4
      %s41 = int_to_ptr.hbm [resolvable:$true] %s40
      %s42 = sshll.u32 [#allocation6], 4
      %s43 = int_to_ptr.vmem [resolvable:$true] %s42
      %48 = dma.hbm_to_vmem [thread:$0]  %s41, 8192, %s43, [#allocation7], 512, 512, 32
    $region21: #{lstm_model_forward.1} parent=1 // pred_fallthru
      _
    // Predicated region
    $region22: #{lstm_model_forward.1} parent=1 // pred_check
      _
    $region23: #{lstm_model_forward.1} parent=1 // pred_check_branch
      %50 = sbr.rel (0) target = $region25
    $region24: #{lstm_model_forward.1} parent=1 // pred_region
      %52 = vsyncadd [#allocation7], 0
      %s53 = sshll.u32 %s5, 4
      %s54 = int_to_ptr.hbm [resolvable:$true] %s53
      %s55 = sshll.u32 [#allocation8], 4
      %s56 = int_to_ptr.vmem [resolvable:$true] %s55
      %61 = dma.hbm_to_vmem [thread:$0]  %s54, 8192, %s56, [#allocation7], 512, 512, 32
    $region25: #{lstm_model_forward.1} parent=1 // pred_fallthru
      _
    // Predicated region
    $region26: #{lstm_model_forward.1} parent=1 // pred_check
      _
    $region27: #{lstm_model_forward.1} parent=1 // pred_check_branch
      %63 = sbr.rel (0) target = $region29
    $region28: #{lstm_model_forward.1} parent=1 // pred_region
      _
    $region29: #{lstm_model_forward.1} parent=1 // pred_fallthru
      _
    // Predicated region
    $region30: #{lstm_model_forward.1} parent=1 // pred_check
      _
    $region31: #{lstm_model_forward.1} parent=1 // pred_check_branch
      %65 = sbr.rel (0) target = $region33
    $region32: #{lstm_model_forward.1} parent=1 // pred_region
      _
    $region33: #{lstm_model_forward.1} parent=1 // pred_fallthru
      _
    // Predicated region
    $region34: #{lstm_model_forward.1} parent=1 // pred_check
      _
    $region35: #{lstm_model_forward.1} parent=1 // pred_check_branch
      %67 = sbr.rel (0) target = $region37
    $region36: #{lstm_model_forward.1} parent=1 // pred_region
      _
    $region37: #{lstm_model_forward.1} parent=1 // pred_fallthru
      _
    // Predicated region
    $region38: #{lstm_model_forward.1} parent=1 // pred_check
      _
    $region39: #{lstm_model_forward.1} parent=1 // pred_check_branch
      %69 = sbr.rel (0) target = $region41
    $region40: #{lstm_model_forward.1} parent=1 // pred_region
      %71 = dma.done [#allocation4], 8192
    $region41: #{lstm_model_forward.1} parent=1 // pred_fallthru
      _
    // Predicated region
    $region42: #{lstm_model_forward.1} parent=1 // pred_check
      _
    $region43: #{lstm_model_forward.1} parent=1 // pred_check_branch
      %73 = sbr.rel (0) target = $region45
    $region44: #{lstm_model_forward.1} parent=1 // pred_region
      %75 = dma.done [#allocation7], 8192
    $region45: #{lstm_model_forward.1} parent=1 // pred_fallthru
      _
    // Predicated region
    $region46: #{lstm_model_forward.1} parent=1 // pred_check
      _
    $region47: #{lstm_model_forward.1} parent=1 // pred_check_branch
      %77 = sbr.rel (0) target = $region49
    $region48: #{lstm_model_forward.1} parent=1 // pred_region
      %79 = dma.done [#allocation7], 8192
    $region49: #{lstm_model_forward.1} parent=1 // pred_fallthru
      _
    %v80 = vld [vmem:[%s1] sm:$0xff]
    %v81 = vld [vmem:[%s1 + $0x8] sm:$0xff]
    %v82 = vld [vmem:[%s1 + $0x10] sm:$0xff]
    %v83 = vld [vmem:[%s1 + $0x18] sm:$0xff]
    %v84 = vld [vmem:[%s1 + $0x20] sm:$0xff]
    %v85 = vld [vmem:[%s1 + $0x28] sm:$0xff]
    %v86 = vld [vmem:[%s1 + $0x30] sm:$0xff]
    %v87 = vld [vmem:[%s1 + $0x38] sm:$0xff]
    %v88 = vld [vmem:[#allocation3] sm:$0xff]
    %v89 = vld [vmem:[#allocation3 + $0x8] sm:$0xff]
    %v90 = vld [vmem:[#allocation3 + $0x10] sm:$0xff]
    %v91 = vld [vmem:[#allocation3 + $0x18] sm:$0xff]
    %v92 = vld [vmem:[#allocation3 + $0x20] sm:$0xff]
    %v93 = vld [vmem:[#allocation3 + $0x28] sm:$0xff]
    %v94 = vld [vmem:[#allocation3 + $0x30] sm:$0xff]
    %v95 = vld [vmem:[#allocation3 + $0x38] sm:$0xff]
    %v96 = vld [vmem:[#allocation3 + $0x40] sm:$0xff]
    %v97 = vld [vmem:[#allocation3 + $0x48] sm:$0xff]
    %v98 = vld [vmem:[#allocation3 + $0x50] sm:$0xff]
    %v99 = vld [vmem:[#allocation3 + $0x58] sm:$0xff]
    %v100 = vld [vmem:[#allocation3 + $0x60] sm:$0xff]
    %v101 = vld [vmem:[#allocation3 + $0x68] sm:$0xff]
    %v102 = vld [vmem:[#allocation3 + $0x70] sm:$0xff]
    %v103 = vld [vmem:[#allocation3 + $0x78] sm:$0xff]
    %v104 = vld [vmem:[#allocation3 + $0x80] sm:$0xff]
    %v105 = vld [vmem:[#allocation3 + $0x88] sm:$0xff]
    %v106 = vld [vmem:[#allocation3 + $0x90] sm:$0xff]
    %v107 = vld [vmem:[#allocation3 + $0x98] sm:$0xff]
    %v108 = vld [vmem:[#allocation3 + $0xa0] sm:$0xff]
    %v109 = vld [vmem:[#allocation3 + $0xa8] sm:$0xff]
    %v110 = vld [vmem:[#allocation3 + $0xb0] sm:$0xff]
    %v111 = vld [vmem:[#allocation3 + $0xb8] sm:$0xff]
    %v112 = vld [vmem:[#allocation3 + $0xc0] sm:$0xff]
    %v113 = vld [vmem:[#allocation3 + $0xc8] sm:$0xff]
    %v114 = vld [vmem:[#allocation3 + $0xd0] sm:$0xff]
    %v115 = vld [vmem:[#allocation3 + $0xd8] sm:$0xff]
    %v116 = vld [vmem:[#allocation3 + $0xe0] sm:$0xff]
    %v117 = vld [vmem:[#allocation3 + $0xe8] sm:$0xff]
    %v118 = vld [vmem:[#allocation3 + $0xf0] sm:$0xff]
    %v119 = vld [vmem:[#allocation3 + $0xf8] sm:$0xff]
    %v120 = vld [vmem:[#allocation3 + $0x100] sm:$0xff]
    %v121 = vld [vmem:[#allocation3 + $0x108] sm:$0xff]
    %v122 = vld [vmem:[#allocation3 + $0x110] sm:$0xff]
    %v123 = vld [vmem:[#allocation3 + $0x118] sm:$0xff]
    %v124 = vld [vmem:[#allocation3 + $0x120] sm:$0xff]
    %v125 = vld [vmem:[#allocation3 + $0x128] sm:$0xff]
    %v126 = vld [vmem:[#allocation3 + $0x130] sm:$0xff]
    %v127 = vld [vmem:[#allocation3 + $0x138] sm:$0xff]
    %v128 = vld [vmem:[#allocation3 + $0x140] sm:$0xff]
    %v129 = vld [vmem:[#allocation3 + $0x148] sm:$0xff]
    %v130 = vld [vmem:[#allocation3 + $0x150] sm:$0xff]
    %v131 = vld [vmem:[#allocation3 + $0x158] sm:$0xff]
    %v132 = vld [vmem:[#allocation3 + $0x160] sm:$0xff]
    %v133 = vld [vmem:[#allocation3 + $0x168] sm:$0xff]
    %v134 = vld [vmem:[#allocation3 + $0x170] sm:$0xff]
    %v135 = vld [vmem:[#allocation3 + $0x178] sm:$0xff]
    %v136 = vld [vmem:[#allocation3 + $0x180] sm:$0xff]
    %v137 = vld [vmem:[#allocation3 + $0x188] sm:$0xff]
    %v138 = vld [vmem:[#allocation3 + $0x190] sm:$0xff]
    %v139 = vld [vmem:[#allocation3 + $0x198] sm:$0xff]
    %v140 = vld [vmem:[#allocation3 + $0x1a0] sm:$0xff]
    %v141 = vld [vmem:[#allocation3 + $0x1a8] sm:$0xff]
    %v142 = vld [vmem:[#allocation3 + $0x1b0] sm:$0xff]
    %v143 = vld [vmem:[#allocation3 + $0x1b8] sm:$0xff]
    %v144 = vld [vmem:[#allocation3 + $0x1c0] sm:$0xff]
    %v145 = vld [vmem:[#allocation3 + $0x1c8] sm:$0xff]
    %v146 = vld [vmem:[#allocation3 + $0x1d0] sm:$0xff]
    %v147 = vld [vmem:[#allocation3 + $0x1d8] sm:$0xff]
    %v148 = vld [vmem:[#allocation3 + $0x1e0] sm:$0xff]
    %v149 = vld [vmem:[#allocation3 + $0x1e8] sm:$0xff]
    %v150 = vld [vmem:[#allocation3 + $0x1f0] sm:$0xff]
    %v151 = vld [vmem:[#allocation3 + $0x1f8] sm:$0xff]
    %v152 = vld [vmem:[%s3] sm:$0xf]
    %v153 = vld [vmem:[%s0] sm:$0xff]
    %v154 = vld [vmem:[%s0 + $0x8] sm:$0xff]
    %v156 = vperm.slane %v152, 0
    %v157 = vperm.slane %v152, 1
    %v158 = vperm.slane %v152, 2
    %v159 = vperm.slane %v152, 3
    %vm164 = vcmask 130048
    %v166 = vsel %vm164, %v153, 0
    %v169 = vsel %vm164, %v154, 0
    %171 = vmatpush.msra.mxu0 0.0
    %172 = vmatpush.msra.mxu0 0.0
    %173 = vmatpush.msra.mxu0 0.0
    %174 = vmatpush.msra.mxu0 0.0
    %175 = vmatpush.msra.mxu0 0.0
    %176 = vmatpush.msra.mxu0 0.0
    %177 = vmatpush.msra.mxu0 0.0
    %178 = vmatpush.msra.mxu0 0.0
    %179 = vmatpush.msra.mxu0 0.0
    %180 = vmatpush.msra.mxu0 0.0
    %181 = vmatpush.msra.mxu0 0.0
    %182 = vmatpush.msra.mxu0 0.0
    %183 = vmatpush.msra.mxu0 0.0
    %184 = vmatpush.msra.mxu0 0.0
    %185 = vmatpush.msra.mxu0 %v84
    %186 = vmatpush.msra.mxu0 %v80
    %187 = vmatmul.f32.gmra.mxu0 %v166
    %v188 = vpop.f32.mrf.mxu0
    %v189 = vadd.f32 %v156, %v188
    %190 = vmatmul.f32.gmra.mxu0 %v169
    %v191 = vpop.f32.mrf.mxu0
    %v192 = vadd.f32 %v156, %v191
    %193 = vdwg.mxu0
    %194 = vmatpush.msra.mxu0 0.0
    %195 = vmatpush.msra.mxu0 0.0
    %196 = vmatpush.msra.mxu0 0.0
    %197 = vmatpush.msra.mxu0 0.0
    %198 = vmatpush.msra.mxu0 0.0
    %199 = vmatpush.msra.mxu0 0.0
    %200 = vmatpush.msra.mxu0 0.0
    %201 = vmatpush.msra.mxu0 0.0
    %202 = vmatpush.msra.mxu0 0.0
    %203 = vmatpush.msra.mxu0 0.0
    %204 = vmatpush.msra.mxu0 0.0
    %205 = vmatpush.msra.mxu0 0.0
    %206 = vmatpush.msra.mxu0 0.0
    %207 = vmatpush.msra.mxu0 0.0
    %208 = vmatpush.msra.mxu0 %v85
    %209 = vmatpush.msra.mxu0 %v81
    %210 = vmatmul.f32.gmra.mxu0 %v166
    %v211 = vpop.f32.mrf.mxu0
    %v212 = vadd.f32 %v157, %v211
    %213 = vmatmul.f32.gmra.mxu0 %v169
    %v214 = vpop.f32.mrf.mxu0
    %v215 = vadd.f32 %v157, %v214
    %216 = vdwg.mxu0
    %217 = vmatpush.msra.mxu0 0.0
    %218 = vmatpush.msra.mxu0 0.0
    %219 = vmatpush.msra.mxu0 0.0
    %220 = vmatpush.msra.mxu0 0.0
    %221 = vmatpush.msra.mxu0 0.0
    %222 = vmatpush.msra.mxu0 0.0
    %223 = vmatpush.msra.mxu0 0.0
    %224 = vmatpush.msra.mxu0 0.0
    %225 = vmatpush.msra.mxu0 0.0
    %226 = vmatpush.msra.mxu0 0.0
    %227 = vmatpush.msra.mxu0 0.0
    %228 = vmatpush.msra.mxu0 0.0
    %229 = vmatpush.msra.mxu0 0.0
    %230 = vmatpush.msra.mxu0 0.0
    %231 = vmatpush.msra.mxu0 %v86
    %232 = vmatpush.msra.mxu0 %v82
    %233 = vmatmul.f32.gmra.mxu0 %v166
    %v234 = vpop.f32.mrf.mxu0
    %v235 = vadd.f32 %v158, %v234
    %236 = vmatmul.f32.gmra.mxu0 %v169
    %v237 = vpop.f32.mrf.mxu0
    %v238 = vadd.f32 %v158, %v237
    %239 = vdwg.mxu0
    %240 = vmatpush.msra.mxu0 0.0
    %241 = vmatpush.msra.mxu0 0.0
    %242 = vmatpush.msra.mxu0 0.0
    %243 = vmatpush.msra.mxu0 0.0
    %244 = vmatpush.msra.mxu0 0.0
    %245 = vmatpush.msra.mxu0 0.0
    %246 = vmatpush.msra.mxu0 0.0
    %247 = vmatpush.msra.mxu0 0.0
    %248 = vmatpush.msra.mxu0 0.0
    %249 = vmatpush.msra.mxu0 0.0
    %250 = vmatpush.msra.mxu0 0.0
    %251 = vmatpush.msra.mxu0 0.0
    %252 = vmatpush.msra.mxu0 0.0
    %253 = vmatpush.msra.mxu0 0.0
    %254 = vmatpush.msra.mxu0 %v87
    %255 = vmatpush.msra.mxu0 %v83
    %256 = vmatmul.f32.gmra.mxu0 %v166
    %v257 = vpop.f32.mrf.mxu0
    %v258 = vadd.f32 %v159, %v257
    %259 = vmatmul.f32.gmra.mxu0 %v169
    %v260 = vpop.f32.mrf.mxu0
    %v261 = vadd.f32 %v159, %v260
    %262 = vdwg.mxu0
    %263 = vmatpush.msra.mxu0 %v148
    %264 = vmatpush.msra.mxu0 %v144
    %265 = vmatpush.msra.mxu0 %v140
    %266 = vmatpush.msra.mxu0 %v136
    %267 = vmatpush.msra.mxu0 %v132
    %268 = vmatpush.msra.mxu0 %v128
    %269 = vmatpush.msra.mxu0 %v124
    %270 = vmatpush.msra.mxu0 %v120
    %271 = vmatpush.msra.mxu0 %v116
    %272 = vmatpush.msra.mxu0 %v112
    %273 = vmatpush.msra.mxu0 %v108
    %274 = vmatpush.msra.mxu0 %v104
    %275 = vmatpush.msra.mxu0 %v100
    %276 = vmatpush.msra.mxu0 %v96
    %277 = vmatpush.msra.mxu0 %v92
    %278 = vmatpush.msra.mxu0 %v88
    %279 = vmatmul.f32.gmra.mxu0 0.0
    %v280 = vpop.f32.mrf.mxu0
    %v281 = vadd.f32 0.0, %v280
    %282 = vdwg.mxu0
    %283 = vmatpush.msra.mxu0 %v149
    %284 = vmatpush.msra.mxu0 %v145
    %285 = vmatpush.msra.mxu0 %v141
    %286 = vmatpush.msra.mxu0 %v137
    %287 = vmatpush.msra.mxu0 %v133
    %288 = vmatpush.msra.mxu0 %v129
    %289 = vmatpush.msra.mxu0 %v125
    %290 = vmatpush.msra.mxu0 %v121
    %291 = vmatpush.msra.mxu0 %v117
    %292 = vmatpush.msra.mxu0 %v113
    %293 = vmatpush.msra.mxu0 %v109
    %294 = vmatpush.msra.mxu0 %v105
    %295 = vmatpush.msra.mxu0 %v101
    %296 = vmatpush.msra.mxu0 %v97
    %297 = vmatpush.msra.mxu0 %v93
    %298 = vmatpush.msra.mxu0 %v89
    %299 = vmatmul.f32.gmra.mxu0 0.0
    %v300 = vpop.f32.mrf.mxu0
    %v301 = vadd.f32 0.0, %v300
    %302 = vdwg.mxu0
    %303 = vmatpush.msra.mxu0 %v150
    %304 = vmatpush.msra.mxu0 %v146
    %305 = vmatpush.msra.mxu0 %v142
    %306 = vmatpush.msra.mxu0 %v138
    %307 = vmatpush.msra.mxu0 %v134
    %308 = vmatpush.msra.mxu0 %v130
    %309 = vmatpush.msra.mxu0 %v126
    %310 = vmatpush.msra.mxu0 %v122
    %311 = vmatpush.msra.mxu0 %v118
    %312 = vmatpush.msra.mxu0 %v114
    %313 = vmatpush.msra.mxu0 %v110
    %314 = vmatpush.msra.mxu0 %v106
    %315 = vmatpush.msra.mxu0 %v102
    %316 = vmatpush.msra.mxu0 %v98
    %317 = vmatpush.msra.mxu0 %v94
    %318 = vmatpush.msra.mxu0 %v90
    %319 = vmatmul.f32.gmra.mxu0 0.0
    %v320 = vpop.f32.mrf.mxu0
    %v321 = vadd.f32 0.0, %v320
    %322 = vdwg.mxu0
    %323 = vmatpush.msra.mxu0 %v151
    %324 = vmatpush.msra.mxu0 %v147
    %325 = vmatpush.msra.mxu0 %v143
    %326 = vmatpush.msra.mxu0 %v139
    %327 = vmatpush.msra.mxu0 %v135
    %328 = vmatpush.msra.mxu0 %v131
    %329 = vmatpush.msra.mxu0 %v127
    %330 = vmatpush.msra.mxu0 %v123
    %331 = vmatpush.msra.mxu0 %v119
    %332 = vmatpush.msra.mxu0 %v115
    %333 = vmatpush.msra.mxu0 %v111
    %334 = vmatpush.msra.mxu0 %v107
    %335 = vmatpush.msra.mxu0 %v103
    %336 = vmatpush.msra.mxu0 %v99
    %337 = vmatpush.msra.mxu0 %v95
    %338 = vmatpush.msra.mxu0 %v91
    %339 = vmatmul.f32.gmra.mxu0 0.0
    %v340 = vpop.f32.mrf.mxu0
    %v341 = vadd.f32 0.0, %v340
    %342 = vdwg.mxu0
    %v347 = vrot.slane %v281, 1
    %v348 = vrot.slane %v301, 1
    %v349 = vrot.slane %v321, 1
    %v350 = vrot.slane %v341, 1
    %v359 = vadd.f32 %v189, %v281
    %v360 = vadd.f32 %v212, %v301
    %v361 = vadd.f32 %v235, %v321
    %v362 = vadd.f32 %v258, %v341
    %v363 = vadd.f32 %v192, %v347
    %v364 = vadd.f32 %v215, %v348
    %v365 = vadd.f32 %v238, %v349
    %v366 = vadd.f32 %v261, %v350
    %v367 = vxor.u32 %v359, 2147483648
    %v368 = vxor.u32 %v363, 2147483648
    %v369 = vmul.f32 %v367, 1.442695
    %v370 = vpow.pop %v369
    %v371 = vmul.f32 %v368, 1.442695
    %v372 = vpow.pop %v371
    %v373 = vadd.f32 %v370, 1.0
    %v374 = vadd.f32 %v372, 1.0
    %v375 = vrcp.pop %v373
    %v376 = vmul.f32 %v373, %v375
    %v377 = vsub.f32 1.0, %v376
    %v378 = vmul.f32 %v375, %v377
    %v379 = vadd.f32 %v375, %v378
    %vm380 = vweird.f32 %v373
    %vm381 = vweird.f32 %v375
    %vm382 = vmor %vm380, %vm381
    %v383 = vsel %vm382, %v375, %v379
    %v384 = vand.u32 2147483647, %v373
    %vm385 = vcmp.eq.f32.partialorder %v384, 8.507059e+37
    %v386 = vand.u32 %v373, 2147483648
    %v387 = vor.u32 1.1754944e-38, %v386
    %v388 = vsel %vm385, %v387, %v383
    %v389 = vmul.f32 1.0, %v388
    %v390 = vrcp.pop %v374
    %v391 = vmul.f32 %v374, %v390
    %v392 = vsub.f32 1.0, %v391
    %v393 = vmul.f32 %v390, %v392
    %v394 = vadd.f32 %v390, %v393
    %vm395 = vweird.f32 %v374
    %vm396 = vweird.f32 %v390
    %vm397 = vmor %vm395, %vm396
    %v398 = vsel %vm397, %v390, %v394
    %v399 = vand.u32 2147483647, %v374
    %vm400 = vcmp.eq.f32.partialorder %v399, 8.507059e+37
    %v401 = vand.u32 %v374, 2147483648
    %v402 = vor.u32 1.1754944e-38, %v401
    %v403 = vsel %vm400, %v402, %v398
    %v404 = vmul.f32 1.0, %v403
    %v405 = vxor.u32 %v360, 2147483648
    %v406 = vxor.u32 %v364, 2147483648
    %v407 = vmul.f32 %v405, 1.442695
    %v408 = vpow.pop %v407
    %v409 = vmul.f32 %v406, 1.442695
    %v410 = vpow.pop %v409
    %v411 = vadd.f32 %v408, 1.0
    %v412 = vadd.f32 %v410, 1.0
    %v413 = vrcp.pop %v411
    %v414 = vmul.f32 %v411, %v413
    %v415 = vsub.f32 1.0, %v414
    %v416 = vmul.f32 %v413, %v415
    %v417 = vadd.f32 %v413, %v416
    %vm418 = vweird.f32 %v411
    %vm419 = vweird.f32 %v413
    %vm420 = vmor %vm418, %vm419
    %v421 = vsel %vm420, %v413, %v417
    %v422 = vand.u32 2147483647, %v411
    %vm423 = vcmp.eq.f32.partialorder %v422, 8.507059e+37
    %v424 = vand.u32 %v411, 2147483648
    %v425 = vor.u32 1.1754944e-38, %v424
    %v426 = vsel %vm423, %v425, %v421
    %v427 = vmul.f32 1.0, %v426
    %v428 = vrcp.pop %v412
    %v429 = vmul.f32 %v412, %v428
    %v430 = vsub.f32 1.0, %v429
    %v431 = vmul.f32 %v428, %v430
    %v432 = vadd.f32 %v428, %v431
    %vm433 = vweird.f32 %v412
    %vm434 = vweird.f32 %v428
    %vm435 = vmor %vm433, %vm434
    %v436 = vsel %vm435, %v428, %v432
    %v437 = vand.u32 2147483647, %v412
    %vm438 = vcmp.eq.f32.partialorder %v437, 8.507059e+37
    %v439 = vand.u32 %v412, 2147483648
    %v440 = vor.u32 1.1754944e-38, %v439
    %v441 = vsel %vm438, %v440, %v436
    %v442 = vmul.f32 1.0, %v441
    %v443 = vtanh.pop %v361
    %v444 = vtanh.pop %v365
    %v445 = vxor.u32 %v362, 2147483648
    %v446 = vxor.u32 %v366, 2147483648
    %v447 = vmul.f32 %v445, 1.442695
    %v448 = vpow.pop %v447
    %v449 = vmul.f32 %v446, 1.442695
    %v450 = vpow.pop %v449
    %v451 = vadd.f32 %v448, 1.0
    %v452 = vadd.f32 %v450, 1.0
    %v453 = vrcp.pop %v451
    %v454 = vmul.f32 %v451, %v453
    %v455 = vsub.f32 1.0, %v454
    %v456 = vmul.f32 %v453, %v455
    %v457 = vadd.f32 %v453, %v456
    %vm458 = vweird.f32 %v451
    %vm459 = vweird.f32 %v453
    %vm460 = vmor %vm458, %vm459
    %v461 = vsel %vm460, %v453, %v457
    %v462 = vand.u32 2147483647, %v451
    %vm463 = vcmp.eq.f32.partialorder %v462, 8.507059e+37
    %v464 = vand.u32 %v451, 2147483648
    %v465 = vor.u32 1.1754944e-38, %v464
    %v466 = vsel %vm463, %v465, %v461
    %v467 = vmul.f32 1.0, %v466
    %v468 = vrcp.pop %v452
    %v469 = vmul.f32 %v452, %v468
    %v470 = vsub.f32 1.0, %v469
    %v471 = vmul.f32 %v468, %v470
    %v472 = vadd.f32 %v468, %v471
    %vm473 = vweird.f32 %v452
    %vm474 = vweird.f32 %v468
    %vm475 = vmor %vm473, %vm474
    %v476 = vsel %vm475, %v468, %v472
    %v477 = vand.u32 2147483647, %v452
    %vm478 = vcmp.eq.f32.partialorder %v477, 8.507059e+37
    %v479 = vand.u32 %v452, 2147483648
    %v480 = vor.u32 1.1754944e-38, %v479
    %v481 = vsel %vm478, %v480, %v476
    %v482 = vmul.f32 1.0, %v481
    %v483 = vmul.f32 %v427, 0.0
    %v484 = vmul.f32 %v442, 0.0
    %v485 = vmul.f32 %v389, %v443
    %v486 = vmul.f32 %v404, %v444
    %v487 = vadd.f32 %v483, %v485
    %v488 = vadd.f32 %v484, %v486
    %v489 = vtanh.pop %v487
    %v490 = vtanh.pop %v488
    %v491 = vmul.f32 %v467, %v489
    %v492 = vmul.f32 %v482, %v490
    %v495 = vrot.slane %v492, 7
    %vm496 = vcmask 1041409
    %v497 = vsel %vm496, %v495, %v491
    %499 = vst [vmem:[#allocation2] sm:$0x3] %v497
    %500 = vmatpush.msra.mxu0 %v148
    %501 = vmatpush.msra.mxu0 %v144
    %502 = vmatpush.msra.mxu0 %v140
    %503 = vmatpush.msra.mxu0 %v136
    %504 = vmatpush.msra.mxu0 %v132
    %505 = vmatpush.msra.mxu0 %v128
    %506 = vmatpush.msra.mxu0 %v124
    %507 = vmatpush.msra.mxu0 %v120
    %508 = vmatpush.msra.mxu0 %v116
    %509 = vmatpush.msra.mxu0 %v112
    %510 = vmatpush.msra.mxu0 %v108
    %511 = vmatpush.msra.mxu0 %v104
    %512 = vmatpush.msra.mxu0 %v100
    %513 = vmatpush.msra.mxu0 %v96
    %514 = vmatpush.msra.mxu0 %v92
    %515 = vmatpush.msra.mxu0 %v88
    %516 = vmatmul.f32.gmra.mxu0 %v497
    %v517 = vpop.f32.mrf.mxu0
    %v518 = vadd.f32 0.0, %v517
    %519 = vdwg.mxu0
    %520 = vmatpush.msra.mxu0 %v149
    %521 = vmatpush.msra.mxu0 %v145
    %522 = vmatpush.msra.mxu0 %v141
    %523 = vmatpush.msra.mxu0 %v137
    %524 = vmatpush.msra.mxu0 %v133
    %525 = vmatpush.msra.mxu0 %v129
    %526 = vmatpush.msra.mxu0 %v125
    %527 = vmatpush.msra.mxu0 %v121
    %528 = vmatpush.msra.mxu0 %v117
    %529 = vmatpush.msra.mxu0 %v113
    %530 = vmatpush.msra.mxu0 %v109
    %531 = vmatpush.msra.mxu0 %v105
    %532 = vmatpush.msra.mxu0 %v101
    %533 = vmatpush.msra.mxu0 %v97
    %534 = vmatpush.msra.mxu0 %v93
    %535 = vmatpush.msra.mxu0 %v89
    %536 = vmatmul.f32.gmra.mxu0 %v497
    %v537 = vpop.f32.mrf.mxu0
    %v538 = vadd.f32 0.0, %v537
    %539 = vdwg.mxu0
    %540 = vmatpush.msra.mxu0 %v150
    %541 = vmatpush.msra.mxu0 %v146
    %542 = vmatpush.msra.mxu0 %v142
    %543 = vmatpush.msra.mxu0 %v138
    %544 = vmatpush.msra.mxu0 %v134
    %545 = vmatpush.msra.mxu0 %v130
    %546 = vmatpush.msra.mxu0 %v126
    %547 = vmatpush.msra.mxu0 %v122
    %548 = vmatpush.msra.mxu0 %v118
    %549 = vmatpush.msra.mxu0 %v114
    %550 = vmatpush.msra.mxu0 %v110
    %551 = vmatpush.msra.mxu0 %v106
    %552 = vmatpush.msra.mxu0 %v102
    %553 = vmatpush.msra.mxu0 %v98
    %554 = vmatpush.msra.mxu0 %v94
    %555 = vmatpush.msra.mxu0 %v90
    %556 = vmatmul.f32.gmra.mxu0 %v497
    %v557 = vpop.f32.mrf.mxu0
    %v558 = vadd.f32 0.0, %v557
    %559 = vdwg.mxu0
    %560 = vmatpush.msra.mxu0 %v151
    %561 = vmatpush.msra.mxu0 %v147
    %562 = vmatpush.msra.mxu0 %v143
    %563 = vmatpush.msra.mxu0 %v139
    %564 = vmatpush.msra.mxu0 %v135
    %565 = vmatpush.msra.mxu0 %v131
    %566 = vmatpush.msra.mxu0 %v127
    %567 = vmatpush.msra.mxu0 %v123
    %568 = vmatpush.msra.mxu0 %v119
    %569 = vmatpush.msra.mxu0 %v115
    %570 = vmatpush.msra.mxu0 %v111
    %571 = vmatpush.msra.mxu0 %v107
    %572 = vmatpush.msra.mxu0 %v103
    %573 = vmatpush.msra.mxu0 %v99
    %574 = vmatpush.msra.mxu0 %v95
    %575 = vmatpush.msra.mxu0 %v91
    %576 = vmatmul.f32.gmra.mxu0 %v497
    %v577 = vpop.f32.mrf.mxu0
    %v578 = vadd.f32 0.0, %v577
    %579 = vdwg.mxu0
    %v584 = vrot.slane %v518, 7
    %v585 = vrot.slane %v538, 7
    %v586 = vrot.slane %v558, 7
    %v587 = vrot.slane %v578, 7
    %v596 = vadd.f32 %v189, %v584
    %v597 = vadd.f32 %v212, %v585
    %v598 = vadd.f32 %v235, %v586
    %v599 = vadd.f32 %v258, %v587
    %v600 = vadd.f32 %v192, %v518
    %v601 = vadd.f32 %v215, %v538
    %v602 = vadd.f32 %v238, %v558
    %v603 = vadd.f32 %v261, %v578
    %v604 = vxor.u32 %v596, 2147483648
    %v605 = vxor.u32 %v600, 2147483648
    %v606 = vmul.f32 %v604, 1.442695
    %v607 = vpow.pop %v606
    %v608 = vmul.f32 %v605, 1.442695
    %v609 = vpow.pop %v608
    %v610 = vadd.f32 %v607, 1.0
    %v611 = vadd.f32 %v609, 1.0
    %v612 = vrcp.pop %v610
    %v613 = vmul.f32 %v610, %v612
    %v614 = vsub.f32 1.0, %v613
    %v615 = vmul.f32 %v612, %v614
    %v616 = vadd.f32 %v612, %v615
    %vm617 = vweird.f32 %v610
    %vm618 = vweird.f32 %v612
    %vm619 = vmor %vm617, %vm618
    %v620 = vsel %vm619, %v612, %v616
    %v621 = vand.u32 2147483647, %v610
    %vm622 = vcmp.eq.f32.partialorder %v621, 8.507059e+37
    %v623 = vand.u32 %v610, 2147483648
    %v624 = vor.u32 1.1754944e-38, %v623
    %v625 = vsel %vm622, %v624, %v620
    %v626 = vmul.f32 1.0, %v625
    %v627 = vrcp.pop %v611
    %v628 = vmul.f32 %v611, %v627
    %v629 = vsub.f32 1.0, %v628
    %v630 = vmul.f32 %v627, %v629
    %v631 = vadd.f32 %v627, %v630
    %vm632 = vweird.f32 %v611
    %vm633 = vweird.f32 %v627
    %vm634 = vmor %vm632, %vm633
    %v635 = vsel %vm634, %v627, %v631
    %v636 = vand.u32 2147483647, %v611
    %vm637 = vcmp.eq.f32.partialorder %v636, 8.507059e+37
    %v638 = vand.u32 %v611, 2147483648
    %v639 = vor.u32 1.1754944e-38, %v638
    %v640 = vsel %vm637, %v639, %v635
    %v641 = vmul.f32 1.0, %v640
    %v642 = vxor.u32 %v597, 2147483648
    %v643 = vxor.u32 %v601, 2147483648
    %v644 = vmul.f32 %v642, 1.442695
    %v645 = vpow.pop %v644
    %v646 = vmul.f32 %v643, 1.442695
    %v647 = vpow.pop %v646
    %v648 = vadd.f32 %v645, 1.0
    %v649 = vadd.f32 %v647, 1.0
    %v650 = vrcp.pop %v648
    %v651 = vmul.f32 %v648, %v650
    %v652 = vsub.f32 1.0, %v651
    %v653 = vmul.f32 %v650, %v652
    %v654 = vadd.f32 %v650, %v653
    %vm655 = vweird.f32 %v648
    %vm656 = vweird.f32 %v650
    %vm657 = vmor %vm655, %vm656
    %v658 = vsel %vm657, %v650, %v654
    %v659 = vand.u32 2147483647, %v648
    %vm660 = vcmp.eq.f32.partialorder %v659, 8.507059e+37
    %v661 = vand.u32 %v648, 2147483648
    %v662 = vor.u32 1.1754944e-38, %v661
    %v663 = vsel %vm660, %v662, %v658
    %v664 = vmul.f32 1.0, %v663
    %v665 = vrcp.pop %v649
    %v666 = vmul.f32 %v649, %v665
    %v667 = vsub.f32 1.0, %v666
    %v668 = vmul.f32 %v665, %v667
    %v669 = vadd.f32 %v665, %v668
    %vm670 = vweird.f32 %v649
    %vm671 = vweird.f32 %v665
    %vm672 = vmor %vm670, %vm671
    %v673 = vsel %vm672, %v665, %v669
    %v674 = vand.u32 2147483647, %v649
    %vm675 = vcmp.eq.f32.partialorder %v674, 8.507059e+37
    %v676 = vand.u32 %v649, 2147483648
    %v677 = vor.u32 1.1754944e-38, %v676
    %v678 = vsel %vm675, %v677, %v673
    %v679 = vmul.f32 1.0, %v678
    %v680 = vtanh.pop %v598
    %v681 = vtanh.pop %v602
    %v682 = vxor.u32 %v599, 2147483648
    %v683 = vxor.u32 %v603, 2147483648
    %v684 = vmul.f32 %v682, 1.442695
    %v685 = vpow.pop %v684
    %v686 = vmul.f32 %v683, 1.442695
    %v687 = vpow.pop %v686
    %v688 = vadd.f32 %v685, 1.0
    %v689 = vadd.f32 %v687, 1.0
    %v690 = vrcp.pop %v688
    %v691 = vmul.f32 %v688, %v690
    %v692 = vsub.f32 1.0, %v691
    %v693 = vmul.f32 %v690, %v692
    %v694 = vadd.f32 %v690, %v693
    %vm695 = vweird.f32 %v688
    %vm696 = vweird.f32 %v690
    %vm697 = vmor %vm695, %vm696
    %v698 = vsel %vm697, %v690, %v694
    %v699 = vand.u32 2147483647, %v688
    %vm700 = vcmp.eq.f32.partialorder %v699, 8.507059e+37
    %v701 = vand.u32 %v688, 2147483648
    %v702 = vor.u32 1.1754944e-38, %v701
    %v703 = vsel %vm700, %v702, %v698
    %v704 = vmul.f32 1.0, %v703
    %v705 = vrcp.pop %v689
    %v706 = vmul.f32 %v689, %v705
    %v707 = vsub.f32 1.0, %v706
    %v708 = vmul.f32 %v705, %v707
    %v709 = vadd.f32 %v705, %v708
    %vm710 = vweird.f32 %v689
    %vm711 = vweird.f32 %v705
    %vm712 = vmor %vm710, %vm711
    %v713 = vsel %vm712, %v705, %v709
    %v714 = vand.u32 2147483647, %v689
    %vm715 = vcmp.eq.f32.partialorder %v714, 8.507059e+37
    %v716 = vand.u32 %v689, 2147483648
    %v717 = vor.u32 1.1754944e-38, %v716
    %v718 = vsel %vm715, %v717, %v713
    %v719 = vmul.f32 1.0, %v718
    %v722 = vrot.slane %v487, 7
    %v723 = vrot.slane %v488, 7
    %v726 = vmul.f32 %v664, %v722
    %v727 = vmul.f32 %v679, %v723
    %v728 = vmul.f32 %v626, %v680
    %v729 = vmul.f32 %v641, %v681
    %v730 = vadd.f32 %v726, %v728
    %v731 = vadd.f32 %v727, %v729
    %v732 = vtanh.pop %v730
    %v733 = vtanh.pop %v731
    %v734 = vmul.f32 %v704, %v732
    %v735 = vmul.f32 %v719, %v733
    %v738 = vrot.slane %v735, 7
    %vm739 = vcmask 1042434
    %v740 = vsel %vm739, %v738, %v734
    %742 = vst [vmem:[#allocation2 + $0x1] sm:$0x6] %v740
    %v743 = vrot.slane %v734, 1
    %v744 = vsel %vm496, %v735, %v743
    %746 = vmatpush.msra.mxu0 %v148
    %747 = vmatpush.msra.mxu0 %v144
    %748 = vmatpush.msra.mxu0 %v140
    %749 = vmatpush.msra.mxu0 %v136
    %750 = vmatpush.msra.mxu0 %v132
    %751 = vmatpush.msra.mxu0 %v128
    %752 = vmatpush.msra.mxu0 %v124
    %753 = vmatpush.msra.mxu0 %v120
    %754 = vmatpush.msra.mxu0 %v116
    %755 = vmatpush.msra.mxu0 %v112
    %756 = vmatpush.msra.mxu0 %v108
    %757 = vmatpush.msra.mxu0 %v104
    %758 = vmatpush.msra.mxu0 %v100
    %759 = vmatpush.msra.mxu0 %v96
    %760 = vmatpush.msra.mxu0 %v92
    %761 = vmatpush.msra.mxu0 %v88
    %762 = vmatmul.f32.gmra.mxu0 %v744
    %v763 = vpop.f32.mrf.mxu0
    %v764 = vadd.f32 0.0, %v763
    %765 = vdwg.mxu0
    %766 = vmatpush.msra.mxu0 %v149
    %767 = vmatpush.msra.mxu0 %v145
    %768 = vmatpush.msra.mxu0 %v141
    %769 = vmatpush.msra.mxu0 %v137
    %770 = vmatpush.msra.mxu0 %v133
    %771 = vmatpush.msra.mxu0 %v129
    %772 = vmatpush.msra.mxu0 %v125
    %773 = vmatpush.msra.mxu0 %v121
    %774 = vmatpush.msra.mxu0 %v117
    %775 = vmatpush.msra.mxu0 %v113
    %776 = vmatpush.msra.mxu0 %v109
    %777 = vmatpush.msra.mxu0 %v105
    %778 = vmatpush.msra.mxu0 %v101
    %779 = vmatpush.msra.mxu0 %v97
    %780 = vmatpush.msra.mxu0 %v93
    %781 = vmatpush.msra.mxu0 %v89
    %782 = vmatmul.f32.gmra.mxu0 %v744
    %v783 = vpop.f32.mrf.mxu0
    %v784 = vadd.f32 0.0, %v783
    %785 = vdwg.mxu0
    %786 = vmatpush.msra.mxu0 %v150
    %787 = vmatpush.msra.mxu0 %v146
    %788 = vmatpush.msra.mxu0 %v142
    %789 = vmatpush.msra.mxu0 %v138
    %790 = vmatpush.msra.mxu0 %v134
    %791 = vmatpush.msra.mxu0 %v130
    %792 = vmatpush.msra.mxu0 %v126
    %793 = vmatpush.msra.mxu0 %v122
    %794 = vmatpush.msra.mxu0 %v118
    %795 = vmatpush.msra.mxu0 %v114
    %796 = vmatpush.msra.mxu0 %v110
    %797 = vmatpush.msra.mxu0 %v106
    %798 = vmatpush.msra.mxu0 %v102
    %799 = vmatpush.msra.mxu0 %v98
    %800 = vmatpush.msra.mxu0 %v94
    %801 = vmatpush.msra.mxu0 %v90
    %802 = vmatmul.f32.gmra.mxu0 %v744
    %v803 = vpop.f32.mrf.mxu0
    %v804 = vadd.f32 0.0, %v803
    %805 = vdwg.mxu0
    %806 = vmatpush.msra.mxu0 %v151
    %807 = vmatpush.msra.mxu0 %v147
    %808 = vmatpush.msra.mxu0 %v143
    %809 = vmatpush.msra.mxu0 %v139
    %810 = vmatpush.msra.mxu0 %v135
    %811 = vmatpush.msra.mxu0 %v131
    %812 = vmatpush.msra.mxu0 %v127
    %813 = vmatpush.msra.mxu0 %v123
    %814 = vmatpush.msra.mxu0 %v119
    %815 = vmatpush.msra.mxu0 %v115
    %816 = vmatpush.msra.mxu0 %v111
    %817 = vmatpush.msra.mxu0 %v107
    %818 = vmatpush.msra.mxu0 %v103
    %819 = vmatpush.msra.mxu0 %v99
    %820 = vmatpush.msra.mxu0 %v95
    %821 = vmatpush.msra.mxu0 %v91
    %822 = vmatmul.f32.gmra.mxu0 %v744
    %v823 = vpop.f32.mrf.mxu0
    %v824 = vadd.f32 0.0, %v823
    %825 = vdwg.mxu0
    %v830 = vrot.slane %v764, 6
    %v831 = vrot.slane %v784, 6
    %v832 = vrot.slane %v804, 6
    %v833 = vrot.slane %v824, 6
    %v834 = vrot.slane %v764, 7
    %v835 = vrot.slane %v784, 7
    %v836 = vrot.slane %v804, 7
    %v837 = vrot.slane %v824, 7
    %v846 = vadd.f32 %v189, %v830
    %v847 = vadd.f32 %v212, %v831
    %v848 = vadd.f32 %v235, %v832
    %v849 = vadd.f32 %v258, %v833
    %v850 = vadd.f32 %v192, %v834
    %v851 = vadd.f32 %v215, %v835
    %v852 = vadd.f32 %v238, %v836
    %v853 = vadd.f32 %v261, %v837
    %v854 = vxor.u32 %v846, 2147483648
    %v855 = vxor.u32 %v850, 2147483648
    %v856 = vmul.f32 %v854, 1.442695
    %v857 = vpow.pop %v856
    %v858 = vmul.f32 %v855, 1.442695
    %v859 = vpow.pop %v858
    %v860 = vadd.f32 %v857, 1.0
    %v861 = vadd.f32 %v859, 1.0
    %v862 = vrcp.pop %v860
    %v863 = vmul.f32 %v860, %v862
    %v864 = vsub.f32 1.0, %v863
    %v865 = vmul.f32 %v862, %v864
    %v866 = vadd.f32 %v862, %v865
    %vm867 = vweird.f32 %v860
    %vm868 = vweird.f32 %v862
    %vm869 = vmor %vm867, %vm868
    %v870 = vsel %vm869, %v862, %v866
    %v871 = vand.u32 2147483647, %v860
    %vm872 = vcmp.eq.f32.partialorder %v871, 8.507059e+37
    %v873 = vand.u32 %v860, 2147483648
    %v874 = vor.u32 1.1754944e-38, %v873
    %v875 = vsel %vm872, %v874, %v870
    %v876 = vmul.f32 1.0, %v875
    %v877 = vrcp.pop %v861
    %v878 = vmul.f32 %v861, %v877
    %v879 = vsub.f32 1.0, %v878
    %v880 = vmul.f32 %v877, %v879
    %v881 = vadd.f32 %v877, %v880
    %vm882 = vweird.f32 %v861
    %vm883 = vweird.f32 %v877
    %vm884 = vmor %vm882, %vm883
    %v885 = vsel %vm884, %v877, %v881
    %v886 = vand.u32 2147483647, %v861
    %vm887 = vcmp.eq.f32.partialorder %v886, 8.507059e+37
    %v888 = vand.u32 %v861, 2147483648
    %v889 = vor.u32 1.1754944e-38, %v888
    %v890 = vsel %vm887, %v889, %v885
    %v891 = vmul.f32 1.0, %v890
    %v892 = vxor.u32 %v847, 2147483648
    %v893 = vxor.u32 %v851, 2147483648
    %v894 = vmul.f32 %v892, 1.442695
    %v895 = vpow.pop %v894
    %v896 = vmul.f32 %v893, 1.442695
    %v897 = vpow.pop %v896
    %v898 = vadd.f32 %v895, 1.0
    %v899 = vadd.f32 %v897, 1.0
    %v900 = vrcp.pop %v898
    %v901 = vmul.f32 %v898, %v900
    %v902 = vsub.f32 1.0, %v901
    %v903 = vmul.f32 %v900, %v902
    %v904 = vadd.f32 %v900, %v903
    %vm905 = vweird.f32 %v898
    %vm906 = vweird.f32 %v900
    %vm907 = vmor %vm905, %vm906
    %v908 = vsel %vm907, %v900, %v904
    %v909 = vand.u32 2147483647, %v898
    %vm910 = vcmp.eq.f32.partialorder %v909, 8.507059e+37
    %v911 = vand.u32 %v898, 2147483648
    %v912 = vor.u32 1.1754944e-38, %v911
    %v913 = vsel %vm910, %v912, %v908
    %v914 = vmul.f32 1.0, %v913
    %v915 = vrcp.pop %v899
    %v916 = vmul.f32 %v899, %v915
    %v917 = vsub.f32 1.0, %v916
    %v918 = vmul.f32 %v915, %v917
    %v919 = vadd.f32 %v915, %v918
    %vm920 = vweird.f32 %v899
    %vm921 = vweird.f32 %v915
    %vm922 = vmor %vm920, %vm921
    %v923 = vsel %vm922, %v915, %v919
    %v924 = vand.u32 2147483647, %v899
    %vm925 = vcmp.eq.f32.partialorder %v924, 8.507059e+37
    %v926 = vand.u32 %v899, 2147483648
    %v927 = vor.u32 1.1754944e-38, %v926
    %v928 = vsel %vm925, %v927, %v923
    %v929 = vmul.f32 1.0, %v928
    %v930 = vtanh.pop %v848
    %v931 = vtanh.pop %v852
    %v932 = vxor.u32 %v849, 2147483648
    %v933 = vxor.u32 %v853, 2147483648
    %v934 = vmul.f32 %v932, 1.442695
    %v935 = vpow.pop %v934
    %v936 = vmul.f32 %v933, 1.442695
    %v937 = vpow.pop %v936
    %v938 = vadd.f32 %v935, 1.0
    %v939 = vadd.f32 %v937, 1.0
    %v940 = vrcp.pop %v938
    %v941 = vmul.f32 %v938, %v940
    %v942 = vsub.f32 1.0, %v941
    %v943 = vmul.f32 %v940, %v942
    %v944 = vadd.f32 %v940, %v943
    %vm945 = vweird.f32 %v938
    %vm946 = vweird.f32 %v940
    %vm947 = vmor %vm945, %vm946
    %v948 = vsel %vm947, %v940, %v944
    %v949 = vand.u32 2147483647, %v938
    %vm950 = vcmp.eq.f32.partialorder %v949, 8.507059e+37
    %v951 = vand.u32 %v938, 2147483648
    %v952 = vor.u32 1.1754944e-38, %v951
    %v953 = vsel %vm950, %v952, %v948
    %v954 = vmul.f32 1.0, %v953
    %v955 = vrcp.pop %v939
    %v956 = vmul.f32 %v939, %v955
    %v957 = vsub.f32 1.0, %v956
    %v958 = vmul.f32 %v955, %v957
    %v959 = vadd.f32 %v955, %v958
    %vm960 = vweird.f32 %v939
    %vm961 = vweird.f32 %v955
    %vm962 = vmor %vm960, %vm961
    %v963 = vsel %vm962, %v955, %v959
    %v964 = vand.u32 2147483647, %v939
    %vm965 = vcmp.eq.f32.partialorder %v964, 8.507059e+37
    %v966 = vand.u32 %v939, 2147483648
    %v967 = vor.u32 1.1754944e-38, %v966
    %v968 = vsel %vm965, %v967, %v963
    %v969 = vmul.f32 1.0, %v968
    %v972 = vrot.slane %v730, 7
    %v973 = vrot.slane %v731, 7
    %v976 = vmul.f32 %v914, %v972
    %v977 = vmul.f32 %v929, %v973
    %v978 = vmul.f32 %v876, %v930
    %v979 = vmul.f32 %v891, %v931
    %v980 = vadd.f32 %v976, %v978
    %v981 = vadd.f32 %v977, %v979
    %v982 = vtanh.pop %v980
    %v983 = vtanh.pop %v981
    %v984 = vmul.f32 %v954, %v982
    %v985 = vmul.f32 %v969, %v983
    %v988 = vrot.slane %v985, 7
    %vm989 = vcmask 1043459
    %v990 = vsel %vm989, %v988, %v984
    %992 = vst [vmem:[#allocation2 + $0x2] sm:$0xc] %v990
    %v993 = vrot.slane %v984, 2
    %v994 = vrot.slane %v985, 1
    %v995 = vsel %vm496, %v994, %v993
    %997 = vmatpush.msra.mxu0 %v148
    %998 = vmatpush.msra.mxu0 %v144
    %999 = vmatpush.msra.mxu0 %v140
    %1000 = vmatpush.msra.mxu0 %v136
    %1001 = vmatpush.msra.mxu0 %v132
    %1002 = vmatpush.msra.mxu0 %v128
    %1003 = vmatpush.msra.mxu0 %v124
    %1004 = vmatpush.msra.mxu0 %v120
    %1005 = vmatpush.msra.mxu0 %v116
    %1006 = vmatpush.msra.mxu0 %v112
    %1007 = vmatpush.msra.mxu0 %v108
    %1008 = vmatpush.msra.mxu0 %v104
    %1009 = vmatpush.msra.mxu0 %v100
    %1010 = vmatpush.msra.mxu0 %v96
    %1011 = vmatpush.msra.mxu0 %v92
    %1012 = vmatpush.msra.mxu0 %v88
    %1013 = vmatmul.f32.gmra.mxu0 %v995
    %v1014 = vpop.f32.mrf.mxu0
    %v1015 = vadd.f32 0.0, %v1014
    %1016 = vdwg.mxu0
    %1017 = vmatpush.msra.mxu0 %v149
    %1018 = vmatpush.msra.mxu0 %v145
    %1019 = vmatpush.msra.mxu0 %v141
    %1020 = vmatpush.msra.mxu0 %v137
    %1021 = vmatpush.msra.mxu0 %v133
    %1022 = vmatpush.msra.mxu0 %v129
    %1023 = vmatpush.msra.mxu0 %v125
    %1024 = vmatpush.msra.mxu0 %v121
    %1025 = vmatpush.msra.mxu0 %v117
    %1026 = vmatpush.msra.mxu0 %v113
    %1027 = vmatpush.msra.mxu0 %v109
    %1028 = vmatpush.msra.mxu0 %v105
    %1029 = vmatpush.msra.mxu0 %v101
    %1030 = vmatpush.msra.mxu0 %v97
    %1031 = vmatpush.msra.mxu0 %v93
    %1032 = vmatpush.msra.mxu0 %v89
    %1033 = vmatmul.f32.gmra.mxu0 %v995
    %v1034 = vpop.f32.mrf.mxu0
    %v1035 = vadd.f32 0.0, %v1034
    %1036 = vdwg.mxu0
    %1037 = vmatpush.msra.mxu0 %v150
    %1038 = vmatpush.msra.mxu0 %v146
    %1039 = vmatpush.msra.mxu0 %v142
    %1040 = vmatpush.msra.mxu0 %v138
    %1041 = vmatpush.msra.mxu0 %v134
    %1042 = vmatpush.msra.mxu0 %v130
    %1043 = vmatpush.msra.mxu0 %v126
    %1044 = vmatpush.msra.mxu0 %v122
    %1045 = vmatpush.msra.mxu0 %v118
    %1046 = vmatpush.msra.mxu0 %v114
    %1047 = vmatpush.msra.mxu0 %v110
    %1048 = vmatpush.msra.mxu0 %v106
    %1049 = vmatpush.msra.mxu0 %v102
    %1050 = vmatpush.msra.mxu0 %v98
    %1051 = vmatpush.msra.mxu0 %v94
    %1052 = vmatpush.msra.mxu0 %v90
    %1053 = vmatmul.f32.gmra.mxu0 %v995
    %v1054 = vpop.f32.mrf.mxu0
    %v1055 = vadd.f32 0.0, %v1054
    %1056 = vdwg.mxu0
    %1057 = vmatpush.msra.mxu0 %v151
    %1058 = vmatpush.msra.mxu0 %v147
    %1059 = vmatpush.msra.mxu0 %v143
    %1060 = vmatpush.msra.mxu0 %v139
    %1061 = vmatpush.msra.mxu0 %v135
    %1062 = vmatpush.msra.mxu0 %v131
    %1063 = vmatpush.msra.mxu0 %v127
    %1064 = vmatpush.msra.mxu0 %v123
    %1065 = vmatpush.msra.mxu0 %v119
    %1066 = vmatpush.msra.mxu0 %v115
    %1067 = vmatpush.msra.mxu0 %v111
    %1068 = vmatpush.msra.mxu0 %v107
    %1069 = vmatpush.msra.mxu0 %v103
    %1070 = vmatpush.msra.mxu0 %v99
    %1071 = vmatpush.msra.mxu0 %v95
    %1072 = vmatpush.msra.mxu0 %v91
    %1073 = vmatmul.f32.gmra.mxu0 %v995
    %v1074 = vpop.f32.mrf.mxu0
    %v1075 = vadd.f32 0.0, %v1074
    %1076 = vdwg.mxu0
    %v1081 = vrot.slane %v1015, 5
    %v1082 = vrot.slane %v1035, 5
    %v1083 = vrot.slane %v1055, 5
    %v1084 = vrot.slane %v1075, 5
    %v1085 = vrot.slane %v1015, 6
    %v1086 = vrot.slane %v1035, 6
    %v1087 = vrot.slane %v1055, 6
    %v1088 = vrot.slane %v1075, 6
    %v1097 = vadd.f32 %v189, %v1081
    %v1098 = vadd.f32 %v212, %v1082
    %v1099 = vadd.f32 %v235, %v1083
    %v1100 = vadd.f32 %v258, %v1084
    %v1101 = vadd.f32 %v192, %v1085
    %v1102 = vadd.f32 %v215, %v1086
    %v1103 = vadd.f32 %v238, %v1087
    %v1104 = vadd.f32 %v261, %v1088
    %v1105 = vxor.u32 %v1097, 2147483648
    %v1106 = vxor.u32 %v1101, 2147483648
    %v1107 = vmul.f32 %v1105, 1.442695
    %v1108 = vpow.pop %v1107
    %v1109 = vmul.f32 %v1106, 1.442695
    %v1110 = vpow.pop %v1109
    %v1111 = vadd.f32 %v1108, 1.0
    %v1112 = vadd.f32 %v1110, 1.0
    %v1113 = vrcp.pop %v1111
    %v1114 = vmul.f32 %v1111, %v1113
    %v1115 = vsub.f32 1.0, %v1114
    %v1116 = vmul.f32 %v1113, %v1115
    %v1117 = vadd.f32 %v1113, %v1116
    %vm1118 = vweird.f32 %v1111
    %vm1119 = vweird.f32 %v1113
    %vm1120 = vmor %vm1118, %vm1119
    %v1121 = vsel %vm1120, %v1113, %v1117
    %v1122 = vand.u32 2147483647, %v1111
    %vm1123 = vcmp.eq.f32.partialorder %v1122, 8.507059e+37
    %v1124 = vand.u32 %v1111, 2147483648
    %v1125 = vor.u32 1.1754944e-38, %v1124
    %v1126 = vsel %vm1123, %v1125, %v1121
    %v1127 = vmul.f32 1.0, %v1126
    %v1128 = vrcp.pop %v1112
    %v1129 = vmul.f32 %v1112, %v1128
    %v1130 = vsub.f32 1.0, %v1129
    %v1131 = vmul.f32 %v1128, %v1130
    %v1132 = vadd.f32 %v1128, %v1131
    %vm1133 = vweird.f32 %v1112
    %vm1134 = vweird.f32 %v1128
    %vm1135 = vmor %vm1133, %vm1134
    %v1136 = vsel %vm1135, %v1128, %v1132
    %v1137 = vand.u32 2147483647, %v1112
    %vm1138 = vcmp.eq.f32.partialorder %v1137, 8.507059e+37
    %v1139 = vand.u32 %v1112, 2147483648
    %v1140 = vor.u32 1.1754944e-38, %v1139
    %v1141 = vsel %vm1138, %v1140, %v1136
    %v1142 = vmul.f32 1.0, %v1141
    %v1143 = vxor.u32 %v1098, 2147483648
    %v1144 = vxor.u32 %v1102, 2147483648
    %v1145 = vmul.f32 %v1143, 1.442695
    %v1146 = vpow.pop %v1145
    %v1147 = vmul.f32 %v1144, 1.442695
    %v1148 = vpow.pop %v1147
    %v1149 = vadd.f32 %v1146, 1.0
    %v1150 = vadd.f32 %v1148, 1.0
    %v1151 = vrcp.pop %v1149
    %v1152 = vmul.f32 %v1149, %v1151
    %v1153 = vsub.f32 1.0, %v1152
    %v1154 = vmul.f32 %v1151, %v1153
    %v1155 = vadd.f32 %v1151, %v1154
    %vm1156 = vweird.f32 %v1149
    %vm1157 = vweird.f32 %v1151
    %vm1158 = vmor %vm1156, %vm1157
    %v1159 = vsel %vm1158, %v1151, %v1155
    %v1160 = vand.u32 2147483647, %v1149
    %vm1161 = vcmp.eq.f32.partialorder %v1160, 8.507059e+37
    %v1162 = vand.u32 %v1149, 2147483648
    %v1163 = vor.u32 1.1754944e-38, %v1162
    %v1164 = vsel %vm1161, %v1163, %v1159
    %v1165 = vmul.f32 1.0, %v1164
    %v1166 = vrcp.pop %v1150
    %v1167 = vmul.f32 %v1150, %v1166
    %v1168 = vsub.f32 1.0, %v1167
    %v1169 = vmul.f32 %v1166, %v1168
    %v1170 = vadd.f32 %v1166, %v1169
    %vm1171 = vweird.f32 %v1150
    %vm1172 = vweird.f32 %v1166
    %vm1173 = vmor %vm1171, %vm1172
    %v1174 = vsel %vm1173, %v1166, %v1170
    %v1175 = vand.u32 2147483647, %v1150
    %vm1176 = vcmp.eq.f32.partialorder %v1175, 8.507059e+37
    %v1177 = vand.u32 %v1150, 2147483648
    %v1178 = vor.u32 1.1754944e-38, %v1177
    %v1179 = vsel %vm1176, %v1178, %v1174
    %v1180 = vmul.f32 1.0, %v1179
    %v1181 = vtanh.pop %v1099
    %v1182 = vtanh.pop %v1103
    %v1183 = vxor.u32 %v1100, 2147483648
    %v1184 = vxor.u32 %v1104, 2147483648
    %v1185 = vmul.f32 %v1183, 1.442695
    %v1186 = vpow.pop %v1185
    %v1187 = vmul.f32 %v1184, 1.442695
    %v1188 = vpow.pop %v1187
    %v1189 = vadd.f32 %v1186, 1.0
    %v1190 = vadd.f32 %v1188, 1.0
    %v1191 = vrcp.pop %v1189
    %v1192 = vmul.f32 %v1189, %v1191
    %v1193 = vsub.f32 1.0, %v1192
    %v1194 = vmul.f32 %v1191, %v1193
    %v1195 = vadd.f32 %v1191, %v1194
    %vm1196 = vweird.f32 %v1189
    %vm1197 = vweird.f32 %v1191
    %vm1198 = vmor %vm1196, %vm1197
    %v1199 = vsel %vm1198, %v1191, %v1195
    %v1200 = vand.u32 2147483647, %v1189
    %vm1201 = vcmp.eq.f32.partialorder %v1200, 8.507059e+37
    %v1202 = vand.u32 %v1189, 2147483648
    %v1203 = vor.u32 1.1754944e-38, %v1202
    %v1204 = vsel %vm1201, %v1203, %v1199
    %v1205 = vmul.f32 1.0, %v1204
    %v1206 = vrcp.pop %v1190
    %v1207 = vmul.f32 %v1190, %v1206
    %v1208 = vsub.f32 1.0, %v1207
    %v1209 = vmul.f32 %v1206, %v1208
    %v1210 = vadd.f32 %v1206, %v1209
    %vm1211 = vweird.f32 %v1190
    %vm1212 = vweird.f32 %v1206
    %vm1213 = vmor %vm1211, %vm1212
    %v1214 = vsel %vm1213, %v1206, %v1210
    %v1215 = vand.u32 2147483647, %v1190
    %vm1216 = vcmp.eq.f32.partialorder %v1215, 8.507059e+37
    %v1217 = vand.u32 %v1190, 2147483648
    %v1218 = vor.u32 1.1754944e-38, %v1217
    %v1219 = vsel %vm1216, %v1218, %v1214
    %v1220 = vmul.f32 1.0, %v1219
    %v1223 = vrot.slane %v980, 7
    %v1224 = vrot.slane %v981, 7
    %v1227 = vmul.f32 %v1165, %v1223
    %v1228 = vmul.f32 %v1180, %v1224
    %v1229 = vmul.f32 %v1127, %v1181
    %v1230 = vmul.f32 %v1142, %v1182
    %v1231 = vadd.f32 %v1227, %v1229
    %v1232 = vadd.f32 %v1228, %v1230
    %v1233 = vtanh.pop %v1231
    %v1234 = vtanh.pop %v1232
    %v1235 = vmul.f32 %v1205, %v1233
    %v1236 = vmul.f32 %v1220, %v1234
    %v1239 = vrot.slane %v1236, 7
    %vm1240 = vcmask 1044484
    %v1241 = vsel %vm1240, %v1239, %v1235
    %1243 = vst [vmem:[#allocation2 + $0x3] sm:$0x18] %v1241
    %v1244 = vrot.slane %v1235, 3
    %v1245 = vrot.slane %v1236, 2
    %v1246 = vsel %vm496, %v1245, %v1244
    %1248 = vmatpush.msra.mxu0 %v148
    %1249 = vmatpush.msra.mxu0 %v144
    %1250 = vmatpush.msra.mxu0 %v140
    %1251 = vmatpush.msra.mxu0 %v136
    %1252 = vmatpush.msra.mxu0 %v132
    %1253 = vmatpush.msra.mxu0 %v128
    %1254 = vmatpush.msra.mxu0 %v124
    %1255 = vmatpush.msra.mxu0 %v120
    %1256 = vmatpush.msra.mxu0 %v116
    %1257 = vmatpush.msra.mxu0 %v112
    %1258 = vmatpush.msra.mxu0 %v108
    %1259 = vmatpush.msra.mxu0 %v104
    %1260 = vmatpush.msra.mxu0 %v100
    %1261 = vmatpush.msra.mxu0 %v96
    %1262 = vmatpush.msra.mxu0 %v92
    %1263 = vmatpush.msra.mxu0 %v88
    %1264 = vmatmul.f32.gmra.mxu0 %v1246
    %v1265 = vpop.f32.mrf.mxu0
    %v1266 = vadd.f32 0.0, %v1265
    %1267 = vdwg.mxu0
    %1268 = vmatpush.msra.mxu0 %v149
    %1269 = vmatpush.msra.mxu0 %v145
    %1270 = vmatpush.msra.mxu0 %v141
    %1271 = vmatpush.msra.mxu0 %v137
    %1272 = vmatpush.msra.mxu0 %v133
    %1273 = vmatpush.msra.mxu0 %v129
    %1274 = vmatpush.msra.mxu0 %v125
    %1275 = vmatpush.msra.mxu0 %v121
    %1276 = vmatpush.msra.mxu0 %v117
    %1277 = vmatpush.msra.mxu0 %v113
    %1278 = vmatpush.msra.mxu0 %v109
    %1279 = vmatpush.msra.mxu0 %v105
    %1280 = vmatpush.msra.mxu0 %v101
    %1281 = vmatpush.msra.mxu0 %v97
    %1282 = vmatpush.msra.mxu0 %v93
    %1283 = vmatpush.msra.mxu0 %v89
    %1284 = vmatmul.f32.gmra.mxu0 %v1246
    %v1285 = vpop.f32.mrf.mxu0
    %v1286 = vadd.f32 0.0, %v1285
    %1287 = vdwg.mxu0
    %1288 = vmatpush.msra.mxu0 %v150
    %1289 = vmatpush.msra.mxu0 %v146
    %1290 = vmatpush.msra.mxu0 %v142
    %1291 = vmatpush.msra.mxu0 %v138
    %1292 = vmatpush.msra.mxu0 %v134
    %1293 = vmatpush.msra.mxu0 %v130
    %1294 = vmatpush.msra.mxu0 %v126
    %1295 = vmatpush.msra.mxu0 %v122
    %1296 = vmatpush.msra.mxu0 %v118
    %1297 = vmatpush.msra.mxu0 %v114
    %1298 = vmatpush.msra.mxu0 %v110
    %1299 = vmatpush.msra.mxu0 %v106
    %1300 = vmatpush.msra.mxu0 %v102
    %1301 = vmatpush.msra.mxu0 %v98
    %1302 = vmatpush.msra.mxu0 %v94
    %1303 = vmatpush.msra.mxu0 %v90
    %1304 = vmatmul.f32.gmra.mxu0 %v1246
    %v1305 = vpop.f32.mrf.mxu0
    %v1306 = vadd.f32 0.0, %v1305
    %1307 = vdwg.mxu0
    %1308 = vmatpush.msra.mxu0 %v151
    %1309 = vmatpush.msra.mxu0 %v147
    %1310 = vmatpush.msra.mxu0 %v143
    %1311 = vmatpush.msra.mxu0 %v139
    %1312 = vmatpush.msra.mxu0 %v135
    %1313 = vmatpush.msra.mxu0 %v131
    %1314 = vmatpush.msra.mxu0 %v127
    %1315 = vmatpush.msra.mxu0 %v123
    %1316 = vmatpush.msra.mxu0 %v119
    %1317 = vmatpush.msra.mxu0 %v115
    %1318 = vmatpush.msra.mxu0 %v111
    %1319 = vmatpush.msra.mxu0 %v107
    %1320 = vmatpush.msra.mxu0 %v103
    %1321 = vmatpush.msra.mxu0 %v99
    %1322 = vmatpush.msra.mxu0 %v95
    %1323 = vmatpush.msra.mxu0 %v91
    %1324 = vmatmul.f32.gmra.mxu0 %v1246
    %v1325 = vpop.f32.mrf.mxu0
    %v1326 = vadd.f32 0.0, %v1325
    %1327 = vdwg.mxu0
    %v1332 = vrot.slane %v1266, 4
    %v1333 = vrot.slane %v1286, 4
    %v1334 = vrot.slane %v1306, 4
    %v1335 = vrot.slane %v1326, 4
    %v1336 = vrot.slane %v1266, 5
    %v1337 = vrot.slane %v1286, 5
    %v1338 = vrot.slane %v1306, 5
    %v1339 = vrot.slane %v1326, 5
    %v1348 = vadd.f32 %v189, %v1332
    %v1349 = vadd.f32 %v212, %v1333
    %v1350 = vadd.f32 %v235, %v1334
    %v1351 = vadd.f32 %v258, %v1335
    %v1352 = vadd.f32 %v192, %v1336
    %v1353 = vadd.f32 %v215, %v1337
    %v1354 = vadd.f32 %v238, %v1338
    %v1355 = vadd.f32 %v261, %v1339
    %v1356 = vxor.u32 %v1348, 2147483648
    %v1357 = vxor.u32 %v1352, 2147483648
    %v1358 = vmul.f32 %v1356, 1.442695
    %v1359 = vpow.pop %v1358
    %v1360 = vmul.f32 %v1357, 1.442695
    %v1361 = vpow.pop %v1360
    %v1362 = vadd.f32 %v1359, 1.0
    %v1363 = vadd.f32 %v1361, 1.0
    %v1364 = vrcp.pop %v1362
    %v1365 = vmul.f32 %v1362, %v1364
    %v1366 = vsub.f32 1.0, %v1365
    %v1367 = vmul.f32 %v1364, %v1366
    %v1368 = vadd.f32 %v1364, %v1367
    %vm1369 = vweird.f32 %v1362
    %vm1370 = vweird.f32 %v1364
    %vm1371 = vmor %vm1369, %vm1370
    %v1372 = vsel %vm1371, %v1364, %v1368
    %v1373 = vand.u32 2147483647, %v1362
    %vm1374 = vcmp.eq.f32.partialorder %v1373, 8.507059e+37
    %v1375 = vand.u32 %v1362, 2147483648
    %v1376 = vor.u32 1.1754944e-38, %v1375
    %v1377 = vsel %vm1374, %v1376, %v1372
    %v1378 = vmul.f32 1.0, %v1377
    %v1379 = vrcp.pop %v1363
    %v1380 = vmul.f32 %v1363, %v1379
    %v1381 = vsub.f32 1.0, %v1380
    %v1382 = vmul.f32 %v1379, %v1381
    %v1383 = vadd.f32 %v1379, %v1382
    %vm1384 = vweird.f32 %v1363
    %vm1385 = vweird.f32 %v1379
    %vm1386 = vmor %vm1384, %vm1385
    %v1387 = vsel %vm1386, %v1379, %v1383
    %v1388 = vand.u32 2147483647, %v1363
    %vm1389 = vcmp.eq.f32.partialorder %v1388, 8.507059e+37
    %v1390 = vand.u32 %v1363, 2147483648
    %v1391 = vor.u32 1.1754944e-38, %v1390
    %v1392 = vsel %vm1389, %v1391, %v1387
    %v1393 = vmul.f32 1.0, %v1392
    %v1394 = vxor.u32 %v1349, 2147483648
    %v1395 = vxor.u32 %v1353, 2147483648
    %v1396 = vmul.f32 %v1394, 1.442695
    %v1397 = vpow.pop %v1396
    %v1398 = vmul.f32 %v1395, 1.442695
    %v1399 = vpow.pop %v1398
    %v1400 = vadd.f32 %v1397, 1.0
    %v1401 = vadd.f32 %v1399, 1.0
    %v1402 = vrcp.pop %v1400
    %v1403 = vmul.f32 %v1400, %v1402
    %v1404 = vsub.f32 1.0, %v1403
    %v1405 = vmul.f32 %v1402, %v1404
    %v1406 = vadd.f32 %v1402, %v1405
    %vm1407 = vweird.f32 %v1400
    %vm1408 = vweird.f32 %v1402
    %vm1409 = vmor %vm1407, %vm1408
    %v1410 = vsel %vm1409, %v1402, %v1406
    %v1411 = vand.u32 2147483647, %v1400
    %vm1412 = vcmp.eq.f32.partialorder %v1411, 8.507059e+37
    %v1413 = vand.u32 %v1400, 2147483648
    %v1414 = vor.u32 1.1754944e-38, %v1413
    %v1415 = vsel %vm1412, %v1414, %v1410
    %v1416 = vmul.f32 1.0, %v1415
    %v1417 = vrcp.pop %v1401
    %v1418 = vmul.f32 %v1401, %v1417
    %v1419 = vsub.f32 1.0, %v1418
    %v1420 = vmul.f32 %v1417, %v1419
    %v1421 = vadd.f32 %v1417, %v1420
    %vm1422 = vweird.f32 %v1401
    %vm1423 = vweird.f32 %v1417
    %vm1424 = vmor %vm1422, %vm1423
    %v1425 = vsel %vm1424, %v1417, %v1421
    %v1426 = vand.u32 2147483647, %v1401
    %vm1427 = vcmp.eq.f32.partialorder %v1426, 8.507059e+37
    %v1428 = vand.u32 %v1401, 2147483648
    %v1429 = vor.u32 1.1754944e-38, %v1428
    %v1430 = vsel %vm1427, %v1429, %v1425
    %v1431 = vmul.f32 1.0, %v1430
    %v1432 = vtanh.pop %v1350
    %v1433 = vtanh.pop %v1354
    %v1434 = vxor.u32 %v1351, 2147483648
    %v1435 = vxor.u32 %v1355, 2147483648
    %v1436 = vmul.f32 %v1434, 1.442695
    %v1437 = vpow.pop %v1436
    %v1438 = vmul.f32 %v1435, 1.442695
    %v1439 = vpow.pop %v1438
    %v1440 = vadd.f32 %v1437, 1.0
    %v1441 = vadd.f32 %v1439, 1.0
    %v1442 = vrcp.pop %v1440
    %v1443 = vmul.f32 %v1440, %v1442
    %v1444 = vsub.f32 1.0, %v1443
    %v1445 = vmul.f32 %v1442, %v1444
    %v1446 = vadd.f32 %v1442, %v1445
    %vm1447 = vweird.f32 %v1440
    %vm1448 = vweird.f32 %v1442
    %vm1449 = vmor %vm1447, %vm1448
    %v1450 = vsel %vm1449, %v1442, %v1446
    %v1451 = vand.u32 2147483647, %v1440
    %vm1452 = vcmp.eq.f32.partialorder %v1451, 8.507059e+37
    %v1453 = vand.u32 %v1440, 2147483648
    %v1454 = vor.u32 1.1754944e-38, %v1453
    %v1455 = vsel %vm1452, %v1454, %v1450
    %v1456 = vmul.f32 1.0, %v1455
    %v1457 = vrcp.pop %v1441
    %v1458 = vmul.f32 %v1441, %v1457
    %v1459 = vsub.f32 1.0, %v1458
    %v1460 = vmul.f32 %v1457, %v1459
    %v1461 = vadd.f32 %v1457, %v1460
    %vm1462 = vweird.f32 %v1441
    %vm1463 = vweird.f32 %v1457
    %vm1464 = vmor %vm1462, %vm1463
    %v1465 = vsel %vm1464, %v1457, %v1461
    %v1466 = vand.u32 2147483647, %v1441
    %vm1467 = vcmp.eq.f32.partialorder %v1466, 8.507059e+37
    %v1468 = vand.u32 %v1441, 2147483648
    %v1469 = vor.u32 1.1754944e-38, %v1468
    %v1470 = vsel %vm1467, %v1469, %v1465
    %v1471 = vmul.f32 1.0, %v1470
    %v1474 = vrot.slane %v1231, 7
    %v1475 = vrot.slane %v1232, 7
    %v1478 = vmul.f32 %v1416, %v1474
    %v1479 = vmul.f32 %v1431, %v1475
    %v1480 = vmul.f32 %v1378, %v1432
    %v1481 = vmul.f32 %v1393, %v1433
    %v1482 = vadd.f32 %v1478, %v1480
    %v1483 = vadd.f32 %v1479, %v1481
    %v1484 = vtanh.pop %v1482
    %v1485 = vtanh.pop %v1483
    %v1486 = vmul.f32 %v1456, %v1484
    %v1487 = vmul.f32 %v1471, %v1485
    %v1490 = vrot.slane %v1487, 7
    %vm1491 = vcmask 1045509
    %v1492 = vsel %vm1491, %v1490, %v1486
    %1494 = vst [vmem:[#allocation2 + $0x4] sm:$0x30] %v1492
    %v1495 = vrot.slane %v1486, 4
    %v1496 = vrot.slane %v1487, 3
    %v1497 = vsel %vm496, %v1496, %v1495
    %1499 = vmatpush.msra.mxu0 %v148
    %1500 = vmatpush.msra.mxu0 %v144
    %1501 = vmatpush.msra.mxu0 %v140
    %1502 = vmatpush.msra.mxu0 %v136
    %1503 = vmatpush.msra.mxu0 %v132
    %1504 = vmatpush.msra.mxu0 %v128
    %1505 = vmatpush.msra.mxu0 %v124
    %1506 = vmatpush.msra.mxu0 %v120
    %1507 = vmatpush.msra.mxu0 %v116
    %1508 = vmatpush.msra.mxu0 %v112
    %1509 = vmatpush.msra.mxu0 %v108
    %1510 = vmatpush.msra.mxu0 %v104
    %1511 = vmatpush.msra.mxu0 %v100
    %1512 = vmatpush.msra.mxu0 %v96
    %1513 = vmatpush.msra.mxu0 %v92
    %1514 = vmatpush.msra.mxu0 %v88
    %1515 = vmatmul.f32.gmra.mxu0 %v1497
    %v1516 = vpop.f32.mrf.mxu0
    %v1517 = vadd.f32 0.0, %v1516
    %1518 = vdwg.mxu0
    %1519 = vmatpush.msra.mxu0 %v149
    %1520 = vmatpush.msra.mxu0 %v145
    %1521 = vmatpush.msra.mxu0 %v141
    %1522 = vmatpush.msra.mxu0 %v137
    %1523 = vmatpush.msra.mxu0 %v133
    %1524 = vmatpush.msra.mxu0 %v129
    %1525 = vmatpush.msra.mxu0 %v125
    %1526 = vmatpush.msra.mxu0 %v121
    %1527 = vmatpush.msra.mxu0 %v117
    %1528 = vmatpush.msra.mxu0 %v113
    %1529 = vmatpush.msra.mxu0 %v109
    %1530 = vmatpush.msra.mxu0 %v105
    %1531 = vmatpush.msra.mxu0 %v101
    %1532 = vmatpush.msra.mxu0 %v97
    %1533 = vmatpush.msra.mxu0 %v93
    %1534 = vmatpush.msra.mxu0 %v89
    %1535 = vmatmul.f32.gmra.mxu0 %v1497
    %v1536 = vpop.f32.mrf.mxu0
    %v1537 = vadd.f32 0.0, %v1536
    %1538 = vdwg.mxu0
    %1539 = vmatpush.msra.mxu0 %v150
    %1540 = vmatpush.msra.mxu0 %v146
    %1541 = vmatpush.msra.mxu0 %v142
    %1542 = vmatpush.msra.mxu0 %v138
    %1543 = vmatpush.msra.mxu0 %v134
    %1544 = vmatpush.msra.mxu0 %v130
    %1545 = vmatpush.msra.mxu0 %v126
    %1546 = vmatpush.msra.mxu0 %v122
    %1547 = vmatpush.msra.mxu0 %v118
    %1548 = vmatpush.msra.mxu0 %v114
    %1549 = vmatpush.msra.mxu0 %v110
    %1550 = vmatpush.msra.mxu0 %v106
    %1551 = vmatpush.msra.mxu0 %v102
    %1552 = vmatpush.msra.mxu0 %v98
    %1553 = vmatpush.msra.mxu0 %v94
    %1554 = vmatpush.msra.mxu0 %v90
    %1555 = vmatmul.f32.gmra.mxu0 %v1497
    %v1556 = vpop.f32.mrf.mxu0
    %v1557 = vadd.f32 0.0, %v1556
    %1558 = vdwg.mxu0
    %1559 = vmatpush.msra.mxu0 %v151
    %1560 = vmatpush.msra.mxu0 %v147
    %1561 = vmatpush.msra.mxu0 %v143
    %1562 = vmatpush.msra.mxu0 %v139
    %1563 = vmatpush.msra.mxu0 %v135
    %1564 = vmatpush.msra.mxu0 %v131
    %1565 = vmatpush.msra.mxu0 %v127
    %1566 = vmatpush.msra.mxu0 %v123
    %1567 = vmatpush.msra.mxu0 %v119
    %1568 = vmatpush.msra.mxu0 %v115
    %1569 = vmatpush.msra.mxu0 %v111
    %1570 = vmatpush.msra.mxu0 %v107
    %1571 = vmatpush.msra.mxu0 %v103
    %1572 = vmatpush.msra.mxu0 %v99
    %1573 = vmatpush.msra.mxu0 %v95
    %1574 = vmatpush.msra.mxu0 %v91
    %1575 = vmatmul.f32.gmra.mxu0 %v1497
    %v1576 = vpop.f32.mrf.mxu0
    %v1577 = vadd.f32 0.0, %v1576
    %1578 = vdwg.mxu0
    %v1583 = vrot.slane %v1517, 3
    %v1584 = vrot.slane %v1537, 3
    %v1585 = vrot.slane %v1557, 3
    %v1586 = vrot.slane %v1577, 3
    %v1587 = vrot.slane %v1517, 4
    %v1588 = vrot.slane %v1537, 4
    %v1589 = vrot.slane %v1557, 4
    %v1590 = vrot.slane %v1577, 4
    %v1599 = vadd.f32 %v189, %v1583
    %v1600 = vadd.f32 %v212, %v1584
    %v1601 = vadd.f32 %v235, %v1585
    %v1602 = vadd.f32 %v258, %v1586
    %v1603 = vadd.f32 %v192, %v1587
    %v1604 = vadd.f32 %v215, %v1588
    %v1605 = vadd.f32 %v238, %v1589
    %v1606 = vadd.f32 %v261, %v1590
    %v1607 = vxor.u32 %v1599, 2147483648
    %v1608 = vxor.u32 %v1603, 2147483648
    %v1609 = vmul.f32 %v1607, 1.442695
    %v1610 = vpow.pop %v1609
    %v1611 = vmul.f32 %v1608, 1.442695
    %v1612 = vpow.pop %v1611
    %v1613 = vadd.f32 %v1610, 1.0
    %v1614 = vadd.f32 %v1612, 1.0
    %v1615 = vrcp.pop %v1613
    %v1616 = vmul.f32 %v1613, %v1615
    %v1617 = vsub.f32 1.0, %v1616
    %v1618 = vmul.f32 %v1615, %v1617
    %v1619 = vadd.f32 %v1615, %v1618
    %vm1620 = vweird.f32 %v1613
    %vm1621 = vweird.f32 %v1615
    %vm1622 = vmor %vm1620, %vm1621
    %v1623 = vsel %vm1622, %v1615, %v1619
    %v1624 = vand.u32 2147483647, %v1613
    %vm1625 = vcmp.eq.f32.partialorder %v1624, 8.507059e+37
    %v1626 = vand.u32 %v1613, 2147483648
    %v1627 = vor.u32 1.1754944e-38, %v1626
    %v1628 = vsel %vm1625, %v1627, %v1623
    %v1629 = vmul.f32 1.0, %v1628
    %v1630 = vrcp.pop %v1614
    %v1631 = vmul.f32 %v1614, %v1630
    %v1632 = vsub.f32 1.0, %v1631
    %v1633 = vmul.f32 %v1630, %v1632
    %v1634 = vadd.f32 %v1630, %v1633
    %vm1635 = vweird.f32 %v1614
    %vm1636 = vweird.f32 %v1630
    %vm1637 = vmor %vm1635, %vm1636
    %v1638 = vsel %vm1637, %v1630, %v1634
    %v1639 = vand.u32 2147483647, %v1614
    %vm1640 = vcmp.eq.f32.partialorder %v1639, 8.507059e+37
    %v1641 = vand.u32 %v1614, 2147483648
    %v1642 = vor.u32 1.1754944e-38, %v1641
    %v1643 = vsel %vm1640, %v1642, %v1638
    %v1644 = vmul.f32 1.0, %v1643
    %v1645 = vxor.u32 %v1600, 2147483648
    %v1646 = vxor.u32 %v1604, 2147483648
    %v1647 = vmul.f32 %v1645, 1.442695
    %v1648 = vpow.pop %v1647
    %v1649 = vmul.f32 %v1646, 1.442695
    %v1650 = vpow.pop %v1649
    %v1651 = vadd.f32 %v1648, 1.0
    %v1652 = vadd.f32 %v1650, 1.0
    %v1653 = vrcp.pop %v1651
    %v1654 = vmul.f32 %v1651, %v1653
    %v1655 = vsub.f32 1.0, %v1654
    %v1656 = vmul.f32 %v1653, %v1655
    %v1657 = vadd.f32 %v1653, %v1656
    %vm1658 = vweird.f32 %v1651
    %vm1659 = vweird.f32 %v1653
    %vm1660 = vmor %vm1658, %vm1659
    %v1661 = vsel %vm1660, %v1653, %v1657
    %v1662 = vand.u32 2147483647, %v1651
    %vm1663 = vcmp.eq.f32.partialorder %v1662, 8.507059e+37
    %v1664 = vand.u32 %v1651, 2147483648
    %v1665 = vor.u32 1.1754944e-38, %v1664
    %v1666 = vsel %vm1663, %v1665, %v1661
    %v1667 = vmul.f32 1.0, %v1666
    %v1668 = vrcp.pop %v1652
    %v1669 = vmul.f32 %v1652, %v1668
    %v1670 = vsub.f32 1.0, %v1669
    %v1671 = vmul.f32 %v1668, %v1670
    %v1672 = vadd.f32 %v1668, %v1671
    %vm1673 = vweird.f32 %v1652
    %vm1674 = vweird.f32 %v1668
    %vm1675 = vmor %vm1673, %vm1674
    %v1676 = vsel %vm1675, %v1668, %v1672
    %v1677 = vand.u32 2147483647, %v1652
    %vm1678 = vcmp.eq.f32.partialorder %v1677, 8.507059e+37
    %v1679 = vand.u32 %v1652, 2147483648
    %v1680 = vor.u32 1.1754944e-38, %v1679
    %v1681 = vsel %vm1678, %v1680, %v1676
    %v1682 = vmul.f32 1.0, %v1681
    %v1683 = vtanh.pop %v1601
    %v1684 = vtanh.pop %v1605
    %v1685 = vxor.u32 %v1602, 2147483648
    %v1686 = vxor.u32 %v1606, 2147483648
    %v1687 = vmul.f32 %v1685, 1.442695
    %v1688 = vpow.pop %v1687
    %v1689 = vmul.f32 %v1686, 1.442695
    %v1690 = vpow.pop %v1689
    %v1691 = vadd.f32 %v1688, 1.0
    %v1692 = vadd.f32 %v1690, 1.0
    %v1693 = vrcp.pop %v1691
    %v1694 = vmul.f32 %v1691, %v1693
    %v1695 = vsub.f32 1.0, %v1694
    %v1696 = vmul.f32 %v1693, %v1695
    %v1697 = vadd.f32 %v1693, %v1696
    %vm1698 = vweird.f32 %v1691
    %vm1699 = vweird.f32 %v1693
    %vm1700 = vmor %vm1698, %vm1699
    %v1701 = vsel %vm1700, %v1693, %v1697
    %v1702 = vand.u32 2147483647, %v1691
    %vm1703 = vcmp.eq.f32.partialorder %v1702, 8.507059e+37
    %v1704 = vand.u32 %v1691, 2147483648
    %v1705 = vor.u32 1.1754944e-38, %v1704
    %v1706 = vsel %vm1703, %v1705, %v1701
    %v1707 = vmul.f32 1.0, %v1706
    %v1708 = vrcp.pop %v1692
    %v1709 = vmul.f32 %v1692, %v1708
    %v1710 = vsub.f32 1.0, %v1709
    %v1711 = vmul.f32 %v1708, %v1710
    %v1712 = vadd.f32 %v1708, %v1711
    %vm1713 = vweird.f32 %v1692
    %vm1714 = vweird.f32 %v1708
    %vm1715 = vmor %vm1713, %vm1714
    %v1716 = vsel %vm1715, %v1708, %v1712
    %v1717 = vand.u32 2147483647, %v1692
    %vm1718 = vcmp.eq.f32.partialorder %v1717, 8.507059e+37
    %v1719 = vand.u32 %v1692, 2147483648
    %v1720 = vor.u32 1.1754944e-38, %v1719
    %v1721 = vsel %vm1718, %v1720, %v1716
    %v1722 = vmul.f32 1.0, %v1721
    %v1725 = vrot.slane %v1482, 7
    %v1726 = vrot.slane %v1483, 7
    %v1729 = vmul.f32 %v1667, %v1725
    %v1730 = vmul.f32 %v1682, %v1726
    %v1731 = vmul.f32 %v1629, %v1683
    %v1732 = vmul.f32 %v1644, %v1684
    %v1733 = vadd.f32 %v1729, %v1731
    %v1734 = vadd.f32 %v1730, %v1732
    %v1735 = vtanh.pop %v1733
    %v1736 = vtanh.pop %v1734
    %v1737 = vmul.f32 %v1707, %v1735
    %v1738 = vmul.f32 %v1722, %v1736
    %v1741 = vrot.slane %v1738, 7
    %vm1742 = vcmask 1046534
    %v1743 = vsel %vm1742, %v1741, %v1737
    %1745 = vst [vmem:[#allocation2 + $0x5] sm:$0x60] %v1743
    %v1746 = vrot.slane %v1737, 5
    %v1747 = vrot.slane %v1738, 4
    %v1748 = vsel %vm496, %v1747, %v1746
    %1750 = vmatpush.msra.mxu0 %v148
    %1751 = vmatpush.msra.mxu0 %v144
    %1752 = vmatpush.msra.mxu0 %v140
    %1753 = vmatpush.msra.mxu0 %v136
    %1754 = vmatpush.msra.mxu0 %v132
    %1755 = vmatpush.msra.mxu0 %v128
    %1756 = vmatpush.msra.mxu0 %v124
    %1757 = vmatpush.msra.mxu0 %v120
    %1758 = vmatpush.msra.mxu0 %v116
    %1759 = vmatpush.msra.mxu0 %v112
    %1760 = vmatpush.msra.mxu0 %v108
    %1761 = vmatpush.msra.mxu0 %v104
    %1762 = vmatpush.msra.mxu0 %v100
    %1763 = vmatpush.msra.mxu0 %v96
    %1764 = vmatpush.msra.mxu0 %v92
    %1765 = vmatpush.msra.mxu0 %v88
    %1766 = vmatmul.f32.gmra.mxu0 %v1748
    %v1767 = vpop.f32.mrf.mxu0
    %v1768 = vadd.f32 0.0, %v1767
    %1769 = vdwg.mxu0
    %1770 = vmatpush.msra.mxu0 %v149
    %1771 = vmatpush.msra.mxu0 %v145
    %1772 = vmatpush.msra.mxu0 %v141
    %1773 = vmatpush.msra.mxu0 %v137
    %1774 = vmatpush.msra.mxu0 %v133
    %1775 = vmatpush.msra.mxu0 %v129
    %1776 = vmatpush.msra.mxu0 %v125
    %1777 = vmatpush.msra.mxu0 %v121
    %1778 = vmatpush.msra.mxu0 %v117
    %1779 = vmatpush.msra.mxu0 %v113
    %1780 = vmatpush.msra.mxu0 %v109
    %1781 = vmatpush.msra.mxu0 %v105
    %1782 = vmatpush.msra.mxu0 %v101
    %1783 = vmatpush.msra.mxu0 %v97
    %1784 = vmatpush.msra.mxu0 %v93
    %1785 = vmatpush.msra.mxu0 %v89
    %1786 = vmatmul.f32.gmra.mxu0 %v1748
    %v1787 = vpop.f32.mrf.mxu0
    %v1788 = vadd.f32 0.0, %v1787
    %1789 = vdwg.mxu0
    %1790 = vmatpush.msra.mxu0 %v150
    %1791 = vmatpush.msra.mxu0 %v146
    %1792 = vmatpush.msra.mxu0 %v142
    %1793 = vmatpush.msra.mxu0 %v138
    %1794 = vmatpush.msra.mxu0 %v134
    %1795 = vmatpush.msra.mxu0 %v130
    %1796 = vmatpush.msra.mxu0 %v126
    %1797 = vmatpush.msra.mxu0 %v122
    %1798 = vmatpush.msra.mxu0 %v118
    %1799 = vmatpush.msra.mxu0 %v114
    %1800 = vmatpush.msra.mxu0 %v110
    %1801 = vmatpush.msra.mxu0 %v106
    %1802 = vmatpush.msra.mxu0 %v102
    %1803 = vmatpush.msra.mxu0 %v98
    %1804 = vmatpush.msra.mxu0 %v94
    %1805 = vmatpush.msra.mxu0 %v90
    %1806 = vmatmul.f32.gmra.mxu0 %v1748
    %v1807 = vpop.f32.mrf.mxu0
    %v1808 = vadd.f32 0.0, %v1807
    %1809 = vdwg.mxu0
    %1810 = vmatpush.msra.mxu0 %v151
    %1811 = vmatpush.msra.mxu0 %v147
    %1812 = vmatpush.msra.mxu0 %v143
    %1813 = vmatpush.msra.mxu0 %v139
    %1814 = vmatpush.msra.mxu0 %v135
    %1815 = vmatpush.msra.mxu0 %v131
    %1816 = vmatpush.msra.mxu0 %v127
    %1817 = vmatpush.msra.mxu0 %v123
    %1818 = vmatpush.msra.mxu0 %v119
    %1819 = vmatpush.msra.mxu0 %v115
    %1820 = vmatpush.msra.mxu0 %v111
    %1821 = vmatpush.msra.mxu0 %v107
    %1822 = vmatpush.msra.mxu0 %v103
    %1823 = vmatpush.msra.mxu0 %v99
    %1824 = vmatpush.msra.mxu0 %v95
    %1825 = vmatpush.msra.mxu0 %v91
    %1826 = vmatmul.f32.gmra.mxu0 %v1748
    %v1827 = vpop.f32.mrf.mxu0
    %v1828 = vadd.f32 0.0, %v1827
    %1829 = vdwg.mxu0
    %v1834 = vrot.slane %v1768, 2
    %v1835 = vrot.slane %v1788, 2
    %v1836 = vrot.slane %v1808, 2
    %v1837 = vrot.slane %v1828, 2
    %v1838 = vrot.slane %v1768, 3
    %v1839 = vrot.slane %v1788, 3
    %v1840 = vrot.slane %v1808, 3
    %v1841 = vrot.slane %v1828, 3
    %v1850 = vadd.f32 %v189, %v1834
    %v1851 = vadd.f32 %v212, %v1835
    %v1852 = vadd.f32 %v235, %v1836
    %v1853 = vadd.f32 %v258, %v1837
    %v1854 = vadd.f32 %v192, %v1838
    %v1855 = vadd.f32 %v215, %v1839
    %v1856 = vadd.f32 %v238, %v1840
    %v1857 = vadd.f32 %v261, %v1841
    %v1858 = vxor.u32 %v1850, 2147483648
    %v1859 = vxor.u32 %v1854, 2147483648
    %v1860 = vmul.f32 %v1858, 1.442695
    %v1861 = vpow.pop %v1860
    %v1862 = vmul.f32 %v1859, 1.442695
    %v1863 = vpow.pop %v1862
    %v1864 = vadd.f32 %v1861, 1.0
    %v1865 = vadd.f32 %v1863, 1.0
    %v1866 = vrcp.pop %v1864
    %v1867 = vmul.f32 %v1864, %v1866
    %v1868 = vsub.f32 1.0, %v1867
    %v1869 = vmul.f32 %v1866, %v1868
    %v1870 = vadd.f32 %v1866, %v1869
    %vm1871 = vweird.f32 %v1864
    %vm1872 = vweird.f32 %v1866
    %vm1873 = vmor %vm1871, %vm1872
    %v1874 = vsel %vm1873, %v1866, %v1870
    %v1875 = vand.u32 2147483647, %v1864
    %vm1876 = vcmp.eq.f32.partialorder %v1875, 8.507059e+37
    %v1877 = vand.u32 %v1864, 2147483648
    %v1878 = vor.u32 1.1754944e-38, %v1877
    %v1879 = vsel %vm1876, %v1878, %v1874
    %v1880 = vmul.f32 1.0, %v1879
    %v1881 = vrcp.pop %v1865
    %v1882 = vmul.f32 %v1865, %v1881
    %v1883 = vsub.f32 1.0, %v1882
    %v1884 = vmul.f32 %v1881, %v1883
    %v1885 = vadd.f32 %v1881, %v1884
    %vm1886 = vweird.f32 %v1865
    %vm1887 = vweird.f32 %v1881
    %vm1888 = vmor %vm1886, %vm1887
    %v1889 = vsel %vm1888, %v1881, %v1885
    %v1890 = vand.u32 2147483647, %v1865
    %vm1891 = vcmp.eq.f32.partialorder %v1890, 8.507059e+37
    %v1892 = vand.u32 %v1865, 2147483648
    %v1893 = vor.u32 1.1754944e-38, %v1892
    %v1894 = vsel %vm1891, %v1893, %v1889
    %v1895 = vmul.f32 1.0, %v1894
    %v1896 = vxor.u32 %v1851, 2147483648
    %v1897 = vxor.u32 %v1855, 2147483648
    %v1898 = vmul.f32 %v1896, 1.442695
    %v1899 = vpow.pop %v1898
    %v1900 = vmul.f32 %v1897, 1.442695
    %v1901 = vpow.pop %v1900
    %v1902 = vadd.f32 %v1899, 1.0
    %v1903 = vadd.f32 %v1901, 1.0
    %v1904 = vrcp.pop %v1902
    %v1905 = vmul.f32 %v1902, %v1904
    %v1906 = vsub.f32 1.0, %v1905
    %v1907 = vmul.f32 %v1904, %v1906
    %v1908 = vadd.f32 %v1904, %v1907
    %vm1909 = vweird.f32 %v1902
    %vm1910 = vweird.f32 %v1904
    %vm1911 = vmor %vm1909, %vm1910
    %v1912 = vsel %vm1911, %v1904, %v1908
    %v1913 = vand.u32 2147483647, %v1902
    %vm1914 = vcmp.eq.f32.partialorder %v1913, 8.507059e+37
    %v1915 = vand.u32 %v1902, 2147483648
    %v1916 = vor.u32 1.1754944e-38, %v1915
    %v1917 = vsel %vm1914, %v1916, %v1912
    %v1918 = vmul.f32 1.0, %v1917
    %v1919 = vrcp.pop %v1903
    %v1920 = vmul.f32 %v1903, %v1919
    %v1921 = vsub.f32 1.0, %v1920
    %v1922 = vmul.f32 %v1919, %v1921
    %v1923 = vadd.f32 %v1919, %v1922
    %vm1924 = vweird.f32 %v1903
    %vm1925 = vweird.f32 %v1919
    %vm1926 = vmor %vm1924, %vm1925
    %v1927 = vsel %vm1926, %v1919, %v1923
    %v1928 = vand.u32 2147483647, %v1903
    %vm1929 = vcmp.eq.f32.partialorder %v1928, 8.507059e+37
    %v1930 = vand.u32 %v1903, 2147483648
    %v1931 = vor.u32 1.1754944e-38, %v1930
    %v1932 = vsel %vm1929, %v1931, %v1927
    %v1933 = vmul.f32 1.0, %v1932
    %v1934 = vtanh.pop %v1852
    %v1935 = vtanh.pop %v1856
    %v1936 = vxor.u32 %v1853, 2147483648
    %v1937 = vxor.u32 %v1857, 2147483648
    %v1938 = vmul.f32 %v1936, 1.442695
    %v1939 = vpow.pop %v1938
    %v1940 = vmul.f32 %v1937, 1.442695
    %v1941 = vpow.pop %v1940
    %v1942 = vadd.f32 %v1939, 1.0
    %v1943 = vadd.f32 %v1941, 1.0
    %v1944 = vrcp.pop %v1942
    %v1945 = vmul.f32 %v1942, %v1944
    %v1946 = vsub.f32 1.0, %v1945
    %v1947 = vmul.f32 %v1944, %v1946
    %v1948 = vadd.f32 %v1944, %v1947
    %vm1949 = vweird.f32 %v1942
    %vm1950 = vweird.f32 %v1944
    %vm1951 = vmor %vm1949, %vm1950
    %v1952 = vsel %vm1951, %v1944, %v1948
    %v1953 = vand.u32 2147483647, %v1942
    %vm1954 = vcmp.eq.f32.partialorder %v1953, 8.507059e+37
    %v1955 = vand.u32 %v1942, 2147483648
    %v1956 = vor.u32 1.1754944e-38, %v1955
    %v1957 = vsel %vm1954, %v1956, %v1952
    %v1958 = vmul.f32 1.0, %v1957
    %v1959 = vrcp.pop %v1943
    %v1960 = vmul.f32 %v1943, %v1959
    %v1961 = vsub.f32 1.0, %v1960
    %v1962 = vmul.f32 %v1959, %v1961
    %v1963 = vadd.f32 %v1959, %v1962
    %vm1964 = vweird.f32 %v1943
    %vm1965 = vweird.f32 %v1959
    %vm1966 = vmor %vm1964, %vm1965
    %v1967 = vsel %vm1966, %v1959, %v1963
    %v1968 = vand.u32 2147483647, %v1943
    %vm1969 = vcmp.eq.f32.partialorder %v1968, 8.507059e+37
    %v1970 = vand.u32 %v1943, 2147483648
    %v1971 = vor.u32 1.1754944e-38, %v1970
    %v1972 = vsel %vm1969, %v1971, %v1967
    %v1973 = vmul.f32 1.0, %v1972
    %v1976 = vrot.slane %v1733, 7
    %v1977 = vrot.slane %v1734, 7
    %v1980 = vmul.f32 %v1918, %v1976
    %v1981 = vmul.f32 %v1933, %v1977
    %v1982 = vmul.f32 %v1880, %v1934
    %v1983 = vmul.f32 %v1895, %v1935
    %v1984 = vadd.f32 %v1980, %v1982
    %v1985 = vadd.f32 %v1981, %v1983
    %v1986 = vtanh.pop %v1984
    %v1987 = vtanh.pop %v1985
    %v1988 = vmul.f32 %v1958, %v1986
    %v1989 = vmul.f32 %v1973, %v1987
    %v1992 = vrot.slane %v1989, 7
    %vm1993 = vcmask 1047559
    %v1994 = vsel %vm1993, %v1992, %v1988
    %1996 = vst [vmem:[#allocation2 + $0x6] sm:$0xc0] %v1994
    %v1997 = vrot.slane %v1988, 6
    %v1998 = vrot.slane %v1989, 5
    %v1999 = vsel %vm496, %v1998, %v1997
    %2001 = vmatpush.msra.mxu0 %v148
    %2002 = vmatpush.msra.mxu0 %v144
    %2003 = vmatpush.msra.mxu0 %v140
    %2004 = vmatpush.msra.mxu0 %v136
    %2005 = vmatpush.msra.mxu0 %v132
    %2006 = vmatpush.msra.mxu0 %v128
    %2007 = vmatpush.msra.mxu0 %v124
    %2008 = vmatpush.msra.mxu0 %v120
    %2009 = vmatpush.msra.mxu0 %v116
    %2010 = vmatpush.msra.mxu0 %v112
    %2011 = vmatpush.msra.mxu0 %v108
    %2012 = vmatpush.msra.mxu0 %v104
    %2013 = vmatpush.msra.mxu0 %v100
    %2014 = vmatpush.msra.mxu0 %v96
    %2015 = vmatpush.msra.mxu0 %v92
    %2016 = vmatpush.msra.mxu0 %v88
    %2017 = vmatmul.f32.gmra.mxu0 %v1999
    %v2018 = vpop.f32.mrf.mxu0
    %v2019 = vadd.f32 0.0, %v2018
    %2020 = vdwg.mxu0
    %2021 = vmatpush.msra.mxu0 %v149
    %2022 = vmatpush.msra.mxu0 %v145
    %2023 = vmatpush.msra.mxu0 %v141
    %2024 = vmatpush.msra.mxu0 %v137
    %2025 = vmatpush.msra.mxu0 %v133
    %2026 = vmatpush.msra.mxu0 %v129
    %2027 = vmatpush.msra.mxu0 %v125
    %2028 = vmatpush.msra.mxu0 %v121
    %2029 = vmatpush.msra.mxu0 %v117
    %2030 = vmatpush.msra.mxu0 %v113
    %2031 = vmatpush.msra.mxu0 %v109
    %2032 = vmatpush.msra.mxu0 %v105
    %2033 = vmatpush.msra.mxu0 %v101
    %2034 = vmatpush.msra.mxu0 %v97
    %2035 = vmatpush.msra.mxu0 %v93
    %2036 = vmatpush.msra.mxu0 %v89
    %2037 = vmatmul.f32.gmra.mxu0 %v1999
    %v2038 = vpop.f32.mrf.mxu0
    %v2039 = vadd.f32 0.0, %v2038
    %2040 = vdwg.mxu0
    %2041 = vmatpush.msra.mxu0 %v150
    %2042 = vmatpush.msra.mxu0 %v146
    %2043 = vmatpush.msra.mxu0 %v142
    %2044 = vmatpush.msra.mxu0 %v138
    %2045 = vmatpush.msra.mxu0 %v134
    %2046 = vmatpush.msra.mxu0 %v130
    %2047 = vmatpush.msra.mxu0 %v126
    %2048 = vmatpush.msra.mxu0 %v122
    %2049 = vmatpush.msra.mxu0 %v118
    %2050 = vmatpush.msra.mxu0 %v114
    %2051 = vmatpush.msra.mxu0 %v110
    %2052 = vmatpush.msra.mxu0 %v106
    %2053 = vmatpush.msra.mxu0 %v102
    %2054 = vmatpush.msra.mxu0 %v98
    %2055 = vmatpush.msra.mxu0 %v94
    %2056 = vmatpush.msra.mxu0 %v90
    %2057 = vmatmul.f32.gmra.mxu0 %v1999
    %v2058 = vpop.f32.mrf.mxu0
    %v2059 = vadd.f32 0.0, %v2058
    %2060 = vdwg.mxu0
    %2061 = vmatpush.msra.mxu0 %v151
    %2062 = vmatpush.msra.mxu0 %v147
    %2063 = vmatpush.msra.mxu0 %v143
    %2064 = vmatpush.msra.mxu0 %v139
    %2065 = vmatpush.msra.mxu0 %v135
    %2066 = vmatpush.msra.mxu0 %v131
    %2067 = vmatpush.msra.mxu0 %v127
    %2068 = vmatpush.msra.mxu0 %v123
    %2069 = vmatpush.msra.mxu0 %v119
    %2070 = vmatpush.msra.mxu0 %v115
    %2071 = vmatpush.msra.mxu0 %v111
    %2072 = vmatpush.msra.mxu0 %v107
    %2073 = vmatpush.msra.mxu0 %v103
    %2074 = vmatpush.msra.mxu0 %v99
    %2075 = vmatpush.msra.mxu0 %v95
    %2076 = vmatpush.msra.mxu0 %v91
    %2077 = vmatmul.f32.gmra.mxu0 %v1999
    %v2078 = vpop.f32.mrf.mxu0
    %v2079 = vadd.f32 0.0, %v2078
    %2080 = vdwg.mxu0
    %v2085 = vrot.slane %v2019, 1
    %v2086 = vrot.slane %v2039, 1
    %v2087 = vrot.slane %v2059, 1
    %v2088 = vrot.slane %v2079, 1
    %v2089 = vrot.slane %v2019, 2
    %v2090 = vrot.slane %v2039, 2
    %v2091 = vrot.slane %v2059, 2
    %v2092 = vrot.slane %v2079, 2
    %v2101 = vadd.f32 %v189, %v2085
    %v2102 = vadd.f32 %v212, %v2086
    %v2103 = vadd.f32 %v235, %v2087
    %v2104 = vadd.f32 %v258, %v2088
    %v2105 = vadd.f32 %v192, %v2089
    %v2106 = vadd.f32 %v215, %v2090
    %v2107 = vadd.f32 %v238, %v2091
    %v2108 = vadd.f32 %v261, %v2092
    %v2109 = vxor.u32 %v2101, 2147483648
    %v2110 = vxor.u32 %v2105, 2147483648
    %v2111 = vmul.f32 %v2109, 1.442695
    %v2112 = vpow.pop %v2111
    %v2113 = vmul.f32 %v2110, 1.442695
    %v2114 = vpow.pop %v2113
    %v2115 = vadd.f32 %v2112, 1.0
    %v2116 = vadd.f32 %v2114, 1.0
    %v2117 = vrcp.pop %v2115
    %v2118 = vmul.f32 %v2115, %v2117
    %v2119 = vsub.f32 1.0, %v2118
    %v2120 = vmul.f32 %v2117, %v2119
    %v2121 = vadd.f32 %v2117, %v2120
    %vm2122 = vweird.f32 %v2115
    %vm2123 = vweird.f32 %v2117
    %vm2124 = vmor %vm2122, %vm2123
    %v2125 = vsel %vm2124, %v2117, %v2121
    %v2126 = vand.u32 2147483647, %v2115
    %vm2127 = vcmp.eq.f32.partialorder %v2126, 8.507059e+37
    %v2128 = vand.u32 %v2115, 2147483648
    %v2129 = vor.u32 1.1754944e-38, %v2128
    %v2130 = vsel %vm2127, %v2129, %v2125
    %v2131 = vmul.f32 1.0, %v2130
    %v2132 = vrcp.pop %v2116
    %v2133 = vmul.f32 %v2116, %v2132
    %v2134 = vsub.f32 1.0, %v2133
    %v2135 = vmul.f32 %v2132, %v2134
    %v2136 = vadd.f32 %v2132, %v2135
    %vm2137 = vweird.f32 %v2116
    %vm2138 = vweird.f32 %v2132
    %vm2139 = vmor %vm2137, %vm2138
    %v2140 = vsel %vm2139, %v2132, %v2136
    %v2141 = vand.u32 2147483647, %v2116
    %vm2142 = vcmp.eq.f32.partialorder %v2141, 8.507059e+37
    %v2143 = vand.u32 %v2116, 2147483648
    %v2144 = vor.u32 1.1754944e-38, %v2143
    %v2145 = vsel %vm2142, %v2144, %v2140
    %v2146 = vmul.f32 1.0, %v2145
    %v2147 = vxor.u32 %v2102, 2147483648
    %v2148 = vxor.u32 %v2106, 2147483648
    %v2149 = vmul.f32 %v2147, 1.442695
    %v2150 = vpow.pop %v2149
    %v2151 = vmul.f32 %v2148, 1.442695
    %v2152 = vpow.pop %v2151
    %v2153 = vadd.f32 %v2150, 1.0
    %v2154 = vadd.f32 %v2152, 1.0
    %v2155 = vrcp.pop %v2153
    %v2156 = vmul.f32 %v2153, %v2155
    %v2157 = vsub.f32 1.0, %v2156
    %v2158 = vmul.f32 %v2155, %v2157
    %v2159 = vadd.f32 %v2155, %v2158
    %vm2160 = vweird.f32 %v2153
    %vm2161 = vweird.f32 %v2155
    %vm2162 = vmor %vm2160, %vm2161
    %v2163 = vsel %vm2162, %v2155, %v2159
    %v2164 = vand.u32 2147483647, %v2153
    %vm2165 = vcmp.eq.f32.partialorder %v2164, 8.507059e+37
    %v2166 = vand.u32 %v2153, 2147483648
    %v2167 = vor.u32 1.1754944e-38, %v2166
    %v2168 = vsel %vm2165, %v2167, %v2163
    %v2169 = vmul.f32 1.0, %v2168
    %v2170 = vrcp.pop %v2154
    %v2171 = vmul.f32 %v2154, %v2170
    %v2172 = vsub.f32 1.0, %v2171
    %v2173 = vmul.f32 %v2170, %v2172
    %v2174 = vadd.f32 %v2170, %v2173
    %vm2175 = vweird.f32 %v2154
    %vm2176 = vweird.f32 %v2170
    %vm2177 = vmor %vm2175, %vm2176
    %v2178 = vsel %vm2177, %v2170, %v2174
    %v2179 = vand.u32 2147483647, %v2154
    %vm2180 = vcmp.eq.f32.partialorder %v2179, 8.507059e+37
    %v2181 = vand.u32 %v2154, 2147483648
    %v2182 = vor.u32 1.1754944e-38, %v2181
    %v2183 = vsel %vm2180, %v2182, %v2178
    %v2184 = vmul.f32 1.0, %v2183
    %v2185 = vtanh.pop %v2103
    %v2186 = vtanh.pop %v2107
    %v2187 = vxor.u32 %v2104, 2147483648
    %v2188 = vxor.u32 %v2108, 2147483648
    %v2189 = vmul.f32 %v2187, 1.442695
    %v2190 = vpow.pop %v2189
    %v2191 = vmul.f32 %v2188, 1.442695
    %v2192 = vpow.pop %v2191
    %v2193 = vadd.f32 %v2190, 1.0
    %v2194 = vadd.f32 %v2192, 1.0
    %v2195 = vrcp.pop %v2193
    %v2196 = vmul.f32 %v2193, %v2195
    %v2197 = vsub.f32 1.0, %v2196
    %v2198 = vmul.f32 %v2195, %v2197
    %v2199 = vadd.f32 %v2195, %v2198
    %vm2200 = vweird.f32 %v2193
    %vm2201 = vweird.f32 %v2195
    %vm2202 = vmor %vm2200, %vm2201
    %v2203 = vsel %vm2202, %v2195, %v2199
    %v2204 = vand.u32 2147483647, %v2193
    %vm2205 = vcmp.eq.f32.partialorder %v2204, 8.507059e+37
    %v2206 = vand.u32 %v2193, 2147483648
    %v2207 = vor.u32 1.1754944e-38, %v2206
    %v2208 = vsel %vm2205, %v2207, %v2203
    %v2209 = vmul.f32 1.0, %v2208
    %v2210 = vrcp.pop %v2194
    %v2211 = vmul.f32 %v2194, %v2210
    %v2212 = vsub.f32 1.0, %v2211
    %v2213 = vmul.f32 %v2210, %v2212
    %v2214 = vadd.f32 %v2210, %v2213
    %vm2215 = vweird.f32 %v2194
    %vm2216 = vweird.f32 %v2210
    %vm2217 = vmor %vm2215, %vm2216
    %v2218 = vsel %vm2217, %v2210, %v2214
    %v2219 = vand.u32 2147483647, %v2194
    %vm2220 = vcmp.eq.f32.partialorder %v2219, 8.507059e+37
    %v2221 = vand.u32 %v2194, 2147483648
    %v2222 = vor.u32 1.1754944e-38, %v2221
    %v2223 = vsel %vm2220, %v2222, %v2218
    %v2224 = vmul.f32 1.0, %v2223
    %v2227 = vrot.slane %v1984, 7
    %v2228 = vrot.slane %v1985, 7
    %v2231 = vmul.f32 %v2169, %v2227
    %v2232 = vmul.f32 %v2184, %v2228
    %v2233 = vmul.f32 %v2131, %v2185
    %v2234 = vmul.f32 %v2146, %v2186
    %v2235 = vadd.f32 %v2231, %v2233
    %v2236 = vadd.f32 %v2232, %v2234
    %v2237 = vtanh.pop %v2235
    %v2238 = vtanh.pop %v2236
    %v2239 = vmul.f32 %v2209, %v2237
    %v2240 = vmul.f32 %v2224, %v2238
    %v2243 = vrot.slane %v2240, 7
    %2246 = vst [vmem:[#allocation2 + $0x7] sm:$0x80] %v2239
    %2247 = vst [vmem:[#allocation2 + $0xf] sm:$0x1] %v2243
    %v2248 = vld [vmem:[#allocation6] sm:$0xff]
    %v2249 = vld [vmem:[#allocation6 + $0x8] sm:$0xff]
    %v2250 = vld [vmem:[#allocation6 + $0x10] sm:$0xff]
    %v2251 = vld [vmem:[#allocation6 + $0x18] sm:$0xff]
    %v2252 = vld [vmem:[#allocation6 + $0x20] sm:$0xff]
    %v2253 = vld [vmem:[#allocation6 + $0x28] sm:$0xff]
    %v2254 = vld [vmem:[#allocation6 + $0x30] sm:$0xff]
    %v2255 = vld [vmem:[#allocation6 + $0x38] sm:$0xff]
    %v2256 = vld [vmem:[#allocation6 + $0x40] sm:$0xff]
    %v2257 = vld [vmem:[#allocation6 + $0x48] sm:$0xff]
    %v2258 = vld [vmem:[#allocation6 + $0x50] sm:$0xff]
    %v2259 = vld [vmem:[#allocation6 + $0x58] sm:$0xff]
    %v2260 = vld [vmem:[#allocation6 + $0x60] sm:$0xff]
    %v2261 = vld [vmem:[#allocation6 + $0x68] sm:$0xff]
    %v2262 = vld [vmem:[#allocation6 + $0x70] sm:$0xff]
    %v2263 = vld [vmem:[#allocation6 + $0x78] sm:$0xff]
    %v2264 = vld [vmem:[#allocation6 + $0x80] sm:$0xff]
    %v2265 = vld [vmem:[#allocation6 + $0x88] sm:$0xff]
    %v2266 = vld [vmem:[#allocation6 + $0x90] sm:$0xff]
    %v2267 = vld [vmem:[#allocation6 + $0x98] sm:$0xff]
    %v2268 = vld [vmem:[#allocation6 + $0xa0] sm:$0xff]
    %v2269 = vld [vmem:[#allocation6 + $0xa8] sm:$0xff]
    %v2270 = vld [vmem:[#allocation6 + $0xb0] sm:$0xff]
    %v2271 = vld [vmem:[#allocation6 + $0xb8] sm:$0xff]
    %v2272 = vld [vmem:[#allocation6 + $0xc0] sm:$0xff]
    %v2273 = vld [vmem:[#allocation6 + $0xc8] sm:$0xff]
    %v2274 = vld [vmem:[#allocation6 + $0xd0] sm:$0xff]
    %v2275 = vld [vmem:[#allocation6 + $0xd8] sm:$0xff]
    %v2276 = vld [vmem:[#allocation6 + $0xe0] sm:$0xff]
    %v2277 = vld [vmem:[#allocation6 + $0xe8] sm:$0xff]
    %v2278 = vld [vmem:[#allocation6 + $0xf0] sm:$0xff]
    %v2279 = vld [vmem:[#allocation6 + $0xf8] sm:$0xff]
    %v2280 = vld [vmem:[#allocation6 + $0x100] sm:$0xff]
    %v2281 = vld [vmem:[#allocation6 + $0x108] sm:$0xff]
    %v2282 = vld [vmem:[#allocation6 + $0x110] sm:$0xff]
    %v2283 = vld [vmem:[#allocation6 + $0x118] sm:$0xff]
    %v2284 = vld [vmem:[#allocation6 + $0x120] sm:$0xff]
    %v2285 = vld [vmem:[#allocation6 + $0x128] sm:$0xff]
    %v2286 = vld [vmem:[#allocation6 + $0x130] sm:$0xff]
    %v2287 = vld [vmem:[#allocation6 + $0x138] sm:$0xff]
    %v2288 = vld [vmem:[#allocation6 + $0x140] sm:$0xff]
    %v2289 = vld [vmem:[#allocation6 + $0x148] sm:$0xff]
    %v2290 = vld [vmem:[#allocation6 + $0x150] sm:$0xff]
    %v2291 = vld [vmem:[#allocation6 + $0x158] sm:$0xff]
    %v2292 = vld [vmem:[#allocation6 + $0x160] sm:$0xff]
    %v2293 = vld [vmem:[#allocation6 + $0x168] sm:$0xff]
    %v2294 = vld [vmem:[#allocation6 + $0x170] sm:$0xff]
    %v2295 = vld [vmem:[#allocation6 + $0x178] sm:$0xff]
    %v2296 = vld [vmem:[#allocation6 + $0x180] sm:$0xff]
    %v2297 = vld [vmem:[#allocation6 + $0x188] sm:$0xff]
    %v2298 = vld [vmem:[#allocation6 + $0x190] sm:$0xff]
    %v2299 = vld [vmem:[#allocation6 + $0x198] sm:$0xff]
    %v2300 = vld [vmem:[#allocation6 + $0x1a0] sm:$0xff]
    %v2301 = vld [vmem:[#allocation6 + $0x1a8] sm:$0xff]
    %v2302 = vld [vmem:[#allocation6 + $0x1b0] sm:$0xff]
    %v2303 = vld [vmem:[#allocation6 + $0x1b8] sm:$0xff]
    %v2304 = vld [vmem:[#allocation6 + $0x1c0] sm:$0xff]
    %v2305 = vld [vmem:[#allocation6 + $0x1c8] sm:$0xff]
    %v2306 = vld [vmem:[#allocation6 + $0x1d0] sm:$0xff]
    %v2307 = vld [vmem:[#allocation6 + $0x1d8] sm:$0xff]
    %v2308 = vld [vmem:[#allocation6 + $0x1e0] sm:$0xff]
    %v2309 = vld [vmem:[#allocation6 + $0x1e8] sm:$0xff]
    %v2310 = vld [vmem:[#allocation6 + $0x1f0] sm:$0xff]
    %v2311 = vld [vmem:[#allocation6 + $0x1f8] sm:$0xff]
    %v2312 = vld [vmem:[#allocation8] sm:$0xff]
    %v2313 = vld [vmem:[#allocation8 + $0x8] sm:$0xff]
    %v2314 = vld [vmem:[#allocation8 + $0x10] sm:$0xff]
    %v2315 = vld [vmem:[#allocation8 + $0x18] sm:$0xff]
    %v2316 = vld [vmem:[#allocation8 + $0x20] sm:$0xff]
    %v2317 = vld [vmem:[#allocation8 + $0x28] sm:$0xff]
    %v2318 = vld [vmem:[#allocation8 + $0x30] sm:$0xff]
    %v2319 = vld [vmem:[#allocation8 + $0x38] sm:$0xff]
    %v2320 = vld [vmem:[#allocation8 + $0x40] sm:$0xff]
    %v2321 = vld [vmem:[#allocation8 + $0x48] sm:$0xff]
    %v2322 = vld [vmem:[#allocation8 + $0x50] sm:$0xff]
    %v2323 = vld [vmem:[#allocation8 + $0x58] sm:$0xff]
    %v2324 = vld [vmem:[#allocation8 + $0x60] sm:$0xff]
    %v2325 = vld [vmem:[#allocation8 + $0x68] sm:$0xff]
    %v2326 = vld [vmem:[#allocation8 + $0x70] sm:$0xff]
    %v2327 = vld [vmem:[#allocation8 + $0x78] sm:$0xff]
    %v2328 = vld [vmem:[#allocation8 + $0x80] sm:$0xff]
    %v2329 = vld [vmem:[#allocation8 + $0x88] sm:$0xff]
    %v2330 = vld [vmem:[#allocation8 + $0x90] sm:$0xff]
    %v2331 = vld [vmem:[#allocation8 + $0x98] sm:$0xff]
    %v2332 = vld [vmem:[#allocation8 + $0xa0] sm:$0xff]
    %v2333 = vld [vmem:[#allocation8 + $0xa8] sm:$0xff]
    %v2334 = vld [vmem:[#allocation8 + $0xb0] sm:$0xff]
    %v2335 = vld [vmem:[#allocation8 + $0xb8] sm:$0xff]
    %v2336 = vld [vmem:[#allocation8 + $0xc0] sm:$0xff]
    %v2337 = vld [vmem:[#allocation8 + $0xc8] sm:$0xff]
    %v2338 = vld [vmem:[#allocation8 + $0xd0] sm:$0xff]
    %v2339 = vld [vmem:[#allocation8 + $0xd8] sm:$0xff]
    %v2340 = vld [vmem:[#allocation8 + $0xe0] sm:$0xff]
    %v2341 = vld [vmem:[#allocation8 + $0xe8] sm:$0xff]
    %v2342 = vld [vmem:[#allocation8 + $0xf0] sm:$0xff]
    %v2343 = vld [vmem:[#allocation8 + $0xf8] sm:$0xff]
    %v2344 = vld [vmem:[#allocation8 + $0x100] sm:$0xff]
    %v2345 = vld [vmem:[#allocation8 + $0x108] sm:$0xff]
    %v2346 = vld [vmem:[#allocation8 + $0x110] sm:$0xff]
    %v2347 = vld [vmem:[#allocation8 + $0x118] sm:$0xff]
    %v2348 = vld [vmem:[#allocation8 + $0x120] sm:$0xff]
    %v2349 = vld [vmem:[#allocation8 + $0x128] sm:$0xff]
    %v2350 = vld [vmem:[#allocation8 + $0x130] sm:$0xff]
    %v2351 = vld [vmem:[#allocation8 + $0x138] sm:$0xff]
    %v2352 = vld [vmem:[#allocation8 + $0x140] sm:$0xff]
    %v2353 = vld [vmem:[#allocation8 + $0x148] sm:$0xff]
    %v2354 = vld [vmem:[#allocation8 + $0x150] sm:$0xff]
    %v2355 = vld [vmem:[#allocation8 + $0x158] sm:$0xff]
    %v2356 = vld [vmem:[#allocation8 + $0x160] sm:$0xff]
    %v2357 = vld [vmem:[#allocation8 + $0x168] sm:$0xff]
    %v2358 = vld [vmem:[#allocation8 + $0x170] sm:$0xff]
    %v2359 = vld [vmem:[#allocation8 + $0x178] sm:$0xff]
    %v2360 = vld [vmem:[#allocation8 + $0x180] sm:$0xff]
    %v2361 = vld [vmem:[#allocation8 + $0x188] sm:$0xff]
    %v2362 = vld [vmem:[#allocation8 + $0x190] sm:$0xff]
    %v2363 = vld [vmem:[#allocation8 + $0x198] sm:$0xff]
    %v2364 = vld [vmem:[#allocation8 + $0x1a0] sm:$0xff]
    %v2365 = vld [vmem:[#allocation8 + $0x1a8] sm:$0xff]
    %v2366 = vld [vmem:[#allocation8 + $0x1b0] sm:$0xff]
    %v2367 = vld [vmem:[#allocation8 + $0x1b8] sm:$0xff]
    %v2368 = vld [vmem:[#allocation8 + $0x1c0] sm:$0xff]
    %v2369 = vld [vmem:[#allocation8 + $0x1c8] sm:$0xff]
    %v2370 = vld [vmem:[#allocation8 + $0x1d0] sm:$0xff]
    %v2371 = vld [vmem:[#allocation8 + $0x1d8] sm:$0xff]
    %v2372 = vld [vmem:[#allocation8 + $0x1e0] sm:$0xff]
    %v2373 = vld [vmem:[#allocation8 + $0x1e8] sm:$0xff]
    %v2374 = vld [vmem:[#allocation8 + $0x1f0] sm:$0xff]
    %v2375 = vld [vmem:[#allocation8 + $0x1f8] sm:$0xff]
    %v2376 = vld [vmem:[%s6] sm:$0xf]
    %v2377 = vld [vmem:[#allocation2] sm:$0xff]
    %v2378 = vld [vmem:[#allocation2 + $0x8] sm:$0xff]
    %v2380 = vperm.slane %v2376, 0
    %v2381 = vperm.slane %v2376, 1
    %v2382 = vperm.slane %v2376, 2
    %v2383 = vperm.slane %v2376, 3
    %2388 = vmatpush.msra.mxu0 %v2308
    %2389 = vmatpush.msra.mxu0 %v2304
    %2390 = vmatpush.msra.mxu0 %v2300
    %2391 = vmatpush.msra.mxu0 %v2296
    %2392 = vmatpush.msra.mxu0 %v2292
    %2393 = vmatpush.msra.mxu0 %v2288
    %2394 = vmatpush.msra.mxu0 %v2284
    %2395 = vmatpush.msra.mxu0 %v2280
    %2396 = vmatpush.msra.mxu0 %v2276
    %2397 = vmatpush.msra.mxu0 %v2272
    %2398 = vmatpush.msra.mxu0 %v2268
    %2399 = vmatpush.msra.mxu0 %v2264
    %2400 = vmatpush.msra.mxu0 %v2260
    %2401 = vmatpush.msra.mxu0 %v2256
    %2402 = vmatpush.msra.mxu0 %v2252
    %2403 = vmatpush.msra.mxu0 %v2248
    %2404 = vmatmul.f32.gmra.mxu0 %v2377
    %v2405 = vpop.f32.mrf.mxu0
    %v2406 = vadd.f32 %v2380, %v2405
    %2407 = vmatmul.f32.gmra.mxu0 %v2378
    %v2408 = vpop.f32.mrf.mxu0
    %v2409 = vadd.f32 %v2380, %v2408
    %2410 = vdwg.mxu0
    %2411 = vmatpush.msra.mxu0 %v2309
    %2412 = vmatpush.msra.mxu0 %v2305
    %2413 = vmatpush.msra.mxu0 %v2301
    %2414 = vmatpush.msra.mxu0 %v2297
    %2415 = vmatpush.msra.mxu0 %v2293
    %2416 = vmatpush.msra.mxu0 %v2289
    %2417 = vmatpush.msra.mxu0 %v2285
    %2418 = vmatpush.msra.mxu0 %v2281
    %2419 = vmatpush.msra.mxu0 %v2277
    %2420 = vmatpush.msra.mxu0 %v2273
    %2421 = vmatpush.msra.mxu0 %v2269
    %2422 = vmatpush.msra.mxu0 %v2265
    %2423 = vmatpush.msra.mxu0 %v2261
    %2424 = vmatpush.msra.mxu0 %v2257
    %2425 = vmatpush.msra.mxu0 %v2253
    %2426 = vmatpush.msra.mxu0 %v2249
    %2427 = vmatmul.f32.gmra.mxu0 %v2377
    %v2428 = vpop.f32.mrf.mxu0
    %v2429 = vadd.f32 %v2381, %v2428
    %2430 = vmatmul.f32.gmra.mxu0 %v2378
    %v2431 = vpop.f32.mrf.mxu0
    %v2432 = vadd.f32 %v2381, %v2431
    %2433 = vdwg.mxu0
    %2434 = vmatpush.msra.mxu0 %v2310
    %2435 = vmatpush.msra.mxu0 %v2306
    %2436 = vmatpush.msra.mxu0 %v2302
    %2437 = vmatpush.msra.mxu0 %v2298
    %2438 = vmatpush.msra.mxu0 %v2294
    %2439 = vmatpush.msra.mxu0 %v2290
    %2440 = vmatpush.msra.mxu0 %v2286
    %2441 = vmatpush.msra.mxu0 %v2282
    %2442 = vmatpush.msra.mxu0 %v2278
    %2443 = vmatpush.msra.mxu0 %v2274
    %2444 = vmatpush.msra.mxu0 %v2270
    %2445 = vmatpush.msra.mxu0 %v2266
    %2446 = vmatpush.msra.mxu0 %v2262
    %2447 = vmatpush.msra.mxu0 %v2258
    %2448 = vmatpush.msra.mxu0 %v2254
    %2449 = vmatpush.msra.mxu0 %v2250
    %2450 = vmatmul.f32.gmra.mxu0 %v2377
    %v2451 = vpop.f32.mrf.mxu0
    %v2452 = vadd.f32 %v2382, %v2451
    %2453 = vmatmul.f32.gmra.mxu0 %v2378
    %v2454 = vpop.f32.mrf.mxu0
    %v2455 = vadd.f32 %v2382, %v2454
    %2456 = vdwg.mxu0
    %2457 = vmatpush.msra.mxu0 %v2311
    %2458 = vmatpush.msra.mxu0 %v2307
    %2459 = vmatpush.msra.mxu0 %v2303
    %2460 = vmatpush.msra.mxu0 %v2299
    %2461 = vmatpush.msra.mxu0 %v2295
    %2462 = vmatpush.msra.mxu0 %v2291
    %2463 = vmatpush.msra.mxu0 %v2287
    %2464 = vmatpush.msra.mxu0 %v2283
    %2465 = vmatpush.msra.mxu0 %v2279
    %2466 = vmatpush.msra.mxu0 %v2275
    %2467 = vmatpush.msra.mxu0 %v2271
    %2468 = vmatpush.msra.mxu0 %v2267
    %2469 = vmatpush.msra.mxu0 %v2263
    %2470 = vmatpush.msra.mxu0 %v2259
    %2471 = vmatpush.msra.mxu0 %v2255
    %2472 = vmatpush.msra.mxu0 %v2251
    %2473 = vmatmul.f32.gmra.mxu0 %v2377
    %v2474 = vpop.f32.mrf.mxu0
    %v2475 = vadd.f32 %v2383, %v2474
    %2476 = vmatmul.f32.gmra.mxu0 %v2378
    %v2477 = vpop.f32.mrf.mxu0
    %v2478 = vadd.f32 %v2383, %v2477
    %2479 = vdwg.mxu0
    %2480 = vmatpush.msra.mxu0 %v2372
    %2481 = vmatpush.msra.mxu0 %v2368
    %2482 = vmatpush.msra.mxu0 %v2364
    %2483 = vmatpush.msra.mxu0 %v2360
    %2484 = vmatpush.msra.mxu0 %v2356
    %2485 = vmatpush.msra.mxu0 %v2352
    %2486 = vmatpush.msra.mxu0 %v2348
    %2487 = vmatpush.msra.mxu0 %v2344
    %2488 = vmatpush.msra.mxu0 %v2340
    %2489 = vmatpush.msra.mxu0 %v2336
    %2490 = vmatpush.msra.mxu0 %v2332
    %2491 = vmatpush.msra.mxu0 %v2328
    %2492 = vmatpush.msra.mxu0 %v2324
    %2493 = vmatpush.msra.mxu0 %v2320
    %2494 = vmatpush.msra.mxu0 %v2316
    %2495 = vmatpush.msra.mxu0 %v2312
    %2496 = vmatmul.f32.gmra.mxu0 0.0
    %v2497 = vpop.f32.mrf.mxu0
    %v2498 = vadd.f32 0.0, %v2497
    %2499 = vdwg.mxu0
    %2500 = vmatpush.msra.mxu0 %v2373
    %2501 = vmatpush.msra.mxu0 %v2369
    %2502 = vmatpush.msra.mxu0 %v2365
    %2503 = vmatpush.msra.mxu0 %v2361
    %2504 = vmatpush.msra.mxu0 %v2357
    %2505 = vmatpush.msra.mxu0 %v2353
    %2506 = vmatpush.msra.mxu0 %v2349
    %2507 = vmatpush.msra.mxu0 %v2345
    %2508 = vmatpush.msra.mxu0 %v2341
    %2509 = vmatpush.msra.mxu0 %v2337
    %2510 = vmatpush.msra.mxu0 %v2333
    %2511 = vmatpush.msra.mxu0 %v2329
    %2512 = vmatpush.msra.mxu0 %v2325
    %2513 = vmatpush.msra.mxu0 %v2321
    %2514 = vmatpush.msra.mxu0 %v2317
    %2515 = vmatpush.msra.mxu0 %v2313
    %2516 = vmatmul.f32.gmra.mxu0 0.0
    %v2517 = vpop.f32.mrf.mxu0
    %v2518 = vadd.f32 0.0, %v2517
    %2519 = vdwg.mxu0
    %2520 = vmatpush.msra.mxu0 %v2374
    %2521 = vmatpush.msra.mxu0 %v2370
    %2522 = vmatpush.msra.mxu0 %v2366
    %2523 = vmatpush.msra.mxu0 %v2362
    %2524 = vmatpush.msra.mxu0 %v2358
    %2525 = vmatpush.msra.mxu0 %v2354
    %2526 = vmatpush.msra.mxu0 %v2350
    %2527 = vmatpush.msra.mxu0 %v2346
    %2528 = vmatpush.msra.mxu0 %v2342
    %2529 = vmatpush.msra.mxu0 %v2338
    %2530 = vmatpush.msra.mxu0 %v2334
    %2531 = vmatpush.msra.mxu0 %v2330
    %2532 = vmatpush.msra.mxu0 %v2326
    %2533 = vmatpush.msra.mxu0 %v2322
    %2534 = vmatpush.msra.mxu0 %v2318
    %2535 = vmatpush.msra.mxu0 %v2314
    %2536 = vmatmul.f32.gmra.mxu0 0.0
    %v2537 = vpop.f32.mrf.mxu0
    %v2538 = vadd.f32 0.0, %v2537
    %2539 = vdwg.mxu0
    %2540 = vmatpush.msra.mxu0 %v2375
    %2541 = vmatpush.msra.mxu0 %v2371
    %2542 = vmatpush.msra.mxu0 %v2367
    %2543 = vmatpush.msra.mxu0 %v2363
    %2544 = vmatpush.msra.mxu0 %v2359
    %2545 = vmatpush.msra.mxu0 %v2355
    %2546 = vmatpush.msra.mxu0 %v2351
    %2547 = vmatpush.msra.mxu0 %v2347
    %2548 = vmatpush.msra.mxu0 %v2343
    %2549 = vmatpush.msra.mxu0 %v2339
    %2550 = vmatpush.msra.mxu0 %v2335
    %2551 = vmatpush.msra.mxu0 %v2331
    %2552 = vmatpush.msra.mxu0 %v2327
    %2553 = vmatpush.msra.mxu0 %v2323
    %2554 = vmatpush.msra.mxu0 %v2319
    %2555 = vmatpush.msra.mxu0 %v2315
    %2556 = vmatmul.f32.gmra.mxu0 0.0
    %v2557 = vpop.f32.mrf.mxu0
    %v2558 = vadd.f32 0.0, %v2557
    %2559 = vdwg.mxu0
    %v2560 = vadd.f32 %v2406, %v2498
    %v2561 = vadd.f32 %v2429, %v2518
    %v2562 = vadd.f32 %v2452, %v2538
    %v2563 = vadd.f32 %v2475, %v2558
    %v2564 = vxor.u32 %v2560, 2147483648
    %v2565 = vmul.f32 %v2564, 1.442695
    %v2566 = vpow.pop %v2565
    %v2567 = vadd.f32 %v2566, 1.0
    %v2568 = vrcp.pop %v2567
    %v2569 = vmul.f32 %v2567, %v2568
    %v2570 = vsub.f32 1.0, %v2569
    %v2571 = vmul.f32 %v2568, %v2570
    %v2572 = vadd.f32 %v2568, %v2571
    %vm2573 = vweird.f32 %v2567
    %vm2574 = vweird.f32 %v2568
    %vm2575 = vmor %vm2573, %vm2574
    %v2576 = vsel %vm2575, %v2568, %v2572
    %v2577 = vand.u32 2147483647, %v2567
    %vm2578 = vcmp.eq.f32.partialorder %v2577, 8.507059e+37
    %v2579 = vand.u32 %v2567, 2147483648
    %v2580 = vor.u32 1.1754944e-38, %v2579
    %v2581 = vsel %vm2578, %v2580, %v2576
    %v2582 = vmul.f32 1.0, %v2581
    %v2583 = vxor.u32 %v2561, 2147483648
    %v2584 = vmul.f32 %v2583, 1.442695
    %v2585 = vpow.pop %v2584
    %v2586 = vadd.f32 %v2585, 1.0
    %v2587 = vrcp.pop %v2586
    %v2588 = vmul.f32 %v2586, %v2587
    %v2589 = vsub.f32 1.0, %v2588
    %v2590 = vmul.f32 %v2587, %v2589
    %v2591 = vadd.f32 %v2587, %v2590
    %vm2592 = vweird.f32 %v2586
    %vm2593 = vweird.f32 %v2587
    %vm2594 = vmor %vm2592, %vm2593
    %v2595 = vsel %vm2594, %v2587, %v2591
    %v2596 = vand.u32 2147483647, %v2586
    %vm2597 = vcmp.eq.f32.partialorder %v2596, 8.507059e+37
    %v2598 = vand.u32 %v2586, 2147483648
    %v2599 = vor.u32 1.1754944e-38, %v2598
    %v2600 = vsel %vm2597, %v2599, %v2595
    %v2601 = vmul.f32 1.0, %v2600
    %v2602 = vtanh.pop %v2562
    %v2603 = vxor.u32 %v2563, 2147483648
    %v2604 = vmul.f32 %v2603, 1.442695
    %v2605 = vpow.pop %v2604
    %v2606 = vadd.f32 %v2605, 1.0
    %v2607 = vrcp.pop %v2606
    %v2608 = vmul.f32 %v2606, %v2607
    %v2609 = vsub.f32 1.0, %v2608
    %v2610 = vmul.f32 %v2607, %v2609
    %v2611 = vadd.f32 %v2607, %v2610
    %vm2612 = vweird.f32 %v2606
    %vm2613 = vweird.f32 %v2607
    %vm2614 = vmor %vm2612, %vm2613
    %v2615 = vsel %vm2614, %v2607, %v2611
    %v2616 = vand.u32 2147483647, %v2606
    %vm2617 = vcmp.eq.f32.partialorder %v2616, 8.507059e+37
    %v2618 = vand.u32 %v2606, 2147483648
    %v2619 = vor.u32 1.1754944e-38, %v2618
    %v2620 = vsel %vm2617, %v2619, %v2615
    %v2621 = vmul.f32 1.0, %v2620
    %v2622 = vmul.f32 %v2601, 0.0
    %v2623 = vmul.f32 %v2582, %v2602
    %v2624 = vadd.f32 %v2622, %v2623
    %v2625 = vtanh.pop %v2624
    %v2626 = vmul.f32 %v2621, %v2625
    %2627 = vmatpush.msra.mxu0 %v2372
    %2628 = vmatpush.msra.mxu0 %v2368
    %2629 = vmatpush.msra.mxu0 %v2364
    %2630 = vmatpush.msra.mxu0 %v2360
    %2631 = vmatpush.msra.mxu0 %v2356
    %2632 = vmatpush.msra.mxu0 %v2352
    %2633 = vmatpush.msra.mxu0 %v2348
    %2634 = vmatpush.msra.mxu0 %v2344
    %2635 = vmatpush.msra.mxu0 %v2340
    %2636 = vmatpush.msra.mxu0 %v2336
    %2637 = vmatpush.msra.mxu0 %v2332
    %2638 = vmatpush.msra.mxu0 %v2328
    %2639 = vmatpush.msra.mxu0 %v2324
    %2640 = vmatpush.msra.mxu0 %v2320
    %2641 = vmatpush.msra.mxu0 %v2316
    %2642 = vmatpush.msra.mxu0 %v2312
    %2643 = vmatmul.f32.gmra.mxu0 %v2626
    %v2644 = vpop.f32.mrf.mxu0
    %v2645 = vadd.f32 0.0, %v2644
    %2646 = vdwg.mxu0
    %2647 = vmatpush.msra.mxu0 %v2373
    %2648 = vmatpush.msra.mxu0 %v2369
    %2649 = vmatpush.msra.mxu0 %v2365
    %2650 = vmatpush.msra.mxu0 %v2361
    %2651 = vmatpush.msra.mxu0 %v2357
    %2652 = vmatpush.msra.mxu0 %v2353
    %2653 = vmatpush.msra.mxu0 %v2349
    %2654 = vmatpush.msra.mxu0 %v2345
    %2655 = vmatpush.msra.mxu0 %v2341
    %2656 = vmatpush.msra.mxu0 %v2337
    %2657 = vmatpush.msra.mxu0 %v2333
    %2658 = vmatpush.msra.mxu0 %v2329
    %2659 = vmatpush.msra.mxu0 %v2325
    %2660 = vmatpush.msra.mxu0 %v2321
    %2661 = vmatpush.msra.mxu0 %v2317
    %2662 = vmatpush.msra.mxu0 %v2313
    %2663 = vmatmul.f32.gmra.mxu0 %v2626
    %v2664 = vpop.f32.mrf.mxu0
    %v2665 = vadd.f32 0.0, %v2664
    %2666 = vdwg.mxu0
    %2667 = vmatpush.msra.mxu0 %v2374
    %2668 = vmatpush.msra.mxu0 %v2370
    %2669 = vmatpush.msra.mxu0 %v2366
    %2670 = vmatpush.msra.mxu0 %v2362
    %2671 = vmatpush.msra.mxu0 %v2358
    %2672 = vmatpush.msra.mxu0 %v2354
    %2673 = vmatpush.msra.mxu0 %v2350
    %2674 = vmatpush.msra.mxu0 %v2346
    %2675 = vmatpush.msra.mxu0 %v2342
    %2676 = vmatpush.msra.mxu0 %v2338
    %2677 = vmatpush.msra.mxu0 %v2334
    %2678 = vmatpush.msra.mxu0 %v2330
    %2679 = vmatpush.msra.mxu0 %v2326
    %2680 = vmatpush.msra.mxu0 %v2322
    %2681 = vmatpush.msra.mxu0 %v2318
    %2682 = vmatpush.msra.mxu0 %v2314
    %2683 = vmatmul.f32.gmra.mxu0 %v2626
    %v2684 = vpop.f32.mrf.mxu0
    %v2685 = vadd.f32 0.0, %v2684
    %2686 = vdwg.mxu0
    %2687 = vmatpush.msra.mxu0 %v2375
    %2688 = vmatpush.msra.mxu0 %v2371
    %2689 = vmatpush.msra.mxu0 %v2367
    %2690 = vmatpush.msra.mxu0 %v2363
    %2691 = vmatpush.msra.mxu0 %v2359
    %2692 = vmatpush.msra.mxu0 %v2355
    %2693 = vmatpush.msra.mxu0 %v2351
    %2694 = vmatpush.msra.mxu0 %v2347
    %2695 = vmatpush.msra.mxu0 %v2343
    %2696 = vmatpush.msra.mxu0 %v2339
    %2697 = vmatpush.msra.mxu0 %v2335
    %2698 = vmatpush.msra.mxu0 %v2331
    %2699 = vmatpush.msra.mxu0 %v2327
    %2700 = vmatpush.msra.mxu0 %v2323
    %2701 = vmatpush.msra.mxu0 %v2319
    %2702 = vmatpush.msra.mxu0 %v2315
    %2703 = vmatmul.f32.gmra.mxu0 %v2626
    %v2704 = vpop.f32.mrf.mxu0
    %v2705 = vadd.f32 0.0, %v2704
    %2706 = vdwg.mxu0
    %v2711 = vrot.slane %v2645, 6
    %v2712 = vrot.slane %v2665, 6
    %v2713 = vrot.slane %v2685, 6
    %v2714 = vrot.slane %v2705, 6
    %v2719 = vadd.f32 %v2406, %v2711
    %v2720 = vadd.f32 %v2429, %v2712
    %v2721 = vadd.f32 %v2452, %v2713
    %v2722 = vadd.f32 %v2475, %v2714
    %v2723 = vxor.u32 %v2719, 2147483648
    %v2724 = vmul.f32 %v2723, 1.442695
    %v2725 = vpow.pop %v2724
    %v2726 = vadd.f32 %v2725, 1.0
    %v2727 = vrcp.pop %v2726
    %v2728 = vmul.f32 %v2726, %v2727
    %v2729 = vsub.f32 1.0, %v2728
    %v2730 = vmul.f32 %v2727, %v2729
    %v2731 = vadd.f32 %v2727, %v2730
    %vm2732 = vweird.f32 %v2726
    %vm2733 = vweird.f32 %v2727
    %vm2734 = vmor %vm2732, %vm2733
    %v2735 = vsel %vm2734, %v2727, %v2731
    %v2736 = vand.u32 2147483647, %v2726
    %vm2737 = vcmp.eq.f32.partialorder %v2736, 8.507059e+37
    %v2738 = vand.u32 %v2726, 2147483648
    %v2739 = vor.u32 1.1754944e-38, %v2738
    %v2740 = vsel %vm2737, %v2739, %v2735
    %v2741 = vmul.f32 1.0, %v2740
    %v2742 = vxor.u32 %v2720, 2147483648
    %v2743 = vmul.f32 %v2742, 1.442695
    %v2744 = vpow.pop %v2743
    %v2745 = vadd.f32 %v2744, 1.0
    %v2746 = vrcp.pop %v2745
    %v2747 = vmul.f32 %v2745, %v2746
    %v2748 = vsub.f32 1.0, %v2747
    %v2749 = vmul.f32 %v2746, %v2748
    %v2750 = vadd.f32 %v2746, %v2749
    %vm2751 = vweird.f32 %v2745
    %vm2752 = vweird.f32 %v2746
    %vm2753 = vmor %vm2751, %vm2752
    %v2754 = vsel %vm2753, %v2746, %v2750
    %v2755 = vand.u32 2147483647, %v2745
    %vm2756 = vcmp.eq.f32.partialorder %v2755, 8.507059e+37
    %v2757 = vand.u32 %v2745, 2147483648
    %v2758 = vor.u32 1.1754944e-38, %v2757
    %v2759 = vsel %vm2756, %v2758, %v2754
    %v2760 = vmul.f32 1.0, %v2759
    %v2761 = vtanh.pop %v2721
    %v2762 = vxor.u32 %v2722, 2147483648
    %v2763 = vmul.f32 %v2762, 1.442695
    %v2764 = vpow.pop %v2763
    %v2765 = vadd.f32 %v2764, 1.0
    %v2766 = vrcp.pop %v2765
    %v2767 = vmul.f32 %v2765, %v2766
    %v2768 = vsub.f32 1.0, %v2767
    %v2769 = vmul.f32 %v2766, %v2768
    %v2770 = vadd.f32 %v2766, %v2769
    %vm2771 = vweird.f32 %v2765
    %vm2772 = vweird.f32 %v2766
    %vm2773 = vmor %vm2771, %vm2772
    %v2774 = vsel %vm2773, %v2766, %v2770
    %v2775 = vand.u32 2147483647, %v2765
    %vm2776 = vcmp.eq.f32.partialorder %v2775, 8.507059e+37
    %v2777 = vand.u32 %v2765, 2147483648
    %v2778 = vor.u32 1.1754944e-38, %v2777
    %v2779 = vsel %vm2776, %v2778, %v2774
    %v2780 = vmul.f32 1.0, %v2779
    %v2782 = vrot.slane %v2624, 6
    %v2784 = vmul.f32 %v2760, %v2782
    %v2785 = vmul.f32 %v2741, %v2761
    %v2786 = vadd.f32 %v2784, %v2785
    %v2787 = vtanh.pop %v2786
    %v2788 = vmul.f32 %v2780, %v2787
    %v2790 = vrot.slane %v2788, 2
    %2792 = vmatpush.msra.mxu0 %v2372
    %2793 = vmatpush.msra.mxu0 %v2368
    %2794 = vmatpush.msra.mxu0 %v2364
    %2795 = vmatpush.msra.mxu0 %v2360
    %2796 = vmatpush.msra.mxu0 %v2356
    %2797 = vmatpush.msra.mxu0 %v2352
    %2798 = vmatpush.msra.mxu0 %v2348
    %2799 = vmatpush.msra.mxu0 %v2344
    %2800 = vmatpush.msra.mxu0 %v2340
    %2801 = vmatpush.msra.mxu0 %v2336
    %2802 = vmatpush.msra.mxu0 %v2332
    %2803 = vmatpush.msra.mxu0 %v2328
    %2804 = vmatpush.msra.mxu0 %v2324
    %2805 = vmatpush.msra.mxu0 %v2320
    %2806 = vmatpush.msra.mxu0 %v2316
    %2807 = vmatpush.msra.mxu0 %v2312
    %2808 = vmatmul.f32.gmra.mxu0 %v2790
    %v2809 = vpop.f32.mrf.mxu0
    %v2810 = vadd.f32 0.0, %v2809
    %2811 = vdwg.mxu0
    %2812 = vmatpush.msra.mxu0 %v2373
    %2813 = vmatpush.msra.mxu0 %v2369
    %2814 = vmatpush.msra.mxu0 %v2365
    %2815 = vmatpush.msra.mxu0 %v2361
    %2816 = vmatpush.msra.mxu0 %v2357
    %2817 = vmatpush.msra.mxu0 %v2353
    %2818 = vmatpush.msra.mxu0 %v2349
    %2819 = vmatpush.msra.mxu0 %v2345
    %2820 = vmatpush.msra.mxu0 %v2341
    %2821 = vmatpush.msra.mxu0 %v2337
    %2822 = vmatpush.msra.mxu0 %v2333
    %2823 = vmatpush.msra.mxu0 %v2329
    %2824 = vmatpush.msra.mxu0 %v2325
    %2825 = vmatpush.msra.mxu0 %v2321
    %2826 = vmatpush.msra.mxu0 %v2317
    %2827 = vmatpush.msra.mxu0 %v2313
    %2828 = vmatmul.f32.gmra.mxu0 %v2790
    %v2829 = vpop.f32.mrf.mxu0
    %v2830 = vadd.f32 0.0, %v2829
    %2831 = vdwg.mxu0
    %2832 = vmatpush.msra.mxu0 %v2374
    %2833 = vmatpush.msra.mxu0 %v2370
    %2834 = vmatpush.msra.mxu0 %v2366
    %2835 = vmatpush.msra.mxu0 %v2362
    %2836 = vmatpush.msra.mxu0 %v2358
    %2837 = vmatpush.msra.mxu0 %v2354
    %2838 = vmatpush.msra.mxu0 %v2350
    %2839 = vmatpush.msra.mxu0 %v2346
    %2840 = vmatpush.msra.mxu0 %v2342
    %2841 = vmatpush.msra.mxu0 %v2338
    %2842 = vmatpush.msra.mxu0 %v2334
    %2843 = vmatpush.msra.mxu0 %v2330
    %2844 = vmatpush.msra.mxu0 %v2326
    %2845 = vmatpush.msra.mxu0 %v2322
    %2846 = vmatpush.msra.mxu0 %v2318
    %2847 = vmatpush.msra.mxu0 %v2314
    %2848 = vmatmul.f32.gmra.mxu0 %v2790
    %v2849 = vpop.f32.mrf.mxu0
    %v2850 = vadd.f32 0.0, %v2849
    %2851 = vdwg.mxu0
    %2852 = vmatpush.msra.mxu0 %v2375
    %2853 = vmatpush.msra.mxu0 %v2371
    %2854 = vmatpush.msra.mxu0 %v2367
    %2855 = vmatpush.msra.mxu0 %v2363
    %2856 = vmatpush.msra.mxu0 %v2359
    %2857 = vmatpush.msra.mxu0 %v2355
    %2858 = vmatpush.msra.mxu0 %v2351
    %2859 = vmatpush.msra.mxu0 %v2347
    %2860 = vmatpush.msra.mxu0 %v2343
    %2861 = vmatpush.msra.mxu0 %v2339
    %2862 = vmatpush.msra.mxu0 %v2335
    %2863 = vmatpush.msra.mxu0 %v2331
    %2864 = vmatpush.msra.mxu0 %v2327
    %2865 = vmatpush.msra.mxu0 %v2323
    %2866 = vmatpush.msra.mxu0 %v2319
    %2867 = vmatpush.msra.mxu0 %v2315
    %2868 = vmatmul.f32.gmra.mxu0 %v2790
    %v2869 = vpop.f32.mrf.mxu0
    %v2870 = vadd.f32 0.0, %v2869
    %2871 = vdwg.mxu0
    %v2876 = vrot.slane %v2810, 4
    %v2877 = vrot.slane %v2830, 4
    %v2878 = vrot.slane %v2850, 4
    %v2879 = vrot.slane %v2870, 4
    %v2884 = vadd.f32 %v2406, %v2876
    %v2885 = vadd.f32 %v2429, %v2877
    %v2886 = vadd.f32 %v2452, %v2878
    %v2887 = vadd.f32 %v2475, %v2879
    %v2888 = vxor.u32 %v2884, 2147483648
    %v2889 = vmul.f32 %v2888, 1.442695
    %v2890 = vpow.pop %v2889
    %v2891 = vadd.f32 %v2890, 1.0
    %v2892 = vrcp.pop %v2891
    %v2893 = vmul.f32 %v2891, %v2892
    %v2894 = vsub.f32 1.0, %v2893
    %v2895 = vmul.f32 %v2892, %v2894
    %v2896 = vadd.f32 %v2892, %v2895
    %vm2897 = vweird.f32 %v2891
    %vm2898 = vweird.f32 %v2892
    %vm2899 = vmor %vm2897, %vm2898
    %v2900 = vsel %vm2899, %v2892, %v2896
    %v2901 = vand.u32 2147483647, %v2891
    %vm2902 = vcmp.eq.f32.partialorder %v2901, 8.507059e+37
    %v2903 = vand.u32 %v2891, 2147483648
    %v2904 = vor.u32 1.1754944e-38, %v2903
    %v2905 = vsel %vm2902, %v2904, %v2900
    %v2906 = vmul.f32 1.0, %v2905
    %v2907 = vxor.u32 %v2885, 2147483648
    %v2908 = vmul.f32 %v2907, 1.442695
    %v2909 = vpow.pop %v2908
    %v2910 = vadd.f32 %v2909, 1.0
    %v2911 = vrcp.pop %v2910
    %v2912 = vmul.f32 %v2910, %v2911
    %v2913 = vsub.f32 1.0, %v2912
    %v2914 = vmul.f32 %v2911, %v2913
    %v2915 = vadd.f32 %v2911, %v2914
    %vm2916 = vweird.f32 %v2910
    %vm2917 = vweird.f32 %v2911
    %vm2918 = vmor %vm2916, %vm2917
    %v2919 = vsel %vm2918, %v2911, %v2915
    %v2920 = vand.u32 2147483647, %v2910
    %vm2921 = vcmp.eq.f32.partialorder %v2920, 8.507059e+37
    %v2922 = vand.u32 %v2910, 2147483648
    %v2923 = vor.u32 1.1754944e-38, %v2922
    %v2924 = vsel %vm2921, %v2923, %v2919
    %v2925 = vmul.f32 1.0, %v2924
    %v2926 = vtanh.pop %v2886
    %v2927 = vxor.u32 %v2887, 2147483648
    %v2928 = vmul.f32 %v2927, 1.442695
    %v2929 = vpow.pop %v2928
    %v2930 = vadd.f32 %v2929, 1.0
    %v2931 = vrcp.pop %v2930
    %v2932 = vmul.f32 %v2930, %v2931
    %v2933 = vsub.f32 1.0, %v2932
    %v2934 = vmul.f32 %v2931, %v2933
    %v2935 = vadd.f32 %v2931, %v2934
    %vm2936 = vweird.f32 %v2930
    %vm2937 = vweird.f32 %v2931
    %vm2938 = vmor %vm2936, %vm2937
    %v2939 = vsel %vm2938, %v2931, %v2935
    %v2940 = vand.u32 2147483647, %v2930
    %vm2941 = vcmp.eq.f32.partialorder %v2940, 8.507059e+37
    %v2942 = vand.u32 %v2930, 2147483648
    %v2943 = vor.u32 1.1754944e-38, %v2942
    %v2944 = vsel %vm2941, %v2943, %v2939
    %v2945 = vmul.f32 1.0, %v2944
    %v2947 = vrot.slane %v2786, 6
    %v2949 = vmul.f32 %v2925, %v2947
    %v2950 = vmul.f32 %v2906, %v2926
    %v2951 = vadd.f32 %v2949, %v2950
    %v2952 = vtanh.pop %v2951
    %v2953 = vmul.f32 %v2945, %v2952
    %v2955 = vrot.slane %v2953, 4
    %2957 = vmatpush.msra.mxu0 %v2372
    %2958 = vmatpush.msra.mxu0 %v2368
    %2959 = vmatpush.msra.mxu0 %v2364
    %2960 = vmatpush.msra.mxu0 %v2360
    %2961 = vmatpush.msra.mxu0 %v2356
    %2962 = vmatpush.msra.mxu0 %v2352
    %2963 = vmatpush.msra.mxu0 %v2348
    %2964 = vmatpush.msra.mxu0 %v2344
    %2965 = vmatpush.msra.mxu0 %v2340
    %2966 = vmatpush.msra.mxu0 %v2336
    %2967 = vmatpush.msra.mxu0 %v2332
    %2968 = vmatpush.msra.mxu0 %v2328
    %2969 = vmatpush.msra.mxu0 %v2324
    %2970 = vmatpush.msra.mxu0 %v2320
    %2971 = vmatpush.msra.mxu0 %v2316
    %2972 = vmatpush.msra.mxu0 %v2312
    %2973 = vmatmul.f32.gmra.mxu0 %v2955
    %v2974 = vpop.f32.mrf.mxu0
    %v2975 = vadd.f32 0.0, %v2974
    %2976 = vdwg.mxu0
    %2977 = vmatpush.msra.mxu0 %v2373
    %2978 = vmatpush.msra.mxu0 %v2369
    %2979 = vmatpush.msra.mxu0 %v2365
    %2980 = vmatpush.msra.mxu0 %v2361
    %2981 = vmatpush.msra.mxu0 %v2357
    %2982 = vmatpush.msra.mxu0 %v2353
    %2983 = vmatpush.msra.mxu0 %v2349
    %2984 = vmatpush.msra.mxu0 %v2345
    %2985 = vmatpush.msra.mxu0 %v2341
    %2986 = vmatpush.msra.mxu0 %v2337
    %2987 = vmatpush.msra.mxu0 %v2333
    %2988 = vmatpush.msra.mxu0 %v2329
    %2989 = vmatpush.msra.mxu0 %v2325
    %2990 = vmatpush.msra.mxu0 %v2321
    %2991 = vmatpush.msra.mxu0 %v2317
    %2992 = vmatpush.msra.mxu0 %v2313
    %2993 = vmatmul.f32.gmra.mxu0 %v2955
    %v2994 = vpop.f32.mrf.mxu0
    %v2995 = vadd.f32 0.0, %v2994
    %2996 = vdwg.mxu0
    %2997 = vmatpush.msra.mxu0 %v2374
    %2998 = vmatpush.msra.mxu0 %v2370
    %2999 = vmatpush.msra.mxu0 %v2366
    %3000 = vmatpush.msra.mxu0 %v2362
    %3001 = vmatpush.msra.mxu0 %v2358
    %3002 = vmatpush.msra.mxu0 %v2354
    %3003 = vmatpush.msra.mxu0 %v2350
    %3004 = vmatpush.msra.mxu0 %v2346
    %3005 = vmatpush.msra.mxu0 %v2342
    %3006 = vmatpush.msra.mxu0 %v2338
    %3007 = vmatpush.msra.mxu0 %v2334
    %3008 = vmatpush.msra.mxu0 %v2330
    %3009 = vmatpush.msra.mxu0 %v2326
    %3010 = vmatpush.msra.mxu0 %v2322
    %3011 = vmatpush.msra.mxu0 %v2318
    %3012 = vmatpush.msra.mxu0 %v2314
    %3013 = vmatmul.f32.gmra.mxu0 %v2955
    %v3014 = vpop.f32.mrf.mxu0
    %v3015 = vadd.f32 0.0, %v3014
    %3016 = vdwg.mxu0
    %3017 = vmatpush.msra.mxu0 %v2375
    %3018 = vmatpush.msra.mxu0 %v2371
    %3019 = vmatpush.msra.mxu0 %v2367
    %3020 = vmatpush.msra.mxu0 %v2363
    %3021 = vmatpush.msra.mxu0 %v2359
    %3022 = vmatpush.msra.mxu0 %v2355
    %3023 = vmatpush.msra.mxu0 %v2351
    %3024 = vmatpush.msra.mxu0 %v2347
    %3025 = vmatpush.msra.mxu0 %v2343
    %3026 = vmatpush.msra.mxu0 %v2339
    %3027 = vmatpush.msra.mxu0 %v2335
    %3028 = vmatpush.msra.mxu0 %v2331
    %3029 = vmatpush.msra.mxu0 %v2327
    %3030 = vmatpush.msra.mxu0 %v2323
    %3031 = vmatpush.msra.mxu0 %v2319
    %3032 = vmatpush.msra.mxu0 %v2315
    %3033 = vmatmul.f32.gmra.mxu0 %v2955
    %v3034 = vpop.f32.mrf.mxu0
    %v3035 = vadd.f32 0.0, %v3034
    %3036 = vdwg.mxu0
    %v3041 = vrot.slane %v2975, 2
    %v3042 = vrot.slane %v2995, 2
    %v3043 = vrot.slane %v3015, 2
    %v3044 = vrot.slane %v3035, 2
    %v3049 = vadd.f32 %v2406, %v3041
    %v3050 = vadd.f32 %v2429, %v3042
    %v3051 = vadd.f32 %v2452, %v3043
    %v3052 = vadd.f32 %v2475, %v3044
    %v3053 = vxor.u32 %v3049, 2147483648
    %v3054 = vmul.f32 %v3053, 1.442695
    %v3055 = vpow.pop %v3054
    %v3056 = vadd.f32 %v3055, 1.0
    %v3057 = vrcp.pop %v3056
    %v3058 = vmul.f32 %v3056, %v3057
    %v3059 = vsub.f32 1.0, %v3058
    %v3060 = vmul.f32 %v3057, %v3059
    %v3061 = vadd.f32 %v3057, %v3060
    %vm3062 = vweird.f32 %v3056
    %vm3063 = vweird.f32 %v3057
    %vm3064 = vmor %vm3062, %vm3063
    %v3065 = vsel %vm3064, %v3057, %v3061
    %v3066 = vand.u32 2147483647, %v3056
    %vm3067 = vcmp.eq.f32.partialorder %v3066, 8.507059e+37
    %v3068 = vand.u32 %v3056, 2147483648
    %v3069 = vor.u32 1.1754944e-38, %v3068
    %v3070 = vsel %vm3067, %v3069, %v3065
    %v3071 = vmul.f32 1.0, %v3070
    %v3072 = vxor.u32 %v3050, 2147483648
    %v3073 = vmul.f32 %v3072, 1.442695
    %v3074 = vpow.pop %v3073
    %v3075 = vadd.f32 %v3074, 1.0
    %v3076 = vrcp.pop %v3075
    %v3077 = vmul.f32 %v3075, %v3076
    %v3078 = vsub.f32 1.0, %v3077
    %v3079 = vmul.f32 %v3076, %v3078
    %v3080 = vadd.f32 %v3076, %v3079
    %vm3081 = vweird.f32 %v3075
    %vm3082 = vweird.f32 %v3076
    %vm3083 = vmor %vm3081, %vm3082
    %v3084 = vsel %vm3083, %v3076, %v3080
    %v3085 = vand.u32 2147483647, %v3075
    %vm3086 = vcmp.eq.f32.partialorder %v3085, 8.507059e+37
    %v3087 = vand.u32 %v3075, 2147483648
    %v3088 = vor.u32 1.1754944e-38, %v3087
    %v3089 = vsel %vm3086, %v3088, %v3084
    %v3090 = vmul.f32 1.0, %v3089
    %v3091 = vtanh.pop %v3051
    %v3092 = vxor.u32 %v3052, 2147483648
    %v3093 = vmul.f32 %v3092, 1.442695
    %v3094 = vpow.pop %v3093
    %v3095 = vadd.f32 %v3094, 1.0
    %v3096 = vrcp.pop %v3095
    %v3097 = vmul.f32 %v3095, %v3096
    %v3098 = vsub.f32 1.0, %v3097
    %v3099 = vmul.f32 %v3096, %v3098
    %v3100 = vadd.f32 %v3096, %v3099
    %vm3101 = vweird.f32 %v3095
    %vm3102 = vweird.f32 %v3096
    %vm3103 = vmor %vm3101, %vm3102
    %v3104 = vsel %vm3103, %v3096, %v3100
    %v3105 = vand.u32 2147483647, %v3095
    %vm3106 = vcmp.eq.f32.partialorder %v3105, 8.507059e+37
    %v3107 = vand.u32 %v3095, 2147483648
    %v3108 = vor.u32 1.1754944e-38, %v3107
    %v3109 = vsel %vm3106, %v3108, %v3104
    %v3110 = vmul.f32 1.0, %v3109
    %v3112 = vrot.slane %v2951, 6
    %v3114 = vmul.f32 %v3090, %v3112
    %v3115 = vmul.f32 %v3071, %v3091
    %v3116 = vadd.f32 %v3114, %v3115
    %v3117 = vtanh.pop %v3116
    %v3118 = vmul.f32 %v3110, %v3117
    %v3120 = vrot.slane %v3118, 6
    %3122 = vmatpush.msra.mxu0 %v2372
    %3123 = vmatpush.msra.mxu0 %v2368
    %3124 = vmatpush.msra.mxu0 %v2364
    %3125 = vmatpush.msra.mxu0 %v2360
    %3126 = vmatpush.msra.mxu0 %v2356
    %3127 = vmatpush.msra.mxu0 %v2352
    %3128 = vmatpush.msra.mxu0 %v2348
    %3129 = vmatpush.msra.mxu0 %v2344
    %3130 = vmatpush.msra.mxu0 %v2340
    %3131 = vmatpush.msra.mxu0 %v2336
    %3132 = vmatpush.msra.mxu0 %v2332
    %3133 = vmatpush.msra.mxu0 %v2328
    %3134 = vmatpush.msra.mxu0 %v2324
    %3135 = vmatpush.msra.mxu0 %v2320
    %3136 = vmatpush.msra.mxu0 %v2316
    %3137 = vmatpush.msra.mxu0 %v2312
    %3138 = vmatmul.f32.gmra.mxu0 %v3120
    %v3139 = vpop.f32.mrf.mxu0
    %v3140 = vadd.f32 0.0, %v3139
    %3141 = vdwg.mxu0
    %3142 = vmatpush.msra.mxu0 %v2373
    %3143 = vmatpush.msra.mxu0 %v2369
    %3144 = vmatpush.msra.mxu0 %v2365
    %3145 = vmatpush.msra.mxu0 %v2361
    %3146 = vmatpush.msra.mxu0 %v2357
    %3147 = vmatpush.msra.mxu0 %v2353
    %3148 = vmatpush.msra.mxu0 %v2349
    %3149 = vmatpush.msra.mxu0 %v2345
    %3150 = vmatpush.msra.mxu0 %v2341
    %3151 = vmatpush.msra.mxu0 %v2337
    %3152 = vmatpush.msra.mxu0 %v2333
    %3153 = vmatpush.msra.mxu0 %v2329
    %3154 = vmatpush.msra.mxu0 %v2325
    %3155 = vmatpush.msra.mxu0 %v2321
    %3156 = vmatpush.msra.mxu0 %v2317
    %3157 = vmatpush.msra.mxu0 %v2313
    %3158 = vmatmul.f32.gmra.mxu0 %v3120
    %v3159 = vpop.f32.mrf.mxu0
    %v3160 = vadd.f32 0.0, %v3159
    %3161 = vdwg.mxu0
    %3162 = vmatpush.msra.mxu0 %v2374
    %3163 = vmatpush.msra.mxu0 %v2370
    %3164 = vmatpush.msra.mxu0 %v2366
    %3165 = vmatpush.msra.mxu0 %v2362
    %3166 = vmatpush.msra.mxu0 %v2358
    %3167 = vmatpush.msra.mxu0 %v2354
    %3168 = vmatpush.msra.mxu0 %v2350
    %3169 = vmatpush.msra.mxu0 %v2346
    %3170 = vmatpush.msra.mxu0 %v2342
    %3171 = vmatpush.msra.mxu0 %v2338
    %3172 = vmatpush.msra.mxu0 %v2334
    %3173 = vmatpush.msra.mxu0 %v2330
    %3174 = vmatpush.msra.mxu0 %v2326
    %3175 = vmatpush.msra.mxu0 %v2322
    %3176 = vmatpush.msra.mxu0 %v2318
    %3177 = vmatpush.msra.mxu0 %v2314
    %3178 = vmatmul.f32.gmra.mxu0 %v3120
    %v3179 = vpop.f32.mrf.mxu0
    %v3180 = vadd.f32 0.0, %v3179
    %3181 = vdwg.mxu0
    %3182 = vmatpush.msra.mxu0 %v2375
    %3183 = vmatpush.msra.mxu0 %v2371
    %3184 = vmatpush.msra.mxu0 %v2367
    %3185 = vmatpush.msra.mxu0 %v2363
    %3186 = vmatpush.msra.mxu0 %v2359
    %3187 = vmatpush.msra.mxu0 %v2355
    %3188 = vmatpush.msra.mxu0 %v2351
    %3189 = vmatpush.msra.mxu0 %v2347
    %3190 = vmatpush.msra.mxu0 %v2343
    %3191 = vmatpush.msra.mxu0 %v2339
    %3192 = vmatpush.msra.mxu0 %v2335
    %3193 = vmatpush.msra.mxu0 %v2331
    %3194 = vmatpush.msra.mxu0 %v2327
    %3195 = vmatpush.msra.mxu0 %v2323
    %3196 = vmatpush.msra.mxu0 %v2319
    %3197 = vmatpush.msra.mxu0 %v2315
    %3198 = vmatmul.f32.gmra.mxu0 %v3120
    %v3199 = vpop.f32.mrf.mxu0
    %v3200 = vadd.f32 0.0, %v3199
    %3201 = vdwg.mxu0
    %v3202 = vadd.f32 %v2409, %v3140
    %v3203 = vadd.f32 %v2432, %v3160
    %v3204 = vadd.f32 %v2455, %v3180
    %v3205 = vadd.f32 %v2478, %v3200
    %v3206 = vxor.u32 %v3202, 2147483648
    %v3207 = vmul.f32 %v3206, 1.442695
    %v3208 = vpow.pop %v3207
    %v3209 = vadd.f32 %v3208, 1.0
    %v3210 = vrcp.pop %v3209
    %v3211 = vmul.f32 %v3209, %v3210
    %v3212 = vsub.f32 1.0, %v3211
    %v3213 = vmul.f32 %v3210, %v3212
    %v3214 = vadd.f32 %v3210, %v3213
    %vm3215 = vweird.f32 %v3209
    %vm3216 = vweird.f32 %v3210
    %vm3217 = vmor %vm3215, %vm3216
    %v3218 = vsel %vm3217, %v3210, %v3214
    %v3219 = vand.u32 2147483647, %v3209
    %vm3220 = vcmp.eq.f32.partialorder %v3219, 8.507059e+37
    %v3221 = vand.u32 %v3209, 2147483648
    %v3222 = vor.u32 1.1754944e-38, %v3221
    %v3223 = vsel %vm3220, %v3222, %v3218
    %v3224 = vmul.f32 1.0, %v3223
    %v3225 = vxor.u32 %v3203, 2147483648
    %v3226 = vmul.f32 %v3225, 1.442695
    %v3227 = vpow.pop %v3226
    %v3228 = vadd.f32 %v3227, 1.0
    %v3229 = vrcp.pop %v3228
    %v3230 = vmul.f32 %v3228, %v3229
    %v3231 = vsub.f32 1.0, %v3230
    %v3232 = vmul.f32 %v3229, %v3231
    %v3233 = vadd.f32 %v3229, %v3232
    %vm3234 = vweird.f32 %v3228
    %vm3235 = vweird.f32 %v3229
    %vm3236 = vmor %vm3234, %vm3235
    %v3237 = vsel %vm3236, %v3229, %v3233
    %v3238 = vand.u32 2147483647, %v3228
    %vm3239 = vcmp.eq.f32.partialorder %v3238, 8.507059e+37
    %v3240 = vand.u32 %v3228, 2147483648
    %v3241 = vor.u32 1.1754944e-38, %v3240
    %v3242 = vsel %vm3239, %v3241, %v3237
    %v3243 = vmul.f32 1.0, %v3242
    %v3244 = vtanh.pop %v3204
    %v3245 = vxor.u32 %v3205, 2147483648
    %v3246 = vmul.f32 %v3245, 1.442695
    %v3247 = vpow.pop %v3246
    %v3248 = vadd.f32 %v3247, 1.0
    %v3249 = vrcp.pop %v3248
    %v3250 = vmul.f32 %v3248, %v3249
    %v3251 = vsub.f32 1.0, %v3250
    %v3252 = vmul.f32 %v3249, %v3251
    %v3253 = vadd.f32 %v3249, %v3252
    %vm3254 = vweird.f32 %v3248
    %vm3255 = vweird.f32 %v3249
    %vm3256 = vmor %vm3254, %vm3255
    %v3257 = vsel %vm3256, %v3249, %v3253
    %v3258 = vand.u32 2147483647, %v3248
    %vm3259 = vcmp.eq.f32.partialorder %v3258, 8.507059e+37
    %v3260 = vand.u32 %v3248, 2147483648
    %v3261 = vor.u32 1.1754944e-38, %v3260
    %v3262 = vsel %vm3259, %v3261, %v3257
    %v3263 = vmul.f32 1.0, %v3262
    %v3265 = vrot.slane %v3116, 6
    %v3267 = vmul.f32 %v3243, %v3265
    %v3268 = vmul.f32 %v3224, %v3244
    %v3269 = vadd.f32 %v3267, %v3268
    %v3270 = vtanh.pop %v3269
    %v3271 = vmul.f32 %v3263, %v3270
    %3272 = vmatpush.msra.mxu0 %v2372
    %3273 = vmatpush.msra.mxu0 %v2368
    %3274 = vmatpush.msra.mxu0 %v2364
    %3275 = vmatpush.msra.mxu0 %v2360
    %3276 = vmatpush.msra.mxu0 %v2356
    %3277 = vmatpush.msra.mxu0 %v2352
    %3278 = vmatpush.msra.mxu0 %v2348
    %3279 = vmatpush.msra.mxu0 %v2344
    %3280 = vmatpush.msra.mxu0 %v2340
    %3281 = vmatpush.msra.mxu0 %v2336
    %3282 = vmatpush.msra.mxu0 %v2332
    %3283 = vmatpush.msra.mxu0 %v2328
    %3284 = vmatpush.msra.mxu0 %v2324
    %3285 = vmatpush.msra.mxu0 %v2320
    %3286 = vmatpush.msra.mxu0 %v2316
    %3287 = vmatpush.msra.mxu0 %v2312
    %3288 = vmatmul.f32.gmra.mxu0 %v3271
    %v3289 = vpop.f32.mrf.mxu0
    %v3290 = vadd.f32 0.0, %v3289
    %3291 = vdwg.mxu0
    %3292 = vmatpush.msra.mxu0 %v2373
    %3293 = vmatpush.msra.mxu0 %v2369
    %3294 = vmatpush.msra.mxu0 %v2365
    %3295 = vmatpush.msra.mxu0 %v2361
    %3296 = vmatpush.msra.mxu0 %v2357
    %3297 = vmatpush.msra.mxu0 %v2353
    %3298 = vmatpush.msra.mxu0 %v2349
    %3299 = vmatpush.msra.mxu0 %v2345
    %3300 = vmatpush.msra.mxu0 %v2341
    %3301 = vmatpush.msra.mxu0 %v2337
    %3302 = vmatpush.msra.mxu0 %v2333
    %3303 = vmatpush.msra.mxu0 %v2329
    %3304 = vmatpush.msra.mxu0 %v2325
    %3305 = vmatpush.msra.mxu0 %v2321
    %3306 = vmatpush.msra.mxu0 %v2317
    %3307 = vmatpush.msra.mxu0 %v2313
    %3308 = vmatmul.f32.gmra.mxu0 %v3271
    %v3309 = vpop.f32.mrf.mxu0
    %v3310 = vadd.f32 0.0, %v3309
    %3311 = vdwg.mxu0
    %3312 = vmatpush.msra.mxu0 %v2374
    %3313 = vmatpush.msra.mxu0 %v2370
    %3314 = vmatpush.msra.mxu0 %v2366
    %3315 = vmatpush.msra.mxu0 %v2362
    %3316 = vmatpush.msra.mxu0 %v2358
    %3317 = vmatpush.msra.mxu0 %v2354
    %3318 = vmatpush.msra.mxu0 %v2350
    %3319 = vmatpush.msra.mxu0 %v2346
    %3320 = vmatpush.msra.mxu0 %v2342
    %3321 = vmatpush.msra.mxu0 %v2338
    %3322 = vmatpush.msra.mxu0 %v2334
    %3323 = vmatpush.msra.mxu0 %v2330
    %3324 = vmatpush.msra.mxu0 %v2326
    %3325 = vmatpush.msra.mxu0 %v2322
    %3326 = vmatpush.msra.mxu0 %v2318
    %3327 = vmatpush.msra.mxu0 %v2314
    %3328 = vmatmul.f32.gmra.mxu0 %v3271
    %v3329 = vpop.f32.mrf.mxu0
    %v3330 = vadd.f32 0.0, %v3329
    %3331 = vdwg.mxu0
    %3332 = vmatpush.msra.mxu0 %v2375
    %3333 = vmatpush.msra.mxu0 %v2371
    %3334 = vmatpush.msra.mxu0 %v2367
    %3335 = vmatpush.msra.mxu0 %v2363
    %3336 = vmatpush.msra.mxu0 %v2359
    %3337 = vmatpush.msra.mxu0 %v2355
    %3338 = vmatpush.msra.mxu0 %v2351
    %3339 = vmatpush.msra.mxu0 %v2347
    %3340 = vmatpush.msra.mxu0 %v2343
    %3341 = vmatpush.msra.mxu0 %v2339
    %3342 = vmatpush.msra.mxu0 %v2335
    %3343 = vmatpush.msra.mxu0 %v2331
    %3344 = vmatpush.msra.mxu0 %v2327
    %3345 = vmatpush.msra.mxu0 %v2323
    %3346 = vmatpush.msra.mxu0 %v2319
    %3347 = vmatpush.msra.mxu0 %v2315
    %3348 = vmatmul.f32.gmra.mxu0 %v3271
    %v3349 = vpop.f32.mrf.mxu0
    %v3350 = vadd.f32 0.0, %v3349
    %3351 = vdwg.mxu0
    %v3356 = vrot.slane %v3290, 6
    %v3357 = vrot.slane %v3310, 6
    %v3358 = vrot.slane %v3330, 6
    %v3359 = vrot.slane %v3350, 6
    %v3364 = vadd.f32 %v2409, %v3356
    %v3365 = vadd.f32 %v2432, %v3357
    %v3366 = vadd.f32 %v2455, %v3358
    %v3367 = vadd.f32 %v2478, %v3359
    %v3368 = vxor.u32 %v3364, 2147483648
    %v3369 = vmul.f32 %v3368, 1.442695
    %v3370 = vpow.pop %v3369
    %v3371 = vadd.f32 %v3370, 1.0
    %v3372 = vrcp.pop %v3371
    %v3373 = vmul.f32 %v3371, %v3372
    %v3374 = vsub.f32 1.0, %v3373
    %v3375 = vmul.f32 %v3372, %v3374
    %v3376 = vadd.f32 %v3372, %v3375
    %vm3377 = vweird.f32 %v3371
    %vm3378 = vweird.f32 %v3372
    %vm3379 = vmor %vm3377, %vm3378
    %v3380 = vsel %vm3379, %v3372, %v3376
    %v3381 = vand.u32 2147483647, %v3371
    %vm3382 = vcmp.eq.f32.partialorder %v3381, 8.507059e+37
    %v3383 = vand.u32 %v3371, 2147483648
    %v3384 = vor.u32 1.1754944e-38, %v3383
    %v3385 = vsel %vm3382, %v3384, %v3380
    %v3386 = vmul.f32 1.0, %v3385
    %v3387 = vxor.u32 %v3365, 2147483648
    %v3388 = vmul.f32 %v3387, 1.442695
    %v3389 = vpow.pop %v3388
    %v3390 = vadd.f32 %v3389, 1.0
    %v3391 = vrcp.pop %v3390
    %v3392 = vmul.f32 %v3390, %v3391
    %v3393 = vsub.f32 1.0, %v3392
    %v3394 = vmul.f32 %v3391, %v3393
    %v3395 = vadd.f32 %v3391, %v3394
    %vm3396 = vweird.f32 %v3390
    %vm3397 = vweird.f32 %v3391
    %vm3398 = vmor %vm3396, %vm3397
    %v3399 = vsel %vm3398, %v3391, %v3395
    %v3400 = vand.u32 2147483647, %v3390
    %vm3401 = vcmp.eq.f32.partialorder %v3400, 8.507059e+37
    %v3402 = vand.u32 %v3390, 2147483648
    %v3403 = vor.u32 1.1754944e-38, %v3402
    %v3404 = vsel %vm3401, %v3403, %v3399
    %v3405 = vmul.f32 1.0, %v3404
    %v3406 = vtanh.pop %v3366
    %v3407 = vxor.u32 %v3367, 2147483648
    %v3408 = vmul.f32 %v3407, 1.442695
    %v3409 = vpow.pop %v3408
    %v3410 = vadd.f32 %v3409, 1.0
    %v3411 = vrcp.pop %v3410
    %v3412 = vmul.f32 %v3410, %v3411
    %v3413 = vsub.f32 1.0, %v3412
    %v3414 = vmul.f32 %v3411, %v3413
    %v3415 = vadd.f32 %v3411, %v3414
    %vm3416 = vweird.f32 %v3410
    %vm3417 = vweird.f32 %v3411
    %vm3418 = vmor %vm3416, %vm3417
    %v3419 = vsel %vm3418, %v3411, %v3415
    %v3420 = vand.u32 2147483647, %v3410
    %vm3421 = vcmp.eq.f32.partialorder %v3420, 8.507059e+37
    %v3422 = vand.u32 %v3410, 2147483648
    %v3423 = vor.u32 1.1754944e-38, %v3422
    %v3424 = vsel %vm3421, %v3423, %v3419
    %v3425 = vmul.f32 1.0, %v3424
    %v3427 = vrot.slane %v3269, 6
    %v3429 = vmul.f32 %v3405, %v3427
    %v3430 = vmul.f32 %v3386, %v3406
    %v3431 = vadd.f32 %v3429, %v3430
    %v3432 = vtanh.pop %v3431
    %v3433 = vmul.f32 %v3425, %v3432
    %v3435 = vrot.slane %v3433, 2
    %3437 = vmatpush.msra.mxu0 %v2372
    %3438 = vmatpush.msra.mxu0 %v2368
    %3439 = vmatpush.msra.mxu0 %v2364
    %3440 = vmatpush.msra.mxu0 %v2360
    %3441 = vmatpush.msra.mxu0 %v2356
    %3442 = vmatpush.msra.mxu0 %v2352
    %3443 = vmatpush.msra.mxu0 %v2348
    %3444 = vmatpush.msra.mxu0 %v2344
    %3445 = vmatpush.msra.mxu0 %v2340
    %3446 = vmatpush.msra.mxu0 %v2336
    %3447 = vmatpush.msra.mxu0 %v2332
    %3448 = vmatpush.msra.mxu0 %v2328
    %3449 = vmatpush.msra.mxu0 %v2324
    %3450 = vmatpush.msra.mxu0 %v2320
    %3451 = vmatpush.msra.mxu0 %v2316
    %3452 = vmatpush.msra.mxu0 %v2312
    %3453 = vmatmul.f32.gmra.mxu0 %v3435
    %v3454 = vpop.f32.mrf.mxu0
    %v3455 = vadd.f32 0.0, %v3454
    %3456 = vdwg.mxu0
    %3457 = vmatpush.msra.mxu0 %v2373
    %3458 = vmatpush.msra.mxu0 %v2369
    %3459 = vmatpush.msra.mxu0 %v2365
    %3460 = vmatpush.msra.mxu0 %v2361
    %3461 = vmatpush.msra.mxu0 %v2357
    %3462 = vmatpush.msra.mxu0 %v2353
    %3463 = vmatpush.msra.mxu0 %v2349
    %3464 = vmatpush.msra.mxu0 %v2345
    %3465 = vmatpush.msra.mxu0 %v2341
    %3466 = vmatpush.msra.mxu0 %v2337
    %3467 = vmatpush.msra.mxu0 %v2333
    %3468 = vmatpush.msra.mxu0 %v2329
    %3469 = vmatpush.msra.mxu0 %v2325
    %3470 = vmatpush.msra.mxu0 %v2321
    %3471 = vmatpush.msra.mxu0 %v2317
    %3472 = vmatpush.msra.mxu0 %v2313
    %3473 = vmatmul.f32.gmra.mxu0 %v3435
    %v3474 = vpop.f32.mrf.mxu0
    %v3475 = vadd.f32 0.0, %v3474
    %3476 = vdwg.mxu0
    %3477 = vmatpush.msra.mxu0 %v2374
    %3478 = vmatpush.msra.mxu0 %v2370
    %3479 = vmatpush.msra.mxu0 %v2366
    %3480 = vmatpush.msra.mxu0 %v2362
    %3481 = vmatpush.msra.mxu0 %v2358
    %3482 = vmatpush.msra.mxu0 %v2354
    %3483 = vmatpush.msra.mxu0 %v2350
    %3484 = vmatpush.msra.mxu0 %v2346
    %3485 = vmatpush.msra.mxu0 %v2342
    %3486 = vmatpush.msra.mxu0 %v2338
    %3487 = vmatpush.msra.mxu0 %v2334
    %3488 = vmatpush.msra.mxu0 %v2330
    %3489 = vmatpush.msra.mxu0 %v2326
    %3490 = vmatpush.msra.mxu0 %v2322
    %3491 = vmatpush.msra.mxu0 %v2318
    %3492 = vmatpush.msra.mxu0 %v2314
    %3493 = vmatmul.f32.gmra.mxu0 %v3435
    %v3494 = vpop.f32.mrf.mxu0
    %v3495 = vadd.f32 0.0, %v3494
    %3496 = vdwg.mxu0
    %3497 = vmatpush.msra.mxu0 %v2375
    %3498 = vmatpush.msra.mxu0 %v2371
    %3499 = vmatpush.msra.mxu0 %v2367
    %3500 = vmatpush.msra.mxu0 %v2363
    %3501 = vmatpush.msra.mxu0 %v2359
    %3502 = vmatpush.msra.mxu0 %v2355
    %3503 = vmatpush.msra.mxu0 %v2351
    %3504 = vmatpush.msra.mxu0 %v2347
    %3505 = vmatpush.msra.mxu0 %v2343
    %3506 = vmatpush.msra.mxu0 %v2339
    %3507 = vmatpush.msra.mxu0 %v2335
    %3508 = vmatpush.msra.mxu0 %v2331
    %3509 = vmatpush.msra.mxu0 %v2327
    %3510 = vmatpush.msra.mxu0 %v2323
    %3511 = vmatpush.msra.mxu0 %v2319
    %3512 = vmatpush.msra.mxu0 %v2315
    %3513 = vmatmul.f32.gmra.mxu0 %v3435
    %v3514 = vpop.f32.mrf.mxu0
    %v3515 = vadd.f32 0.0, %v3514
    %3516 = vdwg.mxu0
    %v3521 = vrot.slane %v3455, 4
    %v3522 = vrot.slane %v3475, 4
    %v3523 = vrot.slane %v3495, 4
    %v3524 = vrot.slane %v3515, 4
    %v3529 = vadd.f32 %v2409, %v3521
    %v3530 = vadd.f32 %v2432, %v3522
    %v3531 = vadd.f32 %v2455, %v3523
    %v3532 = vadd.f32 %v2478, %v3524
    %v3533 = vxor.u32 %v3529, 2147483648
    %v3534 = vmul.f32 %v3533, 1.442695
    %v3535 = vpow.pop %v3534
    %v3536 = vadd.f32 %v3535, 1.0
    %v3537 = vrcp.pop %v3536
    %v3538 = vmul.f32 %v3536, %v3537
    %v3539 = vsub.f32 1.0, %v3538
    %v3540 = vmul.f32 %v3537, %v3539
    %v3541 = vadd.f32 %v3537, %v3540
    %vm3542 = vweird.f32 %v3536
    %vm3543 = vweird.f32 %v3537
    %vm3544 = vmor %vm3542, %vm3543
    %v3545 = vsel %vm3544, %v3537, %v3541
    %v3546 = vand.u32 2147483647, %v3536
    %vm3547 = vcmp.eq.f32.partialorder %v3546, 8.507059e+37
    %v3548 = vand.u32 %v3536, 2147483648
    %v3549 = vor.u32 1.1754944e-38, %v3548
    %v3550 = vsel %vm3547, %v3549, %v3545
    %v3551 = vmul.f32 1.0, %v3550
    %v3552 = vxor.u32 %v3530, 2147483648
    %v3553 = vmul.f32 %v3552, 1.442695
    %v3554 = vpow.pop %v3553
    %v3555 = vadd.f32 %v3554, 1.0
    %v3556 = vrcp.pop %v3555
    %v3557 = vmul.f32 %v3555, %v3556
    %v3558 = vsub.f32 1.0, %v3557
    %v3559 = vmul.f32 %v3556, %v3558
    %v3560 = vadd.f32 %v3556, %v3559
    %vm3561 = vweird.f32 %v3555
    %vm3562 = vweird.f32 %v3556
    %vm3563 = vmor %vm3561, %vm3562
    %v3564 = vsel %vm3563, %v3556, %v3560
    %v3565 = vand.u32 2147483647, %v3555
    %vm3566 = vcmp.eq.f32.partialorder %v3565, 8.507059e+37
    %v3567 = vand.u32 %v3555, 2147483648
    %v3568 = vor.u32 1.1754944e-38, %v3567
    %v3569 = vsel %vm3566, %v3568, %v3564
    %v3570 = vmul.f32 1.0, %v3569
    %v3571 = vtanh.pop %v3531
    %v3572 = vxor.u32 %v3532, 2147483648
    %v3573 = vmul.f32 %v3572, 1.442695
    %v3574 = vpow.pop %v3573
    %v3575 = vadd.f32 %v3574, 1.0
    %v3576 = vrcp.pop %v3575
    %v3577 = vmul.f32 %v3575, %v3576
    %v3578 = vsub.f32 1.0, %v3577
    %v3579 = vmul.f32 %v3576, %v3578
    %v3580 = vadd.f32 %v3576, %v3579
    %vm3581 = vweird.f32 %v3575
    %vm3582 = vweird.f32 %v3576
    %vm3583 = vmor %vm3581, %vm3582
    %v3584 = vsel %vm3583, %v3576, %v3580
    %v3585 = vand.u32 2147483647, %v3575
    %vm3586 = vcmp.eq.f32.partialorder %v3585, 8.507059e+37
    %v3587 = vand.u32 %v3575, 2147483648
    %v3588 = vor.u32 1.1754944e-38, %v3587
    %v3589 = vsel %vm3586, %v3588, %v3584
    %v3590 = vmul.f32 1.0, %v3589
    %v3592 = vrot.slane %v3431, 6
    %v3594 = vmul.f32 %v3570, %v3592
    %v3595 = vmul.f32 %v3551, %v3571
    %v3596 = vadd.f32 %v3594, %v3595
    %v3597 = vtanh.pop %v3596
    %v3598 = vmul.f32 %v3590, %v3597
    %v3600 = vrot.slane %v3598, 4
    %3602 = vmatpush.msra.mxu0 %v2372
    %3603 = vmatpush.msra.mxu0 %v2368
    %3604 = vmatpush.msra.mxu0 %v2364
    %3605 = vmatpush.msra.mxu0 %v2360
    %3606 = vmatpush.msra.mxu0 %v2356
    %3607 = vmatpush.msra.mxu0 %v2352
    %3608 = vmatpush.msra.mxu0 %v2348
    %3609 = vmatpush.msra.mxu0 %v2344
    %3610 = vmatpush.msra.mxu0 %v2340
    %3611 = vmatpush.msra.mxu0 %v2336
    %3612 = vmatpush.msra.mxu0 %v2332
    %3613 = vmatpush.msra.mxu0 %v2328
    %3614 = vmatpush.msra.mxu0 %v2324
    %3615 = vmatpush.msra.mxu0 %v2320
    %3616 = vmatpush.msra.mxu0 %v2316
    %3617 = vmatpush.msra.mxu0 %v2312
    %3618 = vmatmul.f32.gmra.mxu0 %v3600
    %v3619 = vpop.f32.mrf.mxu0
    %v3620 = vadd.f32 0.0, %v3619
    %3621 = vdwg.mxu0
    %3622 = vmatpush.msra.mxu0 %v2373
    %3623 = vmatpush.msra.mxu0 %v2369
    %3624 = vmatpush.msra.mxu0 %v2365
    %3625 = vmatpush.msra.mxu0 %v2361
    %3626 = vmatpush.msra.mxu0 %v2357
    %3627 = vmatpush.msra.mxu0 %v2353
    %3628 = vmatpush.msra.mxu0 %v2349
    %3629 = vmatpush.msra.mxu0 %v2345
    %3630 = vmatpush.msra.mxu0 %v2341
    %3631 = vmatpush.msra.mxu0 %v2337
    %3632 = vmatpush.msra.mxu0 %v2333
    %3633 = vmatpush.msra.mxu0 %v2329
    %3634 = vmatpush.msra.mxu0 %v2325
    %3635 = vmatpush.msra.mxu0 %v2321
    %3636 = vmatpush.msra.mxu0 %v2317
    %3637 = vmatpush.msra.mxu0 %v2313
    %3638 = vmatmul.f32.gmra.mxu0 %v3600
    %v3639 = vpop.f32.mrf.mxu0
    %v3640 = vadd.f32 0.0, %v3639
    %3641 = vdwg.mxu0
    %3642 = vmatpush.msra.mxu0 %v2374
    %3643 = vmatpush.msra.mxu0 %v2370
    %3644 = vmatpush.msra.mxu0 %v2366
    %3645 = vmatpush.msra.mxu0 %v2362
    %3646 = vmatpush.msra.mxu0 %v2358
    %3647 = vmatpush.msra.mxu0 %v2354
    %3648 = vmatpush.msra.mxu0 %v2350
    %3649 = vmatpush.msra.mxu0 %v2346
    %3650 = vmatpush.msra.mxu0 %v2342
    %3651 = vmatpush.msra.mxu0 %v2338
    %3652 = vmatpush.msra.mxu0 %v2334
    %3653 = vmatpush.msra.mxu0 %v2330
    %3654 = vmatpush.msra.mxu0 %v2326
    %3655 = vmatpush.msra.mxu0 %v2322
    %3656 = vmatpush.msra.mxu0 %v2318
    %3657 = vmatpush.msra.mxu0 %v2314
    %3658 = vmatmul.f32.gmra.mxu0 %v3600
    %v3659 = vpop.f32.mrf.mxu0
    %v3660 = vadd.f32 0.0, %v3659
    %3661 = vdwg.mxu0
    %3662 = vmatpush.msra.mxu0 %v2375
    %3663 = vmatpush.msra.mxu0 %v2371
    %3664 = vmatpush.msra.mxu0 %v2367
    %3665 = vmatpush.msra.mxu0 %v2363
    %3666 = vmatpush.msra.mxu0 %v2359
    %3667 = vmatpush.msra.mxu0 %v2355
    %3668 = vmatpush.msra.mxu0 %v2351
    %3669 = vmatpush.msra.mxu0 %v2347
    %3670 = vmatpush.msra.mxu0 %v2343
    %3671 = vmatpush.msra.mxu0 %v2339
    %3672 = vmatpush.msra.mxu0 %v2335
    %3673 = vmatpush.msra.mxu0 %v2331
    %3674 = vmatpush.msra.mxu0 %v2327
    %3675 = vmatpush.msra.mxu0 %v2323
    %3676 = vmatpush.msra.mxu0 %v2319
    %3677 = vmatpush.msra.mxu0 %v2315
    %3678 = vmatmul.f32.gmra.mxu0 %v3600
    %v3679 = vpop.f32.mrf.mxu0
    %v3680 = vadd.f32 0.0, %v3679
    %3681 = vdwg.mxu0
    %v3686 = vrot.slane %v3620, 2
    %v3687 = vrot.slane %v3640, 2
    %v3688 = vrot.slane %v3660, 2
    %v3689 = vrot.slane %v3680, 2
    %v3694 = vadd.f32 %v2409, %v3686
    %v3695 = vadd.f32 %v2432, %v3687
    %v3696 = vadd.f32 %v2455, %v3688
    %v3697 = vadd.f32 %v2478, %v3689
    %v3698 = vxor.u32 %v3694, 2147483648
    %v3699 = vmul.f32 %v3698, 1.442695
    %v3700 = vpow.pop %v3699
    %v3701 = vadd.f32 %v3700, 1.0
    %v3702 = vrcp.pop %v3701
    %v3703 = vmul.f32 %v3701, %v3702
    %v3704 = vsub.f32 1.0, %v3703
    %v3705 = vmul.f32 %v3702, %v3704
    %v3706 = vadd.f32 %v3702, %v3705
    %vm3707 = vweird.f32 %v3701
    %vm3708 = vweird.f32 %v3702
    %vm3709 = vmor %vm3707, %vm3708
    %v3710 = vsel %vm3709, %v3702, %v3706
    %v3711 = vand.u32 2147483647, %v3701
    %vm3712 = vcmp.eq.f32.partialorder %v3711, 8.507059e+37
    %v3713 = vand.u32 %v3701, 2147483648
    %v3714 = vor.u32 1.1754944e-38, %v3713
    %v3715 = vsel %vm3712, %v3714, %v3710
    %v3716 = vmul.f32 1.0, %v3715
    %v3717 = vxor.u32 %v3695, 2147483648
    %v3718 = vmul.f32 %v3717, 1.442695
    %v3719 = vpow.pop %v3718
    %v3720 = vadd.f32 %v3719, 1.0
    %v3721 = vrcp.pop %v3720
    %v3722 = vmul.f32 %v3720, %v3721
    %v3723 = vsub.f32 1.0, %v3722
    %v3724 = vmul.f32 %v3721, %v3723
    %v3725 = vadd.f32 %v3721, %v3724
    %vm3726 = vweird.f32 %v3720
    %vm3727 = vweird.f32 %v3721
    %vm3728 = vmor %vm3726, %vm3727
    %v3729 = vsel %vm3728, %v3721, %v3725
    %v3730 = vand.u32 2147483647, %v3720
    %vm3731 = vcmp.eq.f32.partialorder %v3730, 8.507059e+37
    %v3732 = vand.u32 %v3720, 2147483648
    %v3733 = vor.u32 1.1754944e-38, %v3732
    %v3734 = vsel %vm3731, %v3733, %v3729
    %v3735 = vmul.f32 1.0, %v3734
    %v3736 = vtanh.pop %v3696
    %v3737 = vxor.u32 %v3697, 2147483648
    %v3738 = vmul.f32 %v3737, 1.442695
    %v3739 = vpow.pop %v3738
    %v3740 = vadd.f32 %v3739, 1.0
    %v3741 = vrcp.pop %v3740
    %v3742 = vmul.f32 %v3740, %v3741
    %v3743 = vsub.f32 1.0, %v3742
    %v3744 = vmul.f32 %v3741, %v3743
    %v3745 = vadd.f32 %v3741, %v3744
    %vm3746 = vweird.f32 %v3740
    %vm3747 = vweird.f32 %v3741
    %vm3748 = vmor %vm3746, %vm3747
    %v3749 = vsel %vm3748, %v3741, %v3745
    %v3750 = vand.u32 2147483647, %v3740
    %vm3751 = vcmp.eq.f32.partialorder %v3750, 8.507059e+37
    %v3752 = vand.u32 %v3740, 2147483648
    %v3753 = vor.u32 1.1754944e-38, %v3752
    %v3754 = vsel %vm3751, %v3753, %v3749
    %v3755 = vmul.f32 1.0, %v3754
    %v3757 = vrot.slane %v3596, 6
    %v3759 = vmul.f32 %v3735, %v3757
    %v3760 = vmul.f32 %v3716, %v3736
    %v3761 = vadd.f32 %v3759, %v3760
    %v3762 = vtanh.pop %v3761
    %v3763 = vmul.f32 %v3755, %v3762
    %v3764 = vld [vmem:[%s7] sm:$0xff]
    %v3765 = vld [vmem:[%s7 + $0x8] sm:$0xff]
    %v3766 = vld [vmem:[%s7 + $0x10] sm:$0xff]
    %v3767 = vld [vmem:[%s7 + $0x18] sm:$0xff]
    %v3768 = vld [vmem:[%s7 + $0x20] sm:$0xff]
    %v3769 = vld [vmem:[%s7 + $0x28] sm:$0xff]
    %v3770 = vld [vmem:[%s7 + $0x30] sm:$0xff]
    %v3771 = vld [vmem:[%s7 + $0x38] sm:$0xff]
    %v3772 = vld [vmem:[%s7 + $0x40] sm:$0xff]
    %v3773 = vld [vmem:[%s7 + $0x48] sm:$0xff]
    %v3774 = vld [vmem:[%s7 + $0x50] sm:$0xff]
    %v3775 = vld [vmem:[%s7 + $0x58] sm:$0xff]
    %v3776 = vld [vmem:[%s7 + $0x60] sm:$0xff]
    %v3777 = vld [vmem:[%s7 + $0x68] sm:$0xff]
    %v3778 = vld [vmem:[%s7 + $0x70] sm:$0xff]
    %v3779 = vld [vmem:[%s7 + $0x78] sm:$0xff]
    %v3780 = vld [vmem:[%s8] sm:$0x1]
    %v3782 = vperm.slane %v3780, 0
    %v3785 = vrot.slane %v3763, 6
    %3787 = vmatpush.msra.mxu0 %v3779
    %3788 = vmatpush.msra.mxu0 %v3778
    %3789 = vmatpush.msra.mxu0 %v3777
    %3790 = vmatpush.msra.mxu0 %v3776
    %3791 = vmatpush.msra.mxu0 %v3775
    %3792 = vmatpush.msra.mxu0 %v3774
    %3793 = vmatpush.msra.mxu0 %v3773
    %3794 = vmatpush.msra.mxu0 %v3772
    %3795 = vmatpush.msra.mxu0 %v3771
    %3796 = vmatpush.msra.mxu0 %v3770
    %3797 = vmatpush.msra.mxu0 %v3769
    %3798 = vmatpush.msra.mxu0 %v3768
    %3799 = vmatpush.msra.mxu0 %v3767
    %3800 = vmatpush.msra.mxu0 %v3766
    %3801 = vmatpush.msra.mxu0 %v3765
    %3802 = vmatpush.msra.mxu0 %v3764
    %3803 = vmatmul.f32.gmra.mxu0 %v3785
    %v3804 = vpop.f32.mrf.mxu0
    %v3805 = vadd.f32 %v3782, %v3804
    %3806 = vdwg.mxu0
    %vm3807 = vcmask 25600
    %3808 = vst.msk [vmem:[#allocation9] sm:$0x3] %vm3807, %v3805
    // Predicated region
    $region50: #{lstm_model_forward.1} parent=1 // pred_check
      _
    $region51: #{lstm_model_forward.1} parent=1 // pred_check_branch
      %3810 = sbr.rel (0) target = $region53
    $region52: #{lstm_model_forward.1} parent=1 // pred_region
      %3812 = vsyncadd [#allocation5], 0
      %s3814 = sshll.u32 [#allocation9], 4
      %s3815 = int_to_ptr.vmem [resolvable:$true] %s3814
      %s3816 = sshll.u32 %s9, 4
      %s3817 = int_to_ptr.hbm [resolvable:$true] %s3816
      %3819 = dma.vmem_to_hbm [thread:$0]  %s3815, 32, %s3817, [#allocation5]
    $region53: #{lstm_model_forward.1} parent=1 // pred_fallthru
      _
    // Predicated region
    $region54: #{lstm_model_forward.1} parent=1 // pred_check
      _
    $region55: #{lstm_model_forward.1} parent=1 // pred_check_branch
      %3821 = sbr.rel (0) target = $region57
    $region56: #{lstm_model_forward.1} parent=1 // pred_region
      %3823 = dma.done [#allocation5], 32
    $region57: #{lstm_model_forward.1} parent=1 // pred_fallthru
      _
    %3824 = vsyncpa [#allocation4], 1
    %3825 = vsyncpa [#allocation7], 1
    %3826 = vsyncpa [#allocation5], 1

</llo_original>
